<compile_context>
chip_gen: v5e
topology: v5e:2x2
jax: 0.10.0
libtpu: 0.0.40
codegen_flags: <defaults>
</compile_context>

<pallas_src>
import functools

import jax
import jax.numpy as jnp
from jax.experimental import pallas as pl
from jax.experimental.pallas import tpu as pltpu


# ----------------------------------------------------------------------------
# in-kernel helpers (f32 elementwise math; portable to v5e)
# ----------------------------------------------------------------------------
def _gelu(x):
    # TODO(synk): nn.GELU() default is the exact erf form; the tanh
    # approximation is used here for guaranteed Mosaic lowering.
    c = 0.7978845608028654  # sqrt(2/pi)
    return 0.5 * x * (1.0 + jnp.tanh(c * (x + 0.044715 * x * x * x)))


def _layernorm(x, g, b, eps=1e-5):
    mean = jnp.mean(x, axis=-1, keepdims=True)
    var = jnp.mean(jnp.square(x - mean), axis=-1, keepdims=True)
    return (x - mean) * jax.lax.rsqrt(var + eps) * g + b


def _bf16(x):
    return x.astype(jnp.bfloat16)


def _round_up(n, m):
    return ((n + m - 1) // m) * m


# ----------------------------------------------------------------------------
# fused multi-layer encoder kernel
#   grid = (B // Bt, L): batch-block axis parallel, layer axis sequential
#   (token carry lives in the resident output block; per-layer weights are
#   streamed by the BlockSpec pipeline, indexed by l).
# ----------------------------------------------------------------------------
def _encoder_stack_kernel(x_ref, ln1g_ref, ln1b_ref, wqkv_ref, bqkv_ref,
                          wproj_ref, bproj_ref, ln2g_ref, ln2b_ref,
                          w1_ref, b1_ref, w2_ref, b2_ref, o_ref, attn_ref,
                          *, num_heads, head_dim, seq_len, seq_pad, block_b):
    l = pl.program_id(1)
    d_model = num_heads * head_dim

    # Layer 0 seeds the resident output block with the (padded) input tokens;
    # for l > 0 the block still holds layer l-1's tokens (same block index
    # across the layer axis => stays in VMEM, no HBM round-trip).
    @pl.when(l == 0)
    def _():
        o_ref[...] = x_ref[...]

    # flatten (Bt, S_pad, D) -> (Bt*S_pad, D): leading-dim collapse, S_pad is
    # a multiple of 8, so no relayout.
    tok = o_ref[...].reshape(block_b * seq_pad, d_model)   # f32 residual stream

    # ---- attention branch: tok + proj(MHSA(LN1(tok))) -----------------------
    xn = _layernorm(tok, ln1g_ref[0], ln1b_ref[0])
    # one lane-dense fused QKV matmul (scale already folded into q columns)
    qkv = jnp.dot(_bf16(xn), wqkv_ref[0],
                  preferred_element_type=jnp.float32) + bqkv_ref[0]  # (Bt*S, 3D)

    # additive bias for padded key columns, (1, S_pad) row vector (broadcasts)
    if seq_pad > seq_len:
        col = jax.lax.broadcasted_iota(jnp.int32, (1, seq_pad), 1)
        key_bias = jnp.where(col < seq_len, 0.0, -1e30).astype(jnp.float32)
    else:
        key_bias = None

    # per-(batch, head) attention; each head's context goes into the bf16
    # scratch buffer at lane offset h*dh (no f32 accumulation chain).
    for b in range(block_b):          # static unroll, block_b small
        r0 = b * seq_pad
        for h in range(num_heads):    # static unroll, num_heads small
            c0 = h * head_dim
            q = qkv[r0:r0 + seq_pad, c0:c0 + head_dim]
            k = qkv[r0:r0 + seq_pad, d_model + c0:d_model + c0 + head_dim]
            v = qkv[r0:r0 + seq_pad, 2 * d_model + c0:2 * d_model + c0 + head_dim]

            # scores = Q @ K^T (contract head_dim), f32 accumulation on MXU
            s = jax.lax.dot_general(
                _bf16(q), _bf16(k),
                dimension_numbers=(((1,), (1,)), ((), ())),
                preferred_element_type=jnp.float32)
            if key_bias is not None:
                s = s + key_bias
            s = s - jnp.max(s, axis=-1, keepdims=True)
            p = jnp.exp(s)
            p = p * pl.reciprocal(jnp.sum(p, axis=-1, keepdims=True), approx=True)

            o_h = jnp.dot(_bf16(p), _bf16(v), preferred_element_type=jnp.float32)
            attn_ref[r0:r0 + seq_pad, c0:c0 + head_dim] = _bf16(o_h)

    # single full-width output projection (K = D fills the MXU)
    ctx = jnp.dot(attn_ref[...], wproj_ref[0],
                  preferred_element_type=jnp.float32)
    x1 = tok + ctx + bproj_ref[0]

    # ---- MLP branch: x1 + W2(GELU(W1(LN2(x1)))) ------------------------------
    # NOTE: GELU kept in f32 for v5e portability (no bf16 VPU/EUP there).
    xn2 = _layernorm(x1, ln2g_ref[0], ln2b_ref[0])
    h1 = jnp.dot(_bf16(xn2), w1_ref[0],
                 preferred_element_type=jnp.float32) + b1_ref[0]
    h1 = _gelu(h1)
    h2 = jnp.dot(_bf16(h1), w2_ref[0],
                 preferred_element_type=jnp.float32) + b2_ref[0]

    o_ref[...] = (x1 + h2).reshape(block_b, seq_pad, d_model).astype(o_ref.dtype)


def _default_vmem_limit():
    # ~3/4 of physical VMEM: ~96 MiB on v5e/v6e (128 MiB), ~48 MiB on v7x (64 MiB)
    try:
        cap = getattr(pltpu.get_tpu_info(), "vmem_capacity_bytes", None)
        if cap:
            return max(32 * 1024 * 1024, (int(cap) * 3) // 4)
    except Exception:
        pass
    return 64 * 1024 * 1024


def encoder_layer_stack(x, stacked, *, num_heads, block_b=None, interpret=False):
    """Applies L fused encoder layers to token tensor x of shape (B, S, D)."""
    B, S, D = x.shape
    (ln1g, ln1b, wqkv, bqkv, wproj, bproj,
     ln2g, ln2b, w1, b1, w2, b2) = stacked
    L = ln1g.shape[0]
    dh = D // num_heads

    # pad once: multiple of 16 (bf16 sublane tile); lane-dense 128 for long seqs
    S_pad = _round_up(S, 128) if S >= 64 else _round_up(S, 16)
    if S_pad != S:
        x = jnp.pad(x, ((0, 0), (0, S_pad - S), (0, 0)))

    # batch blocking: aim for ~256 MXU rows per matmul; must divide B.
    # (On v7x one may prefer B // block_b >= 2 so both TensorCores get work.)
    if block_b is None:
        target = max(1, 256 // S_pad)
        block_b = 1
        for cand in range(1, min(B, target) + 1):
            if B % cand == 0:
                block_b = cand
    assert B % block_b == 0, (B, block_b)

    def wspec(arr):
        nd = arr.ndim
        return pl.BlockSpec((1,) + tuple(arr.shape[1:]),
                            lambda b, l, nd=nd: (l,) + (0,) * (nd - 1))

    kernel = functools.partial(_encoder_stack_kernel,
                               num_heads=num_heads, head_dim=dh,
                               seq_len=S, seq_pad=S_pad, block_b=block_b)

    out = pl.pallas_call(
        kernel,
        out_shape=jax.ShapeDtypeStruct((B, S_pad, D), x.dtype),
        grid=(B // block_b, L),
        in_specs=[
            pl.BlockSpec((block_b, S_pad, D), lambda b, l: (b, 0, 0)),  # tokens
            wspec(ln1g), wspec(ln1b),                                   # LN1
            wspec(wqkv), wspec(bqkv),                                   # fused QKV
            wspec(wproj), wspec(bproj),                                 # out proj
            wspec(ln2g), wspec(ln2b),                                   # LN2
            wspec(w1), wspec(b1),                                       # mlp fc1
            wspec(w2), wspec(b2),                                       # mlp fc2
        ],
        out_specs=pl.BlockSpec((block_b, S_pad, D), lambda b, l: (b, 0, 0)),
        scratch_shapes=[pltpu.VMEM((block_b * S_pad, D), jnp.bfloat16)],
        compiler_params=pltpu.CompilerParams(
            dimension_semantics=("parallel", "arbitrary"),
            vmem_limit_bytes=_default_vmem_limit()),
        interpret=interpret,
    )(x, ln1g, ln1b, wqkv, bqkv, wproj, bproj, ln2g, ln2b, w1, b1, w2, b2)

    return out[:, :S, :]


# ----------------------------------------------------------------------------
# parameter packing: stack per-layer params with a leading L axis, keep wqkv
# fused as (L, D, 3D) / wproj as (L, D, D), fold the softmax scale into the
# q columns, and cast matmul weights to bf16 (f32 MXU accumulation).
# ----------------------------------------------------------------------------
def stack_layer_params(layers, num_heads):
    D = layers[0][0].shape[0]
    dh = D // num_heads
    L = len(layers)
    scale = float(dh) ** -0.5

    def stack(i):
        return jnp.stack([lp[i] for lp in layers], axis=0)

    # fold 1/sqrt(dh) into the q columns (first D columns) of wqkv / bqkv
    col_scale = jnp.concatenate([jnp.full((D,), scale, jnp.float32),
                                 jnp.ones((2 * D,), jnp.float32)])

    ln1g = stack(0)[:, None, :]                               # (L, 1, D)
    ln1b = stack(1)[:, None, :]
    wqkv = (stack(2) * col_scale).astype(jnp.bfloat16)        # (L, D, 3D)
    bqkv = (stack(3) * col_scale)[:, None, :]                 # (L, 1, 3D) f32
    wproj = stack(4).astype(jnp.bfloat16)                     # (L, D, D)
    bproj = stack(5)[:, None, :]
    ln2g = stack(6)[:, None, :]
    ln2b = stack(7)[:, None, :]
    w1 = stack(8).astype(jnp.bfloat16)                        # (L, D, M)
    b1 = stack(9)[:, None, :]
    w2 = stack(10).astype(jnp.bfloat16)                       # (L, M, D)
    b2 = stack(11)[:, None, :]
    return (ln1g, ln1b, wqkv, bqkv, wproj, bproj, ln2g, ln2b, w1, b1, w2, b2)


# ----------------------------------------------------------------------------
# pure-JAX f32 reference (same math, standard layout) for correctness check
# ----------------------------------------------------------------------------
def encoder_layers_ref(x, layers, num_heads):
    B, S, D = x.shape
    dh = D // num_heads
    scale = float(dh) ** -0.5
    for (ln1g, ln1b, wqkv, bqkv, wproj, bproj,
         ln2g, ln2b, w1, b1, w2, b2) in layers:
        xn = _layernorm(x, ln1g, ln1b)
        qkv = (xn @ wqkv + bqkv).reshape(B, S, 3, num_heads, dh)
        q = qkv[:, :, 0].transpose(0, 2, 1, 3)       # (B, H, S, dh)
        k = qkv[:, :, 1].transpose(0, 2, 1, 3)
        v = qkv[:, :, 2].transpose(0, 2, 1, 3)
        s = jnp.einsum("bhqd,bhkd->bhqk", q, k) * scale
        p = jax.nn.softmax(s, axis=-1)
        o = jnp.einsum("bhqk,bhkd->bhqd", p, v)
        o = o.transpose(0, 2, 1, 3).reshape(B, S, D)
        x = x + o @ wproj + bproj                     # attention residual
        xn2 = _layernorm(x, ln2g, ln2b)
        h = _gelu(xn2 @ w1 + b1)
        x = x + h @ w2 + b2                           # MLP residual
    return x


# ----------------------------------------------------------------------------
# deterministic synthetic parameters (natural nn.Linear-transposed layout)
# NOTE: dropout layers in the PyTorch module are identity at inference and
# are therefore omitted.
# ----------------------------------------------------------------------------
def init_layer_params(key, dim, mlp_dim, num_heads, layers_num):
    keys = jax.random.split(key, 4 + 2 * layers_num)

    def nrm(k, shape, s=0.02):
        return (s * jax.random.normal(k, shape)).astype(jnp.float32)

    # the reference ViT passes ONE shared Attention module to every layer
    wqkv = nrm(keys[0], (dim, 3 * dim))
    bqkv = nrm(keys[1], (3 * dim,), 0.01)
    wproj = nrm(keys[2], (dim, dim))
    bproj = nrm(keys[3], (dim,), 0.01)

    layers = []
    for i in range(layers_num):
        k1, k2 = keys[4 + 2 * i], keys[5 + 2 * i]
        layers.append((
            jnp.ones((dim,), jnp.float32), jnp.zeros((dim,), jnp.float32),  # LN1
            wqkv, bqkv, wproj, bproj,
            jnp.ones((dim,), jnp.float32), jnp.zeros((dim,), jnp.float32),  # LN2
            nrm(k1, (dim, mlp_dim)), jnp.zeros((mlp_dim,), jnp.float32),
            nrm(k2, (mlp_dim, dim)), jnp.zeros((dim,), jnp.float32),
        ))
    return layers


if __name__ == "__main__":
    key = jax.random.PRNGKey(0)
    kx, kp = jax.random.split(key)

    # (B, S, D) token input: B=2, seq=17 (16 patches + cls -> exercises the
    # pad/mask path), dim=128, 4 heads (head_dim=32), mlp_dim=256, 2 layers.
    B, S, D, H, M, L = 2, 17, 128, 4, 256, 2
    x = jax.random.normal(kx, (B, S, D), dtype=jnp.float32)

    layers = init_layer_params(kp, dim=D, mlp_dim=M, num_heads=H, layers_num=L)
    stacked = stack_layer_params(layers, num_heads=H)

    out = encoder_layer_stack(x, stacked, num_heads=H)
    out = jax.block_until_ready(out)

    assert out.shape == (B, S, D), out.shape
    assert bool(jnp.all(jnp.isfinite(out)))

    # loose tolerance: kernel uses bf16 MXU operands + approx reciprocal
    ref = encoder_layers_ref(x, layers, num_heads=H)
    err = float(jnp.max(jnp.abs(out - ref)))
    assert err < 5e-2, f"max abs err vs reference: {err}"

    print("KERNEL_OK")
</pallas_src>

<mosaic_0001>
module attributes {stable_mosaic.version = 11 : i64} {
  func.func @_encoder_stack_kernel(%arg0: i32, %arg1: i32, %arg2: memref<2x32x128xf32, #tpu.memory_space<vmem>>, %arg3: memref<1x1x128xf32, #tpu.memory_space<vmem>>, %arg4: memref<1x1x128xf32, #tpu.memory_space<vmem>>, %arg5: memref<1x128x384xbf16, #tpu.memory_space<vmem>>, %arg6: memref<1x1x384xf32, #tpu.memory_space<vmem>>, %arg7: memref<1x128x128xbf16, #tpu.memory_space<vmem>>, %arg8: memref<1x1x128xf32, #tpu.memory_space<vmem>>, %arg9: memref<1x1x128xf32, #tpu.memory_space<vmem>>, %arg10: memref<1x1x128xf32, #tpu.memory_space<vmem>>, %arg11: memref<1x128x256xbf16, #tpu.memory_space<vmem>>, %arg12: memref<1x1x256xf32, #tpu.memory_space<vmem>>, %arg13: memref<1x256x128xbf16, #tpu.memory_space<vmem>>, %arg14: memref<1x1x128xf32, #tpu.memory_space<vmem>>, %arg15: memref<2x32x128xf32, #tpu.memory_space<vmem>>, %arg16: memref<64x128xbf16, #tpu.memory_space<vmem>>) attributes {dimension_semantics = [#tpu.dimension_semantics<parallel>, #tpu.dimension_semantics<arbitrary>], iteration_bounds = array<i64: 1, 2>, scalar_prefetch = 0 : i64, scratch_operands = 1 : i64, tpu.core_type = #tpu.core_type<tc>, window_params = [{transform_indices = @transform_0, window_bounds = array<i64: 2, 32, 128>}, {transform_indices = @transform_1, window_bounds = array<i64: 1, 1, 128>}, {transform_indices = @transform_2, window_bounds = array<i64: 1, 1, 128>}, {transform_indices = @transform_3, window_bounds = array<i64: 1, 128, 384>}, {transform_indices = @transform_4, window_bounds = array<i64: 1, 1, 384>}, {transform_indices = @transform_5, window_bounds = array<i64: 1, 128, 128>}, {transform_indices = @transform_6, window_bounds = array<i64: 1, 1, 128>}, {transform_indices = @transform_7, window_bounds = array<i64: 1, 1, 128>}, {transform_indices = @transform_8, window_bounds = array<i64: 1, 1, 128>}, {transform_indices = @transform_9, window_bounds = array<i64: 1, 128, 256>}, {transform_indices = @transform_10, window_bounds = array<i64: 1, 1, 256>}, {transform_indices = @transform_11, window_bounds = array<i64: 1, 256, 128>}, {transform_indices = @transform_12, window_bounds = array<i64: 1, 1, 128>}, {transform_indices = @transform_13, window_bounds = array<i64: 2, 32, 128>}]} {
    %c0_i32 = arith.constant 0 : i32
    %0 = arith.cmpi eq, %arg1, %c0_i32 : i32
    %1 = arith.extui %0 : i1 to i32
    %c0_i32_0 = arith.constant 0 : i32
    %2 = arith.cmpi ne, %1, %c0_i32_0 : i32
    scf.if %2 {
      %c0_108 = arith.constant 0 : index
      %c0_109 = arith.constant 0 : index
      %c0_110 = arith.constant 0 : index
      %296 = vector.load %arg2[%c0_108, %c0_109, %c0_110] : memref<2x32x128xf32, #tpu.memory_space<vmem>>, vector<2x32x128xf32>
      %c0_111 = arith.constant 0 : index
      %c0_112 = arith.constant 0 : index
      %c0_113 = arith.constant 0 : index
      %297 = vector.load %arg15[%c0_111, %c0_112, %c0_113] : memref<2x32x128xf32, #tpu.memory_space<vmem>>, vector<2x32x128xf32>
      tpu.vector_store %arg15[%c0_111, %c0_112, %c0_113], %296 {strides = array<i32>} : memref<2x32x128xf32, #tpu.memory_space<vmem>>, vector<2x32x128xf32>,
    } else {
    }
    %c0 = arith.constant 0 : index
    %c0_1 = arith.constant 0 : index
    %c0_2 = arith.constant 0 : index
    %3 = vector.load %arg15[%c0, %c0_1, %c0_2] : memref<2x32x128xf32, #tpu.memory_space<vmem>>, vector<2x32x128xf32>
    %4 = vector.shape_cast %3 : vector<2x32x128xf32> to vector<64x128xf32>
    %c0_3 = arith.constant 0 : index
    %c0_4 = arith.constant 0 : index
    %c0_5 = arith.constant 0 : index
    %5 = vector.load %arg3[%c0_3, %c0_4, %c0_5] : memref<1x1x128xf32, #tpu.memory_space<vmem>>, vector<1x1x128xf32>
    %6 = vector.shape_cast %5 : vector<1x1x128xf32> to vector<1x128xf32>
    %c0_6 = arith.constant 0 : index
    %c0_7 = arith.constant 0 : index
    %c0_8 = arith.constant 0 : index
    %7 = vector.load %arg4[%c0_6, %c0_7, %c0_8] : memref<1x1x128xf32, #tpu.memory_space<vmem>>, vector<1x1x128xf32>
    %8 = vector.shape_cast %7 : vector<1x1x128xf32> to vector<1x128xf32>
    %cst = arith.constant dense<0.000000e+00> : vector<64xf32>
    %9 = vector.multi_reduction <add>, %4, %cst [1] : vector<64x128xf32> to vector<64xf32>
    %10 = vector.shape_cast %9 : vector<64xf32> to vector<64x1xf32>
    %cst_9 = arith.constant 1.280000e+02 : f32
    %11 = vector.broadcast %cst_9 : f32 to vector<64x1xf32>
    %12 = arith.divf %10, %11 : vector<64x1xf32>
    %13 = vector.broadcast %12 : vector<64x1xf32> to vector<64x128xf32>
    %14 = arith.subf %4, %13 : vector<64x128xf32>
    %15 = arith.mulf %14, %14 : vector<64x128xf32>
    %cst_10 = arith.constant dense<0.000000e+00> : vector<64xf32>
    %16 = vector.multi_reduction <add>, %15, %cst_10 [1] : vector<64x128xf32> to vector<64xf32>
    %17 = vector.shape_cast %16 : vector<64xf32> to vector<64x1xf32>
    %cst_11 = arith.constant 1.280000e+02 : f32
    %18 = vector.broadcast %cst_11 : f32 to vector<64x1xf32>
    %19 = arith.divf %17, %18 : vector<64x1xf32>
    %20 = vector.broadcast %12 : vector<64x1xf32> to vector<64x128xf32>
    %21 = arith.subf %4, %20 : vector<64x128xf32>
    %cst_12 = arith.constant 9.99999974E-6 : f32
    %22 = vector.broadcast %cst_12 : f32 to vector<64x1xf32>
    %23 = arith.addf %19, %22 : vector<64x1xf32>
    %24 = math.rsqrt %23 : vector<64x1xf32>
    %25 = vector.broadcast %24 : vector<64x1xf32> to vector<64x128xf32>
    %26 = arith.mulf %21, %25 : vector<64x128xf32>
    %27 = vector.broadcast %6 : vector<1x128xf32> to vector<64x128xf32>
    %28 = arith.mulf %26, %27 : vector<64x128xf32>
    %29 = vector.broadcast %8 : vector<1x128xf32> to vector<64x128xf32>
    %30 = arith.addf %28, %29 : vector<64x128xf32>
    %31 = arith.truncf %30 : vector<64x128xf32> to vector<64x128xbf16>
    %c0_13 = arith.constant 0 : index
    %c0_14 = arith.constant 0 : index
    %c0_15 = arith.constant 0 : index
    %32 = vector.load %arg5[%c0_13, %c0_14, %c0_15] : memref<1x128x384xbf16, #tpu.memory_space<vmem>>, vector<1x128x384xbf16>
    %33 = vector.shape_cast %32 : vector<1x128x384xbf16> to vector<128x384xbf16>
    %cst_16 = arith.constant dense<0.000000e+00> : vector<64x384xf32>
    %34 = tpu.matmul %31, %33, %cst_16 {dimension_numbers = #tpu.dot_dimension_numbers<[1], [0], [0], [1], [0, 0, 1, 1], [], []>} : vector<64x128xbf16>, vector<128x384xbf16>, vector<64x384xf32> -> vector<64x384xf32>
    %c0_17 = arith.constant 0 : index
    %c0_18 = arith.constant 0 : index
    %c0_19 = arith.constant 0 : index
    %35 = vector.load %arg6[%c0_17, %c0_18, %c0_19] : memref<1x1x384xf32, #tpu.memory_space<vmem>>, vector<1x1x384xf32>
    %36 = vector.shape_cast %35 : vector<1x1x384xf32> to vector<1x384xf32>
    %37 = vector.broadcast %36 : vector<1x384xf32> to vector<64x384xf32>
    %38 = arith.addf %34, %37 : vector<64x384xf32>
    %39 = tpu.iota {dimensions = array<i32: 1>} : vector<1x32xi32>
    %c17_i32 = arith.constant 17 : i32
    %40 = vector.broadcast %c17_i32 : i32 to vector<1x32xi32>
    %41 = arith.cmpi slt, %39, %40 : vector<1x32xi32>
    %cst_20 = arith.constant 0.000000e+00 : f32
    %cst_21 = arith.constant -1.000000e+30 : f32
    %42 = vector.broadcast %cst_20 : f32 to vector<1x32xf32>
    %43 = vector.broadcast %cst_21 : f32 to vector<1x32xf32>
    %44 = arith.select %41, %42, %43 : vector<1x32xi1>, vector<1x32xf32>
    %45 = vector.extract_strided_slice %38 {offsets = [0, 0], sizes = [32, 32], strides = [1, 1]} : vector<64x384xf32> to vector<32x32xf32>
    %46 = vector.extract_strided_slice %38 {offsets = [0, 128], sizes = [32, 32], strides = [1, 1]} : vector<64x384xf32> to vector<32x32xf32>
    %47 = vector.extract_strided_slice %38 {offsets = [0, 256], sizes = [32, 32], strides = [1, 1]} : vector<64x384xf32> to vector<32x32xf32>
    %48 = arith.truncf %45 : vector<32x32xf32> to vector<32x32xbf16>
    %49 = arith.truncf %46 : vector<32x32xf32> to vector<32x32xbf16>
    %cst_22 = arith.constant dense<0.000000e+00> : vector<32x32xf32>
    %50 = tpu.matmul %48, %49, %cst_22 {dimension_numbers = #tpu.dot_dimension_numbers<[1], [1], [0], [0], [0, 0, 1, 0], [], []>} : vector<32x32xbf16>, vector<32x32xbf16>, vector<32x32xf32> -> vector<32x32xf32>
    %51 = vector.broadcast %44 : vector<1x32xf32> to vector<32x32xf32>
    %52 = arith.addf %50, %51 : vector<32x32xf32>
    %cst_23 = arith.constant dense<0xFF800000> : vector<32xf32>
    %53 = vector.multi_reduction <maximumf>, %52, %cst_23 [1] : vector<32x32xf32> to vector<32xf32>
    %54 = vector.shape_cast %53 : vector<32xf32> to vector<32x1xf32>
    %55 = vector.broadcast %54 : vector<32x1xf32> to vector<32x32xf32>
    %56 = arith.subf %52, %55 : vector<32x32xf32>
    %57 = math.exp %56 : vector<32x32xf32>
    %cst_24 = arith.constant dense<0.000000e+00> : vector<32xf32>
    %58 = vector.multi_reduction <add>, %57, %cst_24 [1] : vector<32x32xf32> to vector<32xf32>
    %59 = vector.shape_cast %58 : vector<32xf32> to vector<32x1xf32>
    %60 = tpu.reciprocal %59 {approx = true} : vector<32x1xf32> -> vector<32x1xf32>
    %61 = vector.broadcast %60 : vector<32x1xf32> to vector<32x32xf32>
    %62 = arith.mulf %57, %61 : vector<32x32xf32>
    %63 = arith.truncf %62 : vector<32x32xf32> to vector<32x32xbf16>
    %64 = arith.truncf %47 : vector<32x32xf32> to vector<32x32xbf16>
    %cst_25 = arith.constant dense<0.000000e+00> : vector<32x32xf32>
    %65 = tpu.matmul %63, %64, %cst_25 {dimension_numbers = #tpu.dot_dimension_numbers<[1], [0], [0], [1], [0, 0, 1, 1], [], []>} : vector<32x32xbf16>, vector<32x32xbf16>, vector<32x32xf32> -> vector<32x32xf32>
    %66 = arith.truncf %65 : vector<32x32xf32> to vector<32x32xbf16>
    %c0_26 = arith.constant 0 : index
    %c0_27 = arith.constant 0 : index
    %67 = vector.load %arg16[%c0_26, %c0_27] : memref<64x128xbf16, #tpu.memory_space<vmem>>, vector<32x32xbf16>
    tpu.vector_store %arg16[%c0_26, %c0_27], %66 {strides = array<i32>} : memref<64x128xbf16, #tpu.memory_space<vmem>>, vector<32x32xbf16>,
    %68 = vector.extract_strided_slice %38 {offsets = [0, 32], sizes = [32, 32], strides = [1, 1]} : vector<64x384xf32> to vector<32x32xf32>
    %69 = vector.extract_strided_slice %38 {offsets = [0, 160], sizes = [32, 32], strides = [1, 1]} : vector<64x384xf32> to vector<32x32xf32>
    %70 = vector.extract_strided_slice %38 {offsets = [0, 288], sizes = [32, 32], strides = [1, 1]} : vector<64x384xf32> to vector<32x32xf32>
    %71 = arith.truncf %68 : vector<32x32xf32> to vector<32x32xbf16>
    %72 = arith.truncf %69 : vector<32x32xf32> to vector<32x32xbf16>
    %cst_28 = arith.constant dense<0.000000e+00> : vector<32x32xf32>
    %73 = tpu.matmul %71, %72, %cst_28 {dimension_numbers = #tpu.dot_dimension_numbers<[1], [1], [0], [0], [0, 0, 1, 0], [], []>} : vector<32x32xbf16>, vector<32x32xbf16>, vector<32x32xf32> -> vector<32x32xf32>
    %74 = vector.broadcast %44 : vector<1x32xf32> to vector<32x32xf32>
    %75 = arith.addf %73, %74 : vector<32x32xf32>
    %cst_29 = arith.constant dense<0xFF800000> : vector<32xf32>
    %76 = vector.multi_reduction <maximumf>, %75, %cst_29 [1] : vector<32x32xf32> to vector<32xf32>
    %77 = vector.shape_cast %76 : vector<32xf32> to vector<32x1xf32>
    %78 = vector.broadcast %77 : vector<32x1xf32> to vector<32x32xf32>
    %79 = arith.subf %75, %78 : vector<32x32xf32>
    %80 = math.exp %79 : vector<32x32xf32>
    %cst_30 = arith.constant dense<0.000000e+00> : vector<32xf32>
    %81 = vector.multi_reduction <add>, %80, %cst_30 [1] : vector<32x32xf32> to vector<32xf32>
    %82 = vector.shape_cast %81 : vector<32xf32> to vector<32x1xf32>
    %83 = tpu.reciprocal %82 {approx = true} : vector<32x1xf32> -> vector<32x1xf32>
    %84 = vector.broadcast %83 : vector<32x1xf32> to vector<32x32xf32>
    %85 = arith.mulf %80, %84 : vector<32x32xf32>
    %86 = arith.truncf %85 : vector<32x32xf32> to vector<32x32xbf16>
    %87 = arith.truncf %70 : vector<32x32xf32> to vector<32x32xbf16>
    %cst_31 = arith.constant dense<0.000000e+00> : vector<32x32xf32>
    %88 = tpu.matmul %86, %87, %cst_31 {dimension_numbers = #tpu.dot_dimension_numbers<[1], [0], [0], [1], [0, 0, 1, 1], [], []>} : vector<32x32xbf16>, vector<32x32xbf16>, vector<32x32xf32> -> vector<32x32xf32>
    %89 = arith.truncf %88 : vector<32x32xf32> to vector<32x32xbf16>
    %c0_32 = arith.constant 0 : index
    %c32 = arith.constant 32 : index
    %90 = vector.load %arg16[%c0_32, %c32] : memref<64x128xbf16, #tpu.memory_space<vmem>>, vector<32x32xbf16>
    tpu.vector_store %arg16[%c0_32, %c32], %89 {strides = array<i32>} : memref<64x128xbf16, #tpu.memory_space<vmem>>, vector<32x32xbf16>,
    %91 = vector.extract_strided_slice %38 {offsets = [0, 64], sizes = [32, 32], strides = [1, 1]} : vector<64x384xf32> to vector<32x32xf32>
    %92 = vector.extract_strided_slice %38 {offsets = [0, 192], sizes = [32, 32], strides = [1, 1]} : vector<64x384xf32> to vector<32x32xf32>
    %93 = vector.extract_strided_slice %38 {offsets = [0, 320], sizes = [32, 32], strides = [1, 1]} : vector<64x384xf32> to vector<32x32xf32>
    %94 = arith.truncf %91 : vector<32x32xf32> to vector<32x32xbf16>
    %95 = arith.truncf %92 : vector<32x32xf32> to vector<32x32xbf16>
    %cst_33 = arith.constant dense<0.000000e+00> : vector<32x32xf32>
    %96 = tpu.matmul %94, %95, %cst_33 {dimension_numbers = #tpu.dot_dimension_numbers<[1], [1], [0], [0], [0, 0, 1, 0], [], []>} : vector<32x32xbf16>, vector<32x32xbf16>, vector<32x32xf32> -> vector<32x32xf32>
    %97 = vector.broadcast %44 : vector<1x32xf32> to vector<32x32xf32>
    %98 = arith.addf %96, %97 : vector<32x32xf32>
    %cst_34 = arith.constant dense<0xFF800000> : vector<32xf32>
    %99 = vector.multi_reduction <maximumf>, %98, %cst_34 [1] : vector<32x32xf32> to vector<32xf32>
    %100 = vector.shape_cast %99 : vector<32xf32> to vector<32x1xf32>
    %101 = vector.broadcast %100 : vector<32x1xf32> to vector<32x32xf32>
    %102 = arith.subf %98, %101 : vector<32x32xf32>
    %103 = math.exp %102 : vector<32x32xf32>
    %cst_35 = arith.constant dense<0.000000e+00> : vector<32xf32>
    %104 = vector.multi_reduction <add>, %103, %cst_35 [1] : vector<32x32xf32> to vector<32xf32>
    %105 = vector.shape_cast %104 : vector<32xf32> to vector<32x1xf32>
    %106 = tpu.reciprocal %105 {approx = true} : vector<32x1xf32> -> vector<32x1xf32>
    %107 = vector.broadcast %106 : vector<32x1xf32> to vector<32x32xf32>
    %108 = arith.mulf %103, %107 : vector<32x32xf32>
    %109 = arith.truncf %108 : vector<32x32xf32> to vector<32x32xbf16>
    %110 = arith.truncf %93 : vector<32x32xf32> to vector<32x32xbf16>
    %cst_36 = arith.constant dense<0.000000e+00> : vector<32x32xf32>
    %111 = tpu.matmul %109, %110, %cst_36 {dimension_numbers = #tpu.dot_dimension_numbers<[1], [0], [0], [1], [0, 0, 1, 1], [], []>} : vector<32x32xbf16>, vector<32x32xbf16>, vector<32x32xf32> -> vector<32x32xf32>
    %112 = arith.truncf %111 : vector<32x32xf32> to vector<32x32xbf16>
    %c0_37 = arith.constant 0 : index
    %c64 = arith.constant 64 : index
    %113 = vector.load %arg16[%c0_37, %c64] : memref<64x128xbf16, #tpu.memory_space<vmem>>, vector<32x32xbf16>
    tpu.vector_store %arg16[%c0_37, %c64], %112 {strides = array<i32>} : memref<64x128xbf16, #tpu.memory_space<vmem>>, vector<32x32xbf16>,
    %114 = vector.extract_strided_slice %38 {offsets = [0, 96], sizes = [32, 32], strides = [1, 1]} : vector<64x384xf32> to vector<32x32xf32>
    %115 = vector.extract_strided_slice %38 {offsets = [0, 224], sizes = [32, 32], strides = [1, 1]} : vector<64x384xf32> to vector<32x32xf32>
    %116 = vector.extract_strided_slice %38 {offsets = [0, 352], sizes = [32, 32], strides = [1, 1]} : vector<64x384xf32> to vector<32x32xf32>
    %117 = arith.truncf %114 : vector<32x32xf32> to vector<32x32xbf16>
    %118 = arith.truncf %115 : vector<32x32xf32> to vector<32x32xbf16>
    %cst_38 = arith.constant dense<0.000000e+00> : vector<32x32xf32>
    %119 = tpu.matmul %117, %118, %cst_38 {dimension_numbers = #tpu.dot_dimension_numbers<[1], [1], [0], [0], [0, 0, 1, 0], [], []>} : vector<32x32xbf16>, vector<32x32xbf16>, vector<32x32xf32> -> vector<32x32xf32>
    %120 = vector.broadcast %44 : vector<1x32xf32> to vector<32x32xf32>
    %121 = arith.addf %119, %120 : vector<32x32xf32>
    %cst_39 = arith.constant dense<0xFF800000> : vector<32xf32>
    %122 = vector.multi_reduction <maximumf>, %121, %cst_39 [1] : vector<32x32xf32> to vector<32xf32>
    %123 = vector.shape_cast %122 : vector<32xf32> to vector<32x1xf32>
    %124 = vector.broadcast %123 : vector<32x1xf32> to vector<32x32xf32>
    %125 = arith.subf %121, %124 : vector<32x32xf32>
    %126 = math.exp %125 : vector<32x32xf32>
    %cst_40 = arith.constant dense<0.000000e+00> : vector<32xf32>
    %127 = vector.multi_reduction <add>, %126, %cst_40 [1] : vector<32x32xf32> to vector<32xf32>
    %128 = vector.shape_cast %127 : vector<32xf32> to vector<32x1xf32>
    %129 = tpu.reciprocal %128 {approx = true} : vector<32x1xf32> -> vector<32x1xf32>
    %130 = vector.broadcast %129 : vector<32x1xf32> to vector<32x32xf32>
    %131 = arith.mulf %126, %130 : vector<32x32xf32>
    %132 = arith.truncf %131 : vector<32x32xf32> to vector<32x32xbf16>
    %133 = arith.truncf %116 : vector<32x32xf32> to vector<32x32xbf16>
    %cst_41 = arith.constant dense<0.000000e+00> : vector<32x32xf32>
    %134 = tpu.matmul %132, %133, %cst_41 {dimension_numbers = #tpu.dot_dimension_numbers<[1], [0], [0], [1], [0, 0, 1, 1], [], []>} : vector<32x32xbf16>, vector<32x32xbf16>, vector<32x32xf32> -> vector<32x32xf32>
    %135 = arith.truncf %134 : vector<32x32xf32> to vector<32x32xbf16>
    %c0_42 = arith.constant 0 : index
    %c96 = arith.constant 96 : index
    %136 = vector.load %arg16[%c0_42, %c96] : memref<64x128xbf16, #tpu.memory_space<vmem>>, vector<32x32xbf16>
    tpu.vector_store %arg16[%c0_42, %c96], %135 {strides = array<i32>} : memref<64x128xbf16, #tpu.memory_space<vmem>>, vector<32x32xbf16>,
    %137 = vector.extract_strided_slice %38 {offsets = [32, 0], sizes = [32, 32], strides = [1, 1]} : vector<64x384xf32> to vector<32x32xf32>
    %138 = vector.extract_strided_slice %38 {offsets = [32, 128], sizes = [32, 32], strides = [1, 1]} : vector<64x384xf32> to vector<32x32xf32>
    %139 = vector.extract_strided_slice %38 {offsets = [32, 256], sizes = [32, 32], strides = [1, 1]} : vector<64x384xf32> to vector<32x32xf32>
    %140 = arith.truncf %137 : vector<32x32xf32> to vector<32x32xbf16>
    %141 = arith.truncf %138 : vector<32x32xf32> to vector<32x32xbf16>
    %cst_43 = arith.constant dense<0.000000e+00> : vector<32x32xf32>
    %142 = tpu.matmul %140, %141, %cst_43 {dimension_numbers = #tpu.dot_dimension_numbers<[1], [1], [0], [0], [0, 0, 1, 0], [], []>} : vector<32x32xbf16>, vector<32x32xbf16>, vector<32x32xf32> -> vector<32x32xf32>
    %143 = vector.broadcast %44 : vector<1x32xf32> to vector<32x32xf32>
    %144 = arith.addf %142, %143 : vector<32x32xf32>
    %cst_44 = arith.constant dense<0xFF800000> : vector<32xf32>
    %145 = vector.multi_reduction <maximumf>, %144, %cst_44 [1] : vector<32x32xf32> to vector<32xf32>
    %146 = vector.shape_cast %145 : vector<32xf32> to vector<32x1xf32>
    %147 = vector.broadcast %146 : vector<32x1xf32> to vector<32x32xf32>
    %148 = arith.subf %144, %147 : vector<32x32xf32>
    %149 = math.exp %148 : vector<32x32xf32>
    %cst_45 = arith.constant dense<0.000000e+00> : vector<32xf32>
    %150 = vector.multi_reduction <add>, %149, %cst_45 [1] : vector<32x32xf32> to vector<32xf32>
    %151 = vector.shape_cast %150 : vector<32xf32> to vector<32x1xf32>
    %152 = tpu.reciprocal %151 {approx = true} : vector<32x1xf32> -> vector<32x1xf32>
    %153 = vector.broadcast %152 : vector<32x1xf32> to vector<32x32xf32>
    %154 = arith.mulf %149, %153 : vector<32x32xf32>
    %155 = arith.truncf %154 : vector<32x32xf32> to vector<32x32xbf16>
    %156 = arith.truncf %139 : vector<32x32xf32> to vector<32x32xbf16>
    %cst_46 = arith.constant dense<0.000000e+00> : vector<32x32xf32>
    %157 = tpu.matmul %155, %156, %cst_46 {dimension_numbers = #tpu.dot_dimension_numbers<[1], [0], [0], [1], [0, 0, 1, 1], [], []>} : vector<32x32xbf16>, vector<32x32xbf16>, vector<32x32xf32> -> vector<32x32xf32>
    %158 = arith.truncf %157 : vector<32x32xf32> to vector<32x32xbf16>
    %c32_47 = arith.constant 32 : index
    %c0_48 = arith.constant 0 : index
    %159 = vector.load %arg16[%c32_47, %c0_48] : memref<64x128xbf16, #tpu.memory_space<vmem>>, vector<32x32xbf16>
    tpu.vector_store %arg16[%c32_47, %c0_48], %158 {strides = array<i32>} : memref<64x128xbf16, #tpu.memory_space<vmem>>, vector<32x32xbf16>,
    %160 = vector.extract_strided_slice %38 {offsets = [32, 32], sizes = [32, 32], strides = [1, 1]} : vector<64x384xf32> to vector<32x32xf32>
    %161 = vector.extract_strided_slice %38 {offsets = [32, 160], sizes = [32, 32], strides = [1, 1]} : vector<64x384xf32> to vector<32x32xf32>
    %162 = vector.extract_strided_slice %38 {offsets = [32, 288], sizes = [32, 32], strides = [1, 1]} : vector<64x384xf32> to vector<32x32xf32>
    %163 = arith.truncf %160 : vector<32x32xf32> to vector<32x32xbf16>
    %164 = arith.truncf %161 : vector<32x32xf32> to vector<32x32xbf16>
    %cst_49 = arith.constant dense<0.000000e+00> : vector<32x32xf32>
    %165 = tpu.matmul %163, %164, %cst_49 {dimension_numbers = #tpu.dot_dimension_numbers<[1], [1], [0], [0], [0, 0, 1, 0], [], []>} : vector<32x32xbf16>, vector<32x32xbf16>, vector<32x32xf32> -> vector<32x32xf32>
    %166 = vector.broadcast %44 : vector<1x32xf32> to vector<32x32xf32>
    %167 = arith.addf %165, %166 : vector<32x32xf32>
    %cst_50 = arith.constant dense<0xFF800000> : vector<32xf32>
    %168 = vector.multi_reduction <maximumf>, %167, %cst_50 [1] : vector<32x32xf32> to vector<32xf32>
    %169 = vector.shape_cast %168 : vector<32xf32> to vector<32x1xf32>
    %170 = vector.broadcast %169 : vector<32x1xf32> to vector<32x32xf32>
    %171 = arith.subf %167, %170 : vector<32x32xf32>
    %172 = math.exp %171 : vector<32x32xf32>
    %cst_51 = arith.constant dense<0.000000e+00> : vector<32xf32>
    %173 = vector.multi_reduction <add>, %172, %cst_51 [1] : vector<32x32xf32> to vector<32xf32>
    %174 = vector.shape_cast %173 : vector<32xf32> to vector<32x1xf32>
    %175 = tpu.reciprocal %174 {approx = true} : vector<32x1xf32> -> vector<32x1xf32>
    %176 = vector.broadcast %175 : vector<32x1xf32> to vector<32x32xf32>
    %177 = arith.mulf %172, %176 : vector<32x32xf32>
    %178 = arith.truncf %177 : vector<32x32xf32> to vector<32x32xbf16>
    %179 = arith.truncf %162 : vector<32x32xf32> to vector<32x32xbf16>
    %cst_52 = arith.constant dense<0.000000e+00> : vector<32x32xf32>
    %180 = tpu.matmul %178, %179, %cst_52 {dimension_numbers = #tpu.dot_dimension_numbers<[1], [0], [0], [1], [0, 0, 1, 1], [], []>} : vector<32x32xbf16>, vector<32x32xbf16>, vector<32x32xf32> -> vector<32x32xf32>
    %181 = arith.truncf %180 : vector<32x32xf32> to vector<32x32xbf16>
    %c32_53 = arith.constant 32 : index
    %c32_54 = arith.constant 32 : index
    %182 = vector.load %arg16[%c32_53, %c32_54] : memref<64x128xbf16, #tpu.memory_space<vmem>>, vector<32x32xbf16>
    tpu.vector_store %arg16[%c32_53, %c32_54], %181 {strides = array<i32>} : memref<64x128xbf16, #tpu.memory_space<vmem>>, vector<32x32xbf16>,
    %183 = vector.extract_strided_slice %38 {offsets = [32, 64], sizes = [32, 32], strides = [1, 1]} : vector<64x384xf32> to vector<32x32xf32>
    %184 = vector.extract_strided_slice %38 {offsets = [32, 192], sizes = [32, 32], strides = [1, 1]} : vector<64x384xf32> to vector<32x32xf32>
    %185 = vector.extract_strided_slice %38 {offsets = [32, 320], sizes = [32, 32], strides = [1, 1]} : vector<64x384xf32> to vector<32x32xf32>
    %186 = arith.truncf %183 : vector<32x32xf32> to vector<32x32xbf16>
    %187 = arith.truncf %184 : vector<32x32xf32> to vector<32x32xbf16>
    %cst_55 = arith.constant dense<0.000000e+00> : vector<32x32xf32>
    %188 = tpu.matmul %186, %187, %cst_55 {dimension_numbers = #tpu.dot_dimension_numbers<[1], [1], [0], [0], [0, 0, 1, 0], [], []>} : vector<32x32xbf16>, vector<32x32xbf16>, vector<32x32xf32> -> vector<32x32xf32>
    %189 = vector.broadcast %44 : vector<1x32xf32> to vector<32x32xf32>
    %190 = arith.addf %188, %189 : vector<32x32xf32>
    %cst_56 = arith.constant dense<0xFF800000> : vector<32xf32>
    %191 = vector.multi_reduction <maximumf>, %190, %cst_56 [1] : vector<32x32xf32> to vector<32xf32>
    %192 = vector.shape_cast %191 : vector<32xf32> to vector<32x1xf32>
    %193 = vector.broadcast %192 : vector<32x1xf32> to vector<32x32xf32>
    %194 = arith.subf %190, %193 : vector<32x32xf32>
    %195 = math.exp %194 : vector<32x32xf32>
    %cst_57 = arith.constant dense<0.000000e+00> : vector<32xf32>
    %196 = vector.multi_reduction <add>, %195, %cst_57 [1] : vector<32x32xf32> to vector<32xf32>
    %197 = vector.shape_cast %196 : vector<32xf32> to vector<32x1xf32>
    %198 = tpu.reciprocal %197 {approx = true} : vector<32x1xf32> -> vector<32x1xf32>
    %199 = vector.broadcast %198 : vector<32x1xf32> to vector<32x32xf32>
    %200 = arith.mulf %195, %199 : vector<32x32xf32>
    %201 = arith.truncf %200 : vector<32x32xf32> to vector<32x32xbf16>
    %202 = arith.truncf %185 : vector<32x32xf32> to vector<32x32xbf16>
    %cst_58 = arith.constant dense<0.000000e+00> : vector<32x32xf32>
    %203 = tpu.matmul %201, %202, %cst_58 {dimension_numbers = #tpu.dot_dimension_numbers<[1], [0], [0], [1], [0, 0, 1, 1], [], []>} : vector<32x32xbf16>, vector<32x32xbf16>, vector<32x32xf32> -> vector<32x32xf32>
    %204 = arith.truncf %203 : vector<32x32xf32> to vector<32x32xbf16>
    %c32_59 = arith.constant 32 : index
    %c64_60 = arith.constant 64 : index
    %205 = vector.load %arg16[%c32_59, %c64_60] : memref<64x128xbf16, #tpu.memory_space<vmem>>, vector<32x32xbf16>
    tpu.vector_store %arg16[%c32_59, %c64_60], %204 {strides = array<i32>} : memref<64x128xbf16, #tpu.memory_space<vmem>>, vector<32x32xbf16>,
    %206 = vector.extract_strided_slice %38 {offsets = [32, 96], sizes = [32, 32], strides = [1, 1]} : vector<64x384xf32> to vector<32x32xf32>
    %207 = vector.extract_strided_slice %38 {offsets = [32, 224], sizes = [32, 32], strides = [1, 1]} : vector<64x384xf32> to vector<32x32xf32>
    %208 = vector.extract_strided_slice %38 {offsets = [32, 352], sizes = [32, 32], strides = [1, 1]} : vector<64x384xf32> to vector<32x32xf32>
    %209 = arith.truncf %206 : vector<32x32xf32> to vector<32x32xbf16>
    %210 = arith.truncf %207 : vector<32x32xf32> to vector<32x32xbf16>
    %cst_61 = arith.constant dense<0.000000e+00> : vector<32x32xf32>
    %211 = tpu.matmul %209, %210, %cst_61 {dimension_numbers = #tpu.dot_dimension_numbers<[1], [1], [0], [0], [0, 0, 1, 0], [], []>} : vector<32x32xbf16>, vector<32x32xbf16>, vector<32x32xf32> -> vector<32x32xf32>
    %212 = vector.broadcast %44 : vector<1x32xf32> to vector<32x32xf32>
    %213 = arith.addf %211, %212 : vector<32x32xf32>
    %cst_62 = arith.constant dense<0xFF800000> : vector<32xf32>
    %214 = vector.multi_reduction <maximumf>, %213, %cst_62 [1] : vector<32x32xf32> to vector<32xf32>
    %215 = vector.shape_cast %214 : vector<32xf32> to vector<32x1xf32>
    %216 = vector.broadcast %215 : vector<32x1xf32> to vector<32x32xf32>
    %217 = arith.subf %213, %216 : vector<32x32xf32>
    %218 = math.exp %217 : vector<32x32xf32>
    %cst_63 = arith.constant dense<0.000000e+00> : vector<32xf32>
    %219 = vector.multi_reduction <add>, %218, %cst_63 [1] : vector<32x32xf32> to vector<32xf32>
    %220 = vector.shape_cast %219 : vector<32xf32> to vector<32x1xf32>
    %221 = tpu.reciprocal %220 {approx = true} : vector<32x1xf32> -> vector<32x1xf32>
    %222 = vector.broadcast %221 : vector<32x1xf32> to vector<32x32xf32>
    %223 = arith.mulf %218, %222 : vector<32x32xf32>
    %224 = arith.truncf %223 : vector<32x32xf32> to vector<32x32xbf16>
    %225 = arith.truncf %208 : vector<32x32xf32> to vector<32x32xbf16>
    %cst_64 = arith.constant dense<0.000000e+00> : vector<32x32xf32>
    %226 = tpu.matmul %224, %225, %cst_64 {dimension_numbers = #tpu.dot_dimension_numbers<[1], [0], [0], [1], [0, 0, 1, 1], [], []>} : vector<32x32xbf16>, vector<32x32xbf16>, vector<32x32xf32> -> vector<32x32xf32>
    %227 = arith.truncf %226 : vector<32x32xf32> to vector<32x32xbf16>
    %c32_65 = arith.constant 32 : index
    %c96_66 = arith.constant 96 : index
    %228 = vector.load %arg16[%c32_65, %c96_66] : memref<64x128xbf16, #tpu.memory_space<vmem>>, vector<32x32xbf16>
    tpu.vector_store %arg16[%c32_65, %c96_66], %227 {strides = array<i32>} : memref<64x128xbf16, #tpu.memory_space<vmem>>, vector<32x32xbf16>,
    %c0_67 = arith.constant 0 : index
    %c0_68 = arith.constant 0 : index
    %229 = vector.load %arg16[%c0_67, %c0_68] : memref<64x128xbf16, #tpu.memory_space<vmem>>, vector<64x128xbf16>
    %c0_69 = arith.constant 0 : index
    %c0_70 = arith.constant 0 : index
    %c0_71 = arith.constant 0 : index
    %230 = vector.load %arg7[%c0_69, %c0_70, %c0_71] : memref<1x128x128xbf16, #tpu.memory_space<vmem>>, vector<1x128x128xbf16>
    %231 = vector.shape_cast %230 : vector<1x128x128xbf16> to vector<128x128xbf16>
    %cst_72 = arith.constant dense<0.000000e+00> : vector<64x128xf32>
    %232 = tpu.matmul %229, %231, %cst_72 {dimension_numbers = #tpu.dot_dimension_numbers<[1], [0], [0], [1], [0, 0, 1, 1], [], []>} : vector<64x128xbf16>, vector<128x128xbf16>, vector<64x128xf32> -> vector<64x128xf32>
    %233 = arith.addf %4, %232 : vector<64x128xf32>
    %c0_73 = arith.constant 0 : index
    %c0_74 = arith.constant 0 : index
    %c0_75 = arith.constant 0 : index
    %234 = vector.load %arg8[%c0_73, %c0_74, %c0_75] : memref<1x1x128xf32, #tpu.memory_space<vmem>>, vector<1x1x128xf32>
    %235 = vector.shape_cast %234 : vector<1x1x128xf32> to vector<1x128xf32>
    %236 = vector.broadcast %235 : vector<1x128xf32> to vector<64x128xf32>
    %237 = arith.addf %233, %236 : vector<64x128xf32>
    %c0_76 = arith.constant 0 : index
    %c0_77 = arith.constant 0 : index
    %c0_78 = arith.constant 0 : index
    %238 = vector.load %arg9[%c0_76, %c0_77, %c0_78] : memref<1x1x128xf32, #tpu.memory_space<vmem>>, vector<1x1x128xf32>
    %239 = vector.shape_cast %238 : vector<1x1x128xf32> to vector<1x128xf32>
    %c0_79 = arith.constant 0 : index
    %c0_80 = arith.constant 0 : index
    %c0_81 = arith.constant 0 : index
    %240 = vector.load %arg10[%c0_79, %c0_80, %c0_81] : memref<1x1x128xf32, #tpu.memory_space<vmem>>, vector<1x1x128xf32>
    %241 = vector.shape_cast %240 : vector<1x1x128xf32> to vector<1x128xf32>
    %cst_82 = arith.constant dense<0.000000e+00> : vector<64xf32>
    %242 = vector.multi_reduction <add>, %237, %cst_82 [1] : vector<64x128xf32> to vector<64xf32>
    %243 = vector.shape_cast %242 : vector<64xf32> to vector<64x1xf32>
    %cst_83 = arith.constant 1.280000e+02 : f32
    %244 = vector.broadcast %cst_83 : f32 to vector<64x1xf32>
    %245 = arith.divf %243, %244 : vector<64x1xf32>
    %246 = vector.broadcast %245 : vector<64x1xf32> to vector<64x128xf32>
    %247 = arith.subf %237, %246 : vector<64x128xf32>
    %248 = arith.mulf %247, %247 : vector<64x128xf32>
    %cst_84 = arith.constant dense<0.000000e+00> : vector<64xf32>
    %249 = vector.multi_reduction <add>, %248, %cst_84 [1] : vector<64x128xf32> to vector<64xf32>
    %250 = vector.shape_cast %249 : vector<64xf32> to vector<64x1xf32>
    %cst_85 = arith.constant 1.280000e+02 : f32
    %251 = vector.broadcast %cst_85 : f32 to vector<64x1xf32>
    %252 = arith.divf %250, %251 : vector<64x1xf32>
    %253 = vector.broadcast %245 : vector<64x1xf32> to vector<64x128xf32>
    %254 = arith.subf %237, %253 : vector<64x128xf32>
    %cst_86 = arith.constant 9.99999974E-6 : f32
    %255 = vector.broadcast %cst_86 : f32 to vector<64x1xf32>
    %256 = arith.addf %252, %255 : vector<64x1xf32>
    %257 = math.rsqrt %256 : vector<64x1xf32>
    %258 = vector.broadcast %257 : vector<64x1xf32> to vector<64x128xf32>
    %259 = arith.mulf %254, %258 : vector<64x128xf32>
    %260 = vector.broadcast %239 : vector<1x128xf32> to vector<64x128xf32>
    %261 = arith.mulf %259, %260 : vector<64x128xf32>
    %262 = vector.broadcast %241 : vector<1x128xf32> to vector<64x128xf32>
    %263 = arith.addf %261, %262 : vector<64x128xf32>
    %264 = arith.truncf %263 : vector<64x128xf32> to vector<64x128xbf16>
    %c0_87 = arith.constant 0 : index
    %c0_88 = arith.constant 0 : index
    %c0_89 = arith.constant 0 : index
    %265 = vector.load %arg11[%c0_87, %c0_88, %c0_89] : memref<1x128x256xbf16, #tpu.memory_space<vmem>>, vector<1x128x256xbf16>
    %266 = vector.shape_cast %265 : vector<1x128x256xbf16> to vector<128x256xbf16>
    %cst_90 = arith.constant dense<0.000000e+00> : vector<64x256xf32>
    %267 = tpu.matmul %264, %266, %cst_90 {dimension_numbers = #tpu.dot_dimension_numbers<[1], [0], [0], [1], [0, 0, 1, 1], [], []>} : vector<64x128xbf16>, vector<128x256xbf16>, vector<64x256xf32> -> vector<64x256xf32>
    %c0_91 = arith.constant 0 : index
    %c0_92 = arith.constant 0 : index
    %c0_93 = arith.constant 0 : index
    %268 = vector.load %arg12[%c0_91, %c0_92, %c0_93] : memref<1x1x256xf32, #tpu.memory_space<vmem>>, vector<1x1x256xf32>
    %269 = vector.shape_cast %268 : vector<1x1x256xf32> to vector<1x256xf32>
    %270 = vector.broadcast %269 : vector<1x256xf32> to vector<64x256xf32>
    %271 = arith.addf %267, %270 : vector<64x256xf32>
    %cst_94 = arith.constant 5.000000e-01 : f32
    %272 = vector.broadcast %cst_94 : f32 to vector<64x256xf32>
    %273 = arith.mulf %272, %271 : vector<64x256xf32>
    %cst_95 = arith.constant 4.471500e-02 : f32
    %274 = vector.broadcast %cst_95 : f32 to vector<64x256xf32>
    %275 = arith.mulf %274, %271 : vector<64x256xf32>
    %276 = arith.mulf %275, %271 : vector<64x256xf32>
    %277 = arith.mulf %276, %271 : vector<64x256xf32>
    %278 = arith.addf %271, %277 : vector<64x256xf32>
    %cst_96 = arith.constant 0.797884583 : f32
    %279 = vector.broadcast %cst_96 : f32 to vector<64x256xf32>
    %280 = arith.mulf %279, %278 : vector<64x256xf32>
    %281 = math.tanh %280 : vector<64x256xf32>
    %cst_97 = arith.constant 1.000000e+00 : f32
    %282 = vector.broadcast %cst_97 : f32 to vector<64x256xf32>
    %283 = arith.addf %282, %281 : vector<64x256xf32>
    %284 = arith.mulf %273, %283 : vector<64x256xf32>
    %285 = arith.truncf %284 : vector<64x256xf32> to vector<64x256xbf16>
    %c0_98 = arith.constant 0 : index
    %c0_99 = arith.constant 0 : index
    %c0_100 = arith.constant 0 : index
    %286 = vector.load %arg13[%c0_98, %c0_99, %c0_100] : memref<1x256x128xbf16, #tpu.memory_space<vmem>>, vector<1x256x128xbf16>
    %287 = vector.shape_cast %286 : vector<1x256x128xbf16> to vector<256x128xbf16>
    %cst_101 = arith.constant dense<0.000000e+00> : vector<64x128xf32>
    %288 = tpu.matmul %285, %287, %cst_101 {dimension_numbers = #tpu.dot_dimension_numbers<[1], [0], [0], [1], [0, 0, 1, 1], [], []>} : vector<64x256xbf16>, vector<256x128xbf16>, vector<64x128xf32> -> vector<64x128xf32>
    %c0_102 = arith.constant 0 : index
    %c0_103 = arith.constant 0 : index
    %c0_104 = arith.constant 0 : index
    %289 = vector.load %arg14[%c0_102, %c0_103, %c0_104] : memref<1x1x128xf32, #tpu.memory_space<vmem>>, vector<1x1x128xf32>
    %290 = vector.shape_cast %289 : vector<1x1x128xf32> to vector<1x128xf32>
    %291 = vector.broadcast %290 : vector<1x128xf32> to vector<64x128xf32>
    %292 = arith.addf %288, %291 : vector<64x128xf32>
    %293 = arith.addf %237, %292 : vector<64x128xf32>
    %294 = vector.shape_cast %293 : vector<64x128xf32> to vector<2x32x128xf32>
    %c0_105 = arith.constant 0 : index
    %c0_106 = arith.constant 0 : index
    %c0_107 = arith.constant 0 : index
    %295 = vector.load %arg15[%c0_105, %c0_106, %c0_107] : memref<2x32x128xf32, #tpu.memory_space<vmem>>, vector<2x32x128xf32>
    tpu.vector_store %arg15[%c0_105, %c0_106, %c0_107], %294 {strides = array<i32>} : memref<2x32x128xf32, #tpu.memory_space<vmem>>, vector<2x32x128xf32>,
    return
  }
  func.func @transform_0(%arg0: i32, %arg1: i32) -> (i32, i32, i32) {
    %c0_i32 = arith.constant 0 : i32
    %c0_i32_0 = arith.constant 0 : i32
    %c0_i32_1 = arith.constant 0 : i32
    return %arg0, %c0_i32, %c0_i32_0 : i32, i32, i32
  }
  func.func @transform_1(%arg0: i32, %arg1: i32) -> (i32, i32, i32) {
    %c0_i32 = arith.constant 0 : i32
    %c0_i32_0 = arith.constant 0 : i32
    %c0_i32_1 = arith.constant 0 : i32
    return %arg1, %c0_i32, %c0_i32_0 : i32, i32, i32
  }
  func.func @transform_2(%arg0: i32, %arg1: i32) -> (i32, i32, i32) {
    %c0_i32 = arith.constant 0 : i32
    %c0_i32_0 = arith.constant 0 : i32
    %c0_i32_1 = arith.constant 0 : i32
    return %arg1, %c0_i32, %c0_i32_0 : i32, i32, i32
  }
  func.func @transform_3(%arg0: i32, %arg1: i32) -> (i32, i32, i32) {
    %c0_i32 = arith.constant 0 : i32
    %c0_i32_0 = arith.constant 0 : i32
    %c0_i32_1 = arith.constant 0 : i32
    return %arg1, %c0_i32, %c0_i32_0 : i32, i32, i32
  }
  func.func @transform_4(%arg0: i32, %arg1: i32) -> (i32, i32, i32) {
    %c0_i32 = arith.constant 0 : i32
    %c0_i32_0 = arith.constant 0 : i32
    %c0_i32_1 = arith.constant 0 : i32
    return %arg1, %c0_i32, %c0_i32_0 : i32, i32, i32
  }
  func.func @transform_5(%arg0: i32, %arg1: i32) -> (i32, i32, i32) {
    %c0_i32 = arith.constant 0 : i32
    %c0_i32_0 = arith.constant 0 : i32
    %c0_i32_1 = arith.constant 0 : i32
    return %arg1, %c0_i32, %c0_i32_0 : i32, i32, i32
  }
  func.func @transform_6(%arg0: i32, %arg1: i32) -> (i32, i32, i32) {
    %c0_i32 = arith.constant 0 : i32
    %c0_i32_0 = arith.constant 0 : i32
    %c0_i32_1 = arith.constant 0 : i32
    return %arg1, %c0_i32, %c0_i32_0 : i32, i32, i32
  }
  func.func @transform_7(%arg0: i32, %arg1: i32) -> (i32, i32, i32) {
    %c0_i32 = arith.constant 0 : i32
    %c0_i32_0 = arith.constant 0 : i32
    %c0_i32_1 = arith.constant 0 : i32
    return %arg1, %c0_i32, %c0_i32_0 : i32, i32, i32
  }
  func.func @transform_8(%arg0: i32, %arg1: i32) -> (i32, i32, i32) {
    %c0_i32 = arith.constant 0 : i32
    %c0_i32_0 = arith.constant 0 : i32
    %c0_i32_1 = arith.constant 0 : i32
    return %arg1, %c0_i32, %c0_i32_0 : i32, i32, i32
  }
  func.func @transform_9(%arg0: i32, %arg1: i32) -> (i32, i32, i32) {
    %c0_i32 = arith.constant 0 : i32
    %c0_i32_0 = arith.constant 0 : i32
    %c0_i32_1 = arith.constant 0 : i32
    return %arg1, %c0_i32, %c0_i32_0 : i32, i32, i32
  }
  func.func @transform_10(%arg0: i32, %arg1: i32) -> (i32, i32, i32) {
    %c0_i32 = arith.constant 0 : i32
    %c0_i32_0 = arith.constant 0 : i32
    %c0_i32_1 = arith.constant 0 : i32
    return %arg1, %c0_i32, %c0_i32_0 : i32, i32, i32
  }
  func.func @transform_11(%arg0: i32, %arg1: i32) -> (i32, i32, i32) {
    %c0_i32 = arith.constant 0 : i32
    %c0_i32_0 = arith.constant 0 : i32
    %c0_i32_1 = arith.constant 0 : i32
    return %arg1, %c0_i32, %c0_i32_0 : i32, i32, i32
  }
  func.func @transform_12(%arg0: i32, %arg1: i32) -> (i32, i32, i32) {
    %c0_i32 = arith.constant 0 : i32
    %c0_i32_0 = arith.constant 0 : i32
    %c0_i32_1 = arith.constant 0 : i32
    return %arg1, %c0_i32, %c0_i32_0 : i32, i32, i32
  }
  func.func @transform_13(%arg0: i32, %arg1: i32) -> (i32, i32, i32) {
    %c0_i32 = arith.constant 0 : i32
    %c0_i32_0 = arith.constant 0 : i32
    %c0_i32_1 = arith.constant 0 : i32
    return %arg0, %c0_i32, %c0_i32_0 : i32, i32, i32
  }
}

</mosaic_0001>

<llo_original>
// kernel: tpu_custom_call.1
$region0: #{tpu_custom_call.1}
  #allocation0 [shape = 'u32[]', space=smem, size = 0x4, offset = 0x4, fixed_abs, tag = 'smem constant byte address 0x4 - core index']
  #allocation1 [shape = 'u32[72,128]{1,0:T(1,128)}', space=vmem, size = 0x9000, scoped, tag = 'internal scratch']
  #allocation2 [shape = 'bf16[64,128]{1,0:T(8,128)(2,1)}', space=vmem, size = 0x4000, scoped, tag = 'scratch operand']
  %s0 = inlined_call_operand.hbm [shape: f32[2,32,128], index: 0, kind: input, shape index: {}]
  %s1 = inlined_call_operand.hbm [shape: f32[2,1,128], index: 1, kind: input, shape index: {}]
  %s2 = inlined_call_operand.hbm [shape: f32[2,1,128], index: 2, kind: input, shape index: {}]
  %s3 = inlined_call_operand.hbm [shape: bf16[2,128,384], index: 3, kind: input, shape index: {}]
  %s4 = inlined_call_operand.hbm [shape: f32[2,1,384], index: 4, kind: input, shape index: {}]
  %s5 = inlined_call_operand.hbm [shape: bf16[2,128,128], index: 5, kind: input, shape index: {}]
  %s6 = inlined_call_operand.vmem [shape: f32[2,1,128], index: 6, kind: input, shape index: {}]
  %s7 = inlined_call_operand.hbm [shape: f32[2,1,128], index: 7, kind: input, shape index: {}]
  %s8 = inlined_call_operand.hbm [shape: f32[2,1,128], index: 8, kind: input, shape index: {}]
  %s9 = inlined_call_operand.hbm [shape: bf16[2,128,256], index: 9, kind: input, shape index: {}]
  %s10 = inlined_call_operand.vmem [shape: f32[2,1,256], index: 10, kind: input, shape index: {}]
  %s11 = inlined_call_operand.hbm [shape: bf16[2,256,128], index: 11, kind: input, shape index: {}]
  %s12 = inlined_call_operand.vmem [shape: f32[2,1,128], index: 12, kind: input, shape index: {}]
  %s13 = inlined_call_operand.hbm [shape: f32[2,32,128], index: 13, kind: output, shape index: {}]
  %s14 = sld [smem:[#allocation0]]
  $region129: #{tpu_custom_call.1} parent=0
    _
  %s16 = ssub.s32 1, %s14
  %s17 = scalar_select 0, %s16, %s14
  $region1: #{tpu_custom_call.1} parent=0
    #allocation3 [shape = 'u8[32768]{0}', space=vmem, size = 0x8000, scoped, tag = 'input window, operand 0, single buffered']
    #allocation4 [shape = 's32[2]{0}', space=sflag, size = 0x8, scoped, tag = 'scoped memory for tpu_custom_call.1']
    #allocation5 [shape = 's32[2]{0}', space=sflag, size = 0x8, scoped, tag = 'scoped memory for tpu_custom_call.1']
    #allocation6 [shape = 'u8[1024]{0}', space=vmem, size = 0x400, scoped, tag = 'input window, operand 1']
    #allocation7 [shape = 's32[2]{0}', space=sflag, size = 0x8, scoped, tag = 'scoped memory for tpu_custom_call.1']
    #allocation8 [shape = 'u8[1024]{0}', space=vmem, size = 0x400, scoped, tag = 'input window, operand 2']
    #allocation9 [shape = 'u8[196608]{0}', space=vmem, size = 0x30000, scoped, tag = 'input window, operand 3']
    #allocation10 [shape = 's32[2]{0}', space=sflag, size = 0x8, scoped, tag = 'scoped memory for tpu_custom_call.1']
    #allocation11 [shape = 'u8[3072]{0}', space=vmem, size = 0xc00, scoped, tag = 'input window, operand 4']
    #allocation12 [shape = 'u8[65536]{0}', space=vmem, size = 0x10000, scoped, tag = 'input window, operand 5']
    #allocation13 [shape = 's32[2]{0}', space=sflag, size = 0x8, scoped, tag = 'scoped memory for tpu_custom_call.1']
    #allocation14 [shape = 'u8[1024]{0}', space=vmem, size = 0x400, scoped, tag = 'input window, operand 7']
    #allocation15 [shape = 'u8[1024]{0}', space=vmem, size = 0x400, scoped, tag = 'input window, operand 8']
    #allocation16 [shape = 's32[2]{0}', space=sflag, size = 0x8, scoped, tag = 'scoped memory for tpu_custom_call.1']
    #allocation17 [shape = 'u8[131072]{0}', space=vmem, size = 0x20000, scoped, tag = 'input window, operand 9']
    #allocation18 [shape = 'u8[131072]{0}', space=vmem, size = 0x20000, scoped, tag = 'input window, operand 11']
    #allocation19 [shape = 's32[2]{0}', space=sflag, size = 0x8, scoped, tag = 'scoped memory for tpu_custom_call.1']
    #allocation20 [shape = 'u8[32768]{0}', space=vmem, size = 0x8000, scoped, tag = 'output window, operand 0, single buffered']
    %18 = vsyncpa [#allocation4], 0
    %19 = vsyncpa [#allocation7], 0
    %s20 = scalar_lea.sflag [#allocation7], 1
    %21 = vsyncpa %s20, 0
    %22 = vsyncpa [#allocation10], 0
    %s23 = scalar_lea.sflag [#allocation10], 1
    %24 = vsyncpa %s23, 0
    %25 = vsyncpa [#allocation13], 0
    %s26 = scalar_lea.sflag [#allocation13], 1
    %27 = vsyncpa %s26, 0
    %28 = vsyncpa [#allocation16], 0
    %s29 = scalar_lea.sflag [#allocation16], 1
    %30 = vsyncpa %s29, 0
    %31 = vsyncpa [#allocation19], 0
    %s32 = scalar_lea.sflag [#allocation19], 1
    %33 = vsyncpa %s32, 0
    %34 = vsyncpa [#allocation5], 0
    loop: start=0, step=1, limit=4
    $region2: #{tpu_custom_call.1} parent=1 // loop_pre_header
      _
    $region3: #{tpu_custom_call.1} parent=1 // loop_header
      %s36 = sphi 0, %s40
      %p37 = scmp.ge.s32.totalorder %s36, 4
      %s43 = sphi 0, %s55
      %s44 = sphi 0, %s51
      %s45 = sphi 0, %s43
      %s46 = sphi 0, %s44
      %s47 = sphi 0, %s45
      %s48 = sphi 0, %s46
      %s58 = sphi 0, %s60
      %s61 = sphi 0, %s58
      %s62 = sphi 0, %s61
      %s78 = sphi 0, %s62
      %s84 = sphi 0, %s86
      %s87 = sphi 0, %s84
      %s88 = sphi 0, %s87
      %s104 = sphi 0, %s88
      %s110 = sphi 0, %s112
      %s113 = sphi 0, %s110
      %s114 = sphi 0, %s113
      %s130 = sphi 0, %s114
      %s136 = sphi 0, %s138
      %s139 = sphi 0, %s136
      %s140 = sphi 0, %s139
      %s156 = sphi 0, %s140
      %s162 = sphi 0, %s164
      %s165 = sphi 0, %s162
      %s166 = sphi 0, %s165
      %s182 = sphi 0, %s166
      %s188 = sphi 0, %s190
      %s191 = sphi 0, %s188
      %s192 = sphi 0, %s191
      %s208 = sphi 0, %s192
      %s214 = sphi 0, %s216
      %s217 = sphi 0, %s214
      %s218 = sphi 0, %s217
      %s234 = sphi 0, %s218
      %s240 = sphi 0, %s242
      %s243 = sphi 0, %s240
      %s244 = sphi 0, %s243
      %s260 = sphi 0, %s244
      %s266 = sphi 0, %s268
      %s269 = sphi 0, %s266
      %s270 = sphi 0, %s269
      %s286 = sphi 0, %s270
      %s292 = sphi 0, %s294
      %s295 = sphi 0, %s292
      %s296 = sphi 0, %s295
      %s312 = sphi 0, %s296
      %s318 = sphi 0, %s320
      %s321 = sphi 0, %s318
      %s322 = sphi 0, %s321
      %s338 = sphi 0, %s322
      %s344 = sphi 0, %s346
      %s347 = sphi 0, %s344
      %s348 = sphi 0, %s347
      %s364 = sphi 0, %s348
      %s370 = sphi 0, %s372
      %s373 = sphi 0, %s370
      %s374 = sphi 0, %s373
      %s390 = sphi 0, %s374
      %s396 = sphi 0, %s398
      %s399 = sphi 0, %s396
      %s400 = sphi 0, %s399
      %s416 = sphi 0, %s400
    $region4: #{tpu_custom_call.1} parent=1 // loop_header_branch
      %39 = sbr.rel (%p37) target = $region8
    $region5: #{tpu_custom_call.1} parent=1 // loop_body
      %s41 = ssub.s32 %s36, 1
      %s42 = ssub.s32 %s36, 2
      %s49 = sadd.s32 1, %s44
      %p50 = scmp.ge.s32.totalorder %s49, 2
      %s51 = scalar_select %p50, 0, %s49
      %s52 = sadd.s32 1, %s43
      %s53 = scalar_select %p50, %s52, %s43
      %p54 = scmp.ge.s32.totalorder %s53, 1
      %s55 = scalar_select %p54, 0, %s53
      %s56 = ssub.s32 %s43, %s55
      %p57 = scmp.eq.s32.totalorder %s56, 0
      %s59 = sadd.s32 %s58, 1
      %s60 = scalar_select %p57, %s58, %s59
      %p63 = pneg %p57
      %p64 = scmp.eq.s32.totalorder %s36, 1
      %p65 = por %p63, %p64
      %p66 = scmp.ne.s32.totalorder %s58, %s61
      %p67 = scmp.eq.s32.totalorder %s36, 0
      %p68 = por %p66, %p67
      %p69 = scmp.ne.s32.totalorder %s58, %s61
      %p70 = scmp.eq.s32.totalorder %s41, 1
      %p71 = por %p69, %p70
      %p72 = scmp.ne.s32.totalorder %s61, %s62
      %p73 = scmp.eq.s32.totalorder %s41, 0
      %p74 = por %p72, %p73
      %p75 = scmp.ne.s32.totalorder %s61, %s62
      %p76 = scmp.eq.s32.totalorder %s42, 1
      %p77 = por %p75, %p76
      %p79 = scmp.ne.s32.totalorder %s62, %s78
      %p80 = scmp.eq.s32.totalorder %s42, 0
      %p81 = por %p79, %p80
      %s82 = ssub.s32 %s44, %s51
      %p83 = scmp.eq.s32.totalorder %s82, 0
      %s85 = sadd.s32 %s84, 1
      %s86 = scalar_select %p83, %s84, %s85
      %p89 = pneg %p83
      %p90 = scmp.eq.s32.totalorder %s36, 1
      %p91 = por %p89, %p90
      %p92 = scmp.ne.s32.totalorder %s84, %s87
      %p93 = scmp.eq.s32.totalorder %s36, 0
      %p94 = por %p92, %p93
      %p95 = scmp.ne.s32.totalorder %s84, %s87
      %p96 = scmp.eq.s32.totalorder %s41, 1
      %p97 = por %p95, %p96
      %p98 = scmp.ne.s32.totalorder %s87, %s88
      %p99 = scmp.eq.s32.totalorder %s41, 0
      %p100 = por %p98, %p99
      %p101 = scmp.ne.s32.totalorder %s87, %s88
      %p102 = scmp.eq.s32.totalorder %s42, 1
      %p103 = por %p101, %p102
      %p105 = scmp.ne.s32.totalorder %s88, %s104
      %p106 = scmp.eq.s32.totalorder %s42, 0
      %p107 = por %p105, %p106
      %s108 = ssub.s32 %s44, %s51
      %p109 = scmp.eq.s32.totalorder %s108, 0
      %s111 = sadd.s32 %s110, 1
      %s112 = scalar_select %p109, %s110, %s111
      %p115 = pneg %p109
      %p116 = scmp.eq.s32.totalorder %s36, 1
      %p117 = por %p115, %p116
      %p118 = scmp.ne.s32.totalorder %s110, %s113
      %p119 = scmp.eq.s32.totalorder %s36, 0
      %p120 = por %p118, %p119
      %p121 = scmp.ne.s32.totalorder %s110, %s113
      %p122 = scmp.eq.s32.totalorder %s41, 1
      %p123 = por %p121, %p122
      %p124 = scmp.ne.s32.totalorder %s113, %s114
      %p125 = scmp.eq.s32.totalorder %s41, 0
      %p126 = por %p124, %p125
      %p127 = scmp.ne.s32.totalorder %s113, %s114
      %p128 = scmp.eq.s32.totalorder %s42, 1
      %p129 = por %p127, %p128
      %p131 = scmp.ne.s32.totalorder %s114, %s130
      %p132 = scmp.eq.s32.totalorder %s42, 0
      %p133 = por %p131, %p132
      %s134 = ssub.s32 %s44, %s51
      %p135 = scmp.eq.s32.totalorder %s134, 0
      %s137 = sadd.s32 %s136, 1
      %s138 = scalar_select %p135, %s136, %s137
      %p141 = pneg %p135
      %p142 = scmp.eq.s32.totalorder %s36, 1
      %p143 = por %p141, %p142
      %p144 = scmp.ne.s32.totalorder %s136, %s139
      %p145 = scmp.eq.s32.totalorder %s36, 0
      %p146 = por %p144, %p145
      %p147 = scmp.ne.s32.totalorder %s136, %s139
      %p148 = scmp.eq.s32.totalorder %s41, 1
      %p149 = por %p147, %p148
      %p150 = scmp.ne.s32.totalorder %s139, %s140
      %p151 = scmp.eq.s32.totalorder %s41, 0
      %p152 = por %p150, %p151
      %p153 = scmp.ne.s32.totalorder %s139, %s140
      %p154 = scmp.eq.s32.totalorder %s42, 1
      %p155 = por %p153, %p154
      %p157 = scmp.ne.s32.totalorder %s140, %s156
      %p158 = scmp.eq.s32.totalorder %s42, 0
      %p159 = por %p157, %p158
      %s160 = ssub.s32 %s44, %s51
      %p161 = scmp.eq.s32.totalorder %s160, 0
      %s163 = sadd.s32 %s162, 1
      %s164 = scalar_select %p161, %s162, %s163
      %p167 = pneg %p161
      %p168 = scmp.eq.s32.totalorder %s36, 1
      %p169 = por %p167, %p168
      %p170 = scmp.ne.s32.totalorder %s162, %s165
      %p171 = scmp.eq.s32.totalorder %s36, 0
      %p172 = por %p170, %p171
      %p173 = scmp.ne.s32.totalorder %s162, %s165
      %p174 = scmp.eq.s32.totalorder %s41, 1
      %p175 = por %p173, %p174
      %p176 = scmp.ne.s32.totalorder %s165, %s166
      %p177 = scmp.eq.s32.totalorder %s41, 0
      %p178 = por %p176, %p177
      %p179 = scmp.ne.s32.totalorder %s165, %s166
      %p180 = scmp.eq.s32.totalorder %s42, 1
      %p181 = por %p179, %p180
      %p183 = scmp.ne.s32.totalorder %s166, %s182
      %p184 = scmp.eq.s32.totalorder %s42, 0
      %p185 = por %p183, %p184
      %s186 = ssub.s32 %s44, %s51
      %p187 = scmp.eq.s32.totalorder %s186, 0
      %s189 = sadd.s32 %s188, 1
      %s190 = scalar_select %p187, %s188, %s189
      %p193 = pneg %p187
      %p194 = scmp.eq.s32.totalorder %s36, 1
      %p195 = por %p193, %p194
      %p196 = scmp.ne.s32.totalorder %s188, %s191
      %p197 = scmp.eq.s32.totalorder %s36, 0
      %p198 = por %p196, %p197
      %p199 = scmp.ne.s32.totalorder %s188, %s191
      %p200 = scmp.eq.s32.totalorder %s41, 1
      %p201 = por %p199, %p200
      %p202 = scmp.ne.s32.totalorder %s191, %s192
      %p203 = scmp.eq.s32.totalorder %s41, 0
      %p204 = por %p202, %p203
      %p205 = scmp.ne.s32.totalorder %s191, %s192
      %p206 = scmp.eq.s32.totalorder %s42, 1
      %p207 = por %p205, %p206
      %p209 = scmp.ne.s32.totalorder %s192, %s208
      %p210 = scmp.eq.s32.totalorder %s42, 0
      %p211 = por %p209, %p210
      %s212 = ssub.s32 %s44, %s51
      %p213 = scmp.eq.s32.totalorder %s212, 0
      %s215 = sadd.s32 %s214, 1
      %s216 = scalar_select %p213, %s214, %s215
      %p219 = pneg %p213
      %p220 = scmp.eq.s32.totalorder %s36, 1
      %p221 = por %p219, %p220
      %p222 = scmp.ne.s32.totalorder %s214, %s217
      %p223 = scmp.eq.s32.totalorder %s36, 0
      %p224 = por %p222, %p223
      %p225 = scmp.ne.s32.totalorder %s214, %s217
      %p226 = scmp.eq.s32.totalorder %s41, 1
      %p227 = por %p225, %p226
      %p228 = scmp.ne.s32.totalorder %s217, %s218
      %p229 = scmp.eq.s32.totalorder %s41, 0
      %p230 = por %p228, %p229
      %p231 = scmp.ne.s32.totalorder %s217, %s218
      %p232 = scmp.eq.s32.totalorder %s42, 1
      %p233 = por %p231, %p232
      %p235 = scmp.ne.s32.totalorder %s218, %s234
      %p236 = scmp.eq.s32.totalorder %s42, 0
      %p237 = por %p235, %p236
      %s238 = ssub.s32 %s44, %s51
      %p239 = scmp.eq.s32.totalorder %s238, 0
      %s241 = sadd.s32 %s240, 1
      %s242 = scalar_select %p239, %s240, %s241
      %p245 = pneg %p239
      %p246 = scmp.eq.s32.totalorder %s36, 1
      %p247 = por %p245, %p246
      %p248 = scmp.ne.s32.totalorder %s240, %s243
      %p249 = scmp.eq.s32.totalorder %s36, 0
      %p250 = por %p248, %p249
      %p251 = scmp.ne.s32.totalorder %s240, %s243
      %p252 = scmp.eq.s32.totalorder %s41, 1
      %p253 = por %p251, %p252
      %p254 = scmp.ne.s32.totalorder %s243, %s244
      %p255 = scmp.eq.s32.totalorder %s41, 0
      %p256 = por %p254, %p255
      %p257 = scmp.ne.s32.totalorder %s243, %s244
      %p258 = scmp.eq.s32.totalorder %s42, 1
      %p259 = por %p257, %p258
      %p261 = scmp.ne.s32.totalorder %s244, %s260
      %p262 = scmp.eq.s32.totalorder %s42, 0
      %p263 = por %p261, %p262
      %s264 = ssub.s32 %s44, %s51
      %p265 = scmp.eq.s32.totalorder %s264, 0
      %s267 = sadd.s32 %s266, 1
      %s268 = scalar_select %p265, %s266, %s267
      %p271 = pneg %p265
      %p272 = scmp.eq.s32.totalorder %s36, 1
      %p273 = por %p271, %p272
      %p274 = scmp.ne.s32.totalorder %s266, %s269
      %p275 = scmp.eq.s32.totalorder %s36, 0
      %p276 = por %p274, %p275
      %p277 = scmp.ne.s32.totalorder %s266, %s269
      %p278 = scmp.eq.s32.totalorder %s41, 1
      %p279 = por %p277, %p278
      %p280 = scmp.ne.s32.totalorder %s269, %s270
      %p281 = scmp.eq.s32.totalorder %s41, 0
      %p282 = por %p280, %p281
      %p283 = scmp.ne.s32.totalorder %s269, %s270
      %p284 = scmp.eq.s32.totalorder %s42, 1
      %p285 = por %p283, %p284
      %p287 = scmp.ne.s32.totalorder %s270, %s286
      %p288 = scmp.eq.s32.totalorder %s42, 0
      %p289 = por %p287, %p288
      %s290 = ssub.s32 %s44, %s51
      %p291 = scmp.eq.s32.totalorder %s290, 0
      %s293 = sadd.s32 %s292, 1
      %s294 = scalar_select %p291, %s292, %s293
      %p297 = pneg %p291
      %p298 = scmp.eq.s32.totalorder %s36, 1
      %p299 = por %p297, %p298
      %p300 = scmp.ne.s32.totalorder %s292, %s295
      %p301 = scmp.eq.s32.totalorder %s36, 0
      %p302 = por %p300, %p301
      %p303 = scmp.ne.s32.totalorder %s292, %s295
      %p304 = scmp.eq.s32.totalorder %s41, 1
      %p305 = por %p303, %p304
      %p306 = scmp.ne.s32.totalorder %s295, %s296
      %p307 = scmp.eq.s32.totalorder %s41, 0
      %p308 = por %p306, %p307
      %p309 = scmp.ne.s32.totalorder %s295, %s296
      %p310 = scmp.eq.s32.totalorder %s42, 1
      %p311 = por %p309, %p310
      %p313 = scmp.ne.s32.totalorder %s296, %s312
      %p314 = scmp.eq.s32.totalorder %s42, 0
      %p315 = por %p313, %p314
      %s316 = ssub.s32 %s44, %s51
      %p317 = scmp.eq.s32.totalorder %s316, 0
      %s319 = sadd.s32 %s318, 1
      %s320 = scalar_select %p317, %s318, %s319
      %p323 = pneg %p317
      %p324 = scmp.eq.s32.totalorder %s36, 1
      %p325 = por %p323, %p324
      %p326 = scmp.ne.s32.totalorder %s318, %s321
      %p327 = scmp.eq.s32.totalorder %s36, 0
      %p328 = por %p326, %p327
      %p329 = scmp.ne.s32.totalorder %s318, %s321
      %p330 = scmp.eq.s32.totalorder %s41, 1
      %p331 = por %p329, %p330
      %p332 = scmp.ne.s32.totalorder %s321, %s322
      %p333 = scmp.eq.s32.totalorder %s41, 0
      %p334 = por %p332, %p333
      %p335 = scmp.ne.s32.totalorder %s321, %s322
      %p336 = scmp.eq.s32.totalorder %s42, 1
      %p337 = por %p335, %p336
      %p339 = scmp.ne.s32.totalorder %s322, %s338
      %p340 = scmp.eq.s32.totalorder %s42, 0
      %p341 = por %p339, %p340
      %s342 = ssub.s32 %s44, %s51
      %p343 = scmp.eq.s32.totalorder %s342, 0
      %s345 = sadd.s32 %s344, 1
      %s346 = scalar_select %p343, %s344, %s345
      %p349 = pneg %p343
      %p350 = scmp.eq.s32.totalorder %s36, 1
      %p351 = por %p349, %p350
      %p352 = scmp.ne.s32.totalorder %s344, %s347
      %p353 = scmp.eq.s32.totalorder %s36, 0
      %p354 = por %p352, %p353
      %p355 = scmp.ne.s32.totalorder %s344, %s347
      %p356 = scmp.eq.s32.totalorder %s41, 1
      %p357 = por %p355, %p356
      %p358 = scmp.ne.s32.totalorder %s347, %s348
      %p359 = scmp.eq.s32.totalorder %s41, 0
      %p360 = por %p358, %p359
      %p361 = scmp.ne.s32.totalorder %s347, %s348
      %p362 = scmp.eq.s32.totalorder %s42, 1
      %p363 = por %p361, %p362
      %p365 = scmp.ne.s32.totalorder %s348, %s364
      %p366 = scmp.eq.s32.totalorder %s42, 0
      %p367 = por %p365, %p366
      %s368 = ssub.s32 %s44, %s51
      %p369 = scmp.eq.s32.totalorder %s368, 0
      %s371 = sadd.s32 %s370, 1
      %s372 = scalar_select %p369, %s370, %s371
      %p375 = pneg %p369
      %p376 = scmp.eq.s32.totalorder %s36, 1
      %p377 = por %p375, %p376
      %p378 = scmp.ne.s32.totalorder %s370, %s373
      %p379 = scmp.eq.s32.totalorder %s36, 0
      %p380 = por %p378, %p379
      %p381 = scmp.ne.s32.totalorder %s370, %s373
      %p382 = scmp.eq.s32.totalorder %s41, 1
      %p383 = por %p381, %p382
      %p384 = scmp.ne.s32.totalorder %s373, %s374
      %p385 = scmp.eq.s32.totalorder %s41, 0
      %p386 = por %p384, %p385
      %p387 = scmp.ne.s32.totalorder %s373, %s374
      %p388 = scmp.eq.s32.totalorder %s42, 1
      %p389 = por %p387, %p388
      %p391 = scmp.ne.s32.totalorder %s374, %s390
      %p392 = scmp.eq.s32.totalorder %s42, 0
      %p393 = por %p391, %p392
      %s394 = ssub.s32 %s43, %s55
      %p395 = scmp.eq.s32.totalorder %s394, 0
      %s397 = sadd.s32 %s396, 1
      %s398 = scalar_select %p395, %s396, %s397
      %p401 = pneg %p395
      %p402 = scmp.eq.s32.totalorder %s36, 1
      %p403 = por %p401, %p402
      %p404 = scmp.ne.s32.totalorder %s396, %s399
      %p405 = scmp.eq.s32.totalorder %s36, 0
      %p406 = por %p404, %p405
      %p407 = scmp.ne.s32.totalorder %s396, %s399
      %p408 = scmp.eq.s32.totalorder %s41, 1
      %p409 = por %p407, %p408
      %p410 = scmp.ne.s32.totalorder %s399, %s400
      %p411 = scmp.eq.s32.totalorder %s41, 0
      %p412 = por %p410, %p411
      %p413 = scmp.ne.s32.totalorder %s399, %s400
      %p414 = scmp.eq.s32.totalorder %s42, 1
      %p415 = por %p413, %p414
      %p417 = scmp.ne.s32.totalorder %s400, %s416
      %p418 = scmp.eq.s32.totalorder %s42, 0
      %p419 = por %p417, %p418
      %p420 = scmp.le.s32.totalorder 1, %s36
      %p421 = scmp.lt.s32.totalorder %s36, 3
      %p422 = pnand %p420, %p421
      %p423 = pneg %p422
      // Predicated region
      $region9: #{tpu_custom_call.1} parent=5 // pred_check
        _
      $region10: #{tpu_custom_call.1} parent=5 // pred_check_branch
        %425 = sbr.rel (%p422) target = $region12
      $region11: #{tpu_custom_call.1} parent=5 // pred_region
        %s426 = ssub.s32 %s36, 1
        // Predicated region
        $region13: #{tpu_custom_call.1} parent=11 // pred_check
          %p427 = pneg %p74
        $region14: #{tpu_custom_call.1} parent=11 // pred_check_branch
          %429 = sbr.rel (%p427) target = $region16
        $region15: #{tpu_custom_call.1} parent=11 // pred_region
          %s430 = smul.u32 2, %s45
          %432 = vsyncadd [#allocation4], 0
          %s433 = smul.addr %s430, 4
          %s434 = smul.addr %s433, 8
          %s435 = scalar_lea.hbm %s0, %s434
          %s436 = sshll.u32 %s435, 4
          %s437 = int_to_ptr.hbm [resolvable:$true] %s436
          %s438 = sshll.u32 [#allocation3], 4
          %s439 = int_to_ptr.vmem [resolvable:$true] %s438
          %444 = dma.hbm_to_vmem [thread:$0]  %s437, 1024, %s439, [#allocation4], 128, 128, 8
        $region16: #{tpu_custom_call.1} parent=11 // pred_fallthru
          _
      $region12: #{tpu_custom_call.1} parent=5 // pred_fallthru
        _
      %p445 = scmp.lt.s32.totalorder %s36, 2
      // Predicated region
      $region17: #{tpu_custom_call.1} parent=5 // pred_check
        %p446 = pneg %p445
      $region18: #{tpu_custom_call.1} parent=5 // pred_check_branch
        %448 = sbr.rel (%p446) target = $region20
      $region19: #{tpu_custom_call.1} parent=5 // pred_region
        // Predicated region
        $region21: #{tpu_custom_call.1} parent=19 // pred_check
          %p449 = pneg %p94
        $region22: #{tpu_custom_call.1} parent=19 // pred_check_branch
          %451 = sbr.rel (%p449) target = $region24
        $region23: #{tpu_custom_call.1} parent=19 // pred_region
          %s452 = sand.u32 %s36, 1
          %s453 = scalar_lea.sflag [#allocation7], %s452
          %s454 = sand.u32 %s84, 1
          %s455 = scalar_lea.vmem [#allocation6], %s454
          %457 = vsyncadd %s453, 0
          %s458 = scalar_lea.hbm %s1, %s44
          %s460 = sshll.u32 %s458, 4
          %s461 = int_to_ptr.hbm [resolvable:$true] %s460
          %s462 = sshll.u32 %s455, 4
          %s463 = int_to_ptr.vmem [resolvable:$true] %s462
          %465 = dma.hbm_to_vmem [thread:$0]  %s461, 16, %s463, %s453
        $region24: #{tpu_custom_call.1} parent=19 // pred_fallthru
          _
        // Predicated region
        $region25: #{tpu_custom_call.1} parent=19 // pred_check
          %p466 = pneg %p120
        $region26: #{tpu_custom_call.1} parent=19 // pred_check_branch
          %468 = sbr.rel (%p466) target = $region28
        $region27: #{tpu_custom_call.1} parent=19 // pred_region
          %s469 = sand.u32 %s36, 1
          %s470 = scalar_lea.sflag [#allocation7], %s469
          %s471 = sand.u32 %s110, 1
          %s472 = scalar_lea.vmem [#allocation8], %s471
          %474 = vsyncadd %s470, 0
          %s475 = scalar_lea.hbm %s2, %s44
          %s477 = sshll.u32 %s475, 4
          %s478 = int_to_ptr.hbm [resolvable:$true] %s477
          %s479 = sshll.u32 %s472, 4
          %s480 = int_to_ptr.vmem [resolvable:$true] %s479
          %482 = dma.hbm_to_vmem [thread:$0]  %s478, 16, %s480, %s470
        $region28: #{tpu_custom_call.1} parent=19 // pred_fallthru
          _
        // Predicated region
        $region29: #{tpu_custom_call.1} parent=19 // pred_check
          %p483 = pneg %p146
        $region30: #{tpu_custom_call.1} parent=19 // pred_check_branch
          %485 = sbr.rel (%p483) target = $region32
        $region31: #{tpu_custom_call.1} parent=19 // pred_region
          %s486 = sand.u32 %s36, 1
          %s487 = scalar_lea.sflag [#allocation10], %s486
          %s488 = sand.u32 %s136, 1
          %s489 = smul.addr %s488, 192
          %s490 = scalar_lea.vmem [#allocation9], %s489
          %492 = vsyncadd %s487, 0
          %s493 = smul.addr %s44, 48
          %s494 = smul.addr %s493, 4
          %s495 = scalar_lea.hbm %s3, %s494
          %s496 = sshll.u32 %s495, 4
          %s497 = int_to_ptr.hbm [resolvable:$true] %s496
          %s498 = sshll.u32 %s490, 4
          %s499 = int_to_ptr.vmem [resolvable:$true] %s498
          %504 = dma.hbm_to_vmem [thread:$0]  %s497, 3072, %s499, %s487, 192, 192, 12
        $region32: #{tpu_custom_call.1} parent=19 // pred_fallthru
          _
        // Predicated region
        $region33: #{tpu_custom_call.1} parent=19 // pred_check
          %p505 = pneg %p172
        $region34: #{tpu_custom_call.1} parent=19 // pred_check_branch
          %507 = sbr.rel (%p505) target = $region36
        $region35: #{tpu_custom_call.1} parent=19 // pred_region
          %s508 = sand.u32 %s36, 1
          %s509 = scalar_lea.sflag [#allocation10], %s508
          %s510 = sand.u32 %s162, 1
          %s511 = smul.addr %s510, 3
          %s512 = scalar_lea.vmem [#allocation11], %s511
          %514 = vsyncadd %s509, 0
          %s515 = smul.addr %s44, 3
          %s516 = scalar_lea.hbm %s4, %s515
          %s518 = sshll.u32 %s516, 4
          %s519 = int_to_ptr.hbm [resolvable:$true] %s518
          %s520 = sshll.u32 %s512, 4
          %s521 = int_to_ptr.vmem [resolvable:$true] %s520
          %523 = dma.hbm_to_vmem [thread:$0]  %s519, 48, %s521, %s509
        $region36: #{tpu_custom_call.1} parent=19 // pred_fallthru
          _
        // Predicated region
        $region37: #{tpu_custom_call.1} parent=19 // pred_check
          %p524 = pneg %p198
        $region38: #{tpu_custom_call.1} parent=19 // pred_check_branch
          %526 = sbr.rel (%p524) target = $region40
        $region39: #{tpu_custom_call.1} parent=19 // pred_region
          %s527 = sand.u32 %s36, 1
          %s528 = scalar_lea.sflag [#allocation13], %s527
          %s529 = sand.u32 %s188, 1
          %s530 = smul.addr %s529, 64
          %s531 = scalar_lea.vmem [#allocation12], %s530
          %533 = vsyncadd %s528, 0
          %s534 = smul.addr %s44, 16
          %s535 = smul.addr %s534, 4
          %s536 = scalar_lea.hbm %s5, %s535
          %s537 = sshll.u32 %s536, 4
          %s538 = int_to_ptr.hbm [resolvable:$true] %s537
          %s539 = sshll.u32 %s531, 4
          %s540 = int_to_ptr.vmem [resolvable:$true] %s539
          %545 = dma.hbm_to_vmem [thread:$0]  %s538, 1024, %s540, %s528, 64, 64, 4
        $region40: #{tpu_custom_call.1} parent=19 // pred_fallthru
          _
        // Predicated region
        $region41: #{tpu_custom_call.1} parent=19 // pred_check
          %p546 = pneg %p224
        $region42: #{tpu_custom_call.1} parent=19 // pred_check_branch
          %548 = sbr.rel (%p546) target = $region44
        $region43: #{tpu_custom_call.1} parent=19 // pred_region
          %p549 = scmp.lt.s32.totalorder %s44, 1
          %s550 = scalar_select %p549, %s44, 1
          %s551 = scalar_lea.vmem %s6, %s550
        $region44: #{tpu_custom_call.1} parent=19 // pred_fallthru
          _
        // Predicated region
        $region45: #{tpu_custom_call.1} parent=19 // pred_check
          %p552 = pneg %p250
        $region46: #{tpu_custom_call.1} parent=19 // pred_check_branch
          %554 = sbr.rel (%p552) target = $region48
        $region47: #{tpu_custom_call.1} parent=19 // pred_region
          %s555 = sand.u32 %s36, 1
          %s556 = scalar_lea.sflag [#allocation13], %s555
          %s557 = sand.u32 %s240, 1
          %s558 = scalar_lea.vmem [#allocation14], %s557
          %560 = vsyncadd %s556, 0
          %s561 = scalar_lea.hbm %s7, %s44
          %s563 = sshll.u32 %s561, 4
          %s564 = int_to_ptr.hbm [resolvable:$true] %s563
          %s565 = sshll.u32 %s558, 4
          %s566 = int_to_ptr.vmem [resolvable:$true] %s565
          %568 = dma.hbm_to_vmem [thread:$0]  %s564, 16, %s566, %s556
        $region48: #{tpu_custom_call.1} parent=19 // pred_fallthru
          _
        // Predicated region
        $region49: #{tpu_custom_call.1} parent=19 // pred_check
          %p569 = pneg %p276
        $region50: #{tpu_custom_call.1} parent=19 // pred_check_branch
          %571 = sbr.rel (%p569) target = $region52
        $region51: #{tpu_custom_call.1} parent=19 // pred_region
          %s572 = sand.u32 %s36, 1
          %s573 = scalar_lea.sflag [#allocation16], %s572
          %s574 = sand.u32 %s266, 1
          %s575 = scalar_lea.vmem [#allocation15], %s574
          %577 = vsyncadd %s573, 0
          %s578 = scalar_lea.hbm %s8, %s44
          %s580 = sshll.u32 %s578, 4
          %s581 = int_to_ptr.hbm [resolvable:$true] %s580
          %s582 = sshll.u32 %s575, 4
          %s583 = int_to_ptr.vmem [resolvable:$true] %s582
          %585 = dma.hbm_to_vmem [thread:$0]  %s581, 16, %s583, %s573
        $region52: #{tpu_custom_call.1} parent=19 // pred_fallthru
          _
        // Predicated region
        $region53: #{tpu_custom_call.1} parent=19 // pred_check
          %p586 = pneg %p302
        $region54: #{tpu_custom_call.1} parent=19 // pred_check_branch
          %588 = sbr.rel (%p586) target = $region56
        $region55: #{tpu_custom_call.1} parent=19 // pred_region
          %s589 = sand.u32 %s36, 1
          %s590 = scalar_lea.sflag [#allocation16], %s589
          %s591 = sand.u32 %s292, 1
          %s592 = smul.addr %s591, 128
          %s593 = scalar_lea.vmem [#allocation17], %s592
          %595 = vsyncadd %s590, 0
          %s596 = smul.addr %s44, 32
          %s597 = smul.addr %s596, 4
          %s598 = scalar_lea.hbm %s9, %s597
          %s599 = sshll.u32 %s598, 4
          %s600 = int_to_ptr.hbm [resolvable:$true] %s599
          %s601 = sshll.u32 %s593, 4
          %s602 = int_to_ptr.vmem [resolvable:$true] %s601
          %607 = dma.hbm_to_vmem [thread:$0]  %s600, 2048, %s602, %s590, 128, 128, 8
        $region56: #{tpu_custom_call.1} parent=19 // pred_fallthru
          _
        // Predicated region
        $region57: #{tpu_custom_call.1} parent=19 // pred_check
          %p608 = pneg %p328
        $region58: #{tpu_custom_call.1} parent=19 // pred_check_branch
          %610 = sbr.rel (%p608) target = $region60
        $region59: #{tpu_custom_call.1} parent=19 // pred_region
          %p611 = scmp.lt.s32.totalorder %s44, 1
          %s612 = scalar_select %p611, %s44, 1
          %s613 = smul.addr %s612, 2
          %s614 = scalar_lea.vmem %s10, %s613
        $region60: #{tpu_custom_call.1} parent=19 // pred_fallthru
          _
        // Predicated region
        $region61: #{tpu_custom_call.1} parent=19 // pred_check
          %p615 = pneg %p354
        $region62: #{tpu_custom_call.1} parent=19 // pred_check_branch
          %617 = sbr.rel (%p615) target = $region64
        $region63: #{tpu_custom_call.1} parent=19 // pred_region
          %s618 = sand.u32 %s344, 1
          %s619 = scalar_lea.sflag [#allocation19], %s618
          %s620 = sand.u32 %s344, 1
          %s621 = smul.addr %s620, 128
          %s622 = scalar_lea.vmem [#allocation18], %s621
          %624 = vsyncadd %s619, 0
          %s625 = smul.addr %s44, 32
          %s626 = smul.addr %s625, 4
          %s627 = scalar_lea.hbm %s11, %s626
          %s628 = sshll.u32 %s627, 4
          %s629 = int_to_ptr.hbm [resolvable:$true] %s628
          %s630 = sshll.u32 %s622, 4
          %s631 = int_to_ptr.vmem [resolvable:$true] %s630
          %636 = dma.hbm_to_vmem [thread:$0]  %s629, 2048, %s631, %s619, 64, 64, 4
        $region64: #{tpu_custom_call.1} parent=19 // pred_fallthru
          _
        // Predicated region
        $region65: #{tpu_custom_call.1} parent=19 // pred_check
          %p637 = pneg %p380
        $region66: #{tpu_custom_call.1} parent=19 // pred_check_branch
          %639 = sbr.rel (%p637) target = $region68
        $region67: #{tpu_custom_call.1} parent=19 // pred_region
          %p640 = scmp.lt.s32.totalorder %s44, 1
          %s641 = scalar_select %p640, %s44, 1
          %s642 = scalar_lea.vmem %s12, %s641
        $region68: #{tpu_custom_call.1} parent=19 // pred_fallthru
          _
      $region20: #{tpu_custom_call.1} parent=5 // pred_fallthru
        _
      %p643 = scmp.le.s32.totalorder 1, %s36
      %p644 = scmp.lt.s32.totalorder %s36, 3
      %p645 = pnand %p643, %p644
      %p646 = pneg %p645
      // Predicated region
      $region69: #{tpu_custom_call.1} parent=5 // pred_check
        _
      $region70: #{tpu_custom_call.1} parent=5 // pred_check_branch
        %648 = sbr.rel (%p645) target = $region72
      $region71: #{tpu_custom_call.1} parent=5 // pred_region
        %s649 = ssub.s32 %s36, 1
        // Predicated region
        $region73: #{tpu_custom_call.1} parent=71 // pred_check
          %p650 = pneg %p74
        $region74: #{tpu_custom_call.1} parent=71 // pred_check_branch
          %652 = sbr.rel (%p650) target = $region76
        $region75: #{tpu_custom_call.1} parent=71 // pred_region
          %654 = dma.done [#allocation4], 1024
        $region76: #{tpu_custom_call.1} parent=71 // pred_fallthru
          _
        %s655 = sand.u32 %s41, 1
        %s656 = scalar_lea.sflag [#allocation7], %s655
        %s657 = sand.u32 %s87, 1
        %s658 = scalar_lea.vmem [#allocation6], %s657
        // Predicated region
        $region77: #{tpu_custom_call.1} parent=71 // pred_check
          %p659 = pneg %p100
        $region78: #{tpu_custom_call.1} parent=71 // pred_check_branch
          %661 = sbr.rel (%p659) target = $region80
        $region79: #{tpu_custom_call.1} parent=71 // pred_region
          %663 = dma.done %s656, 16
        $region80: #{tpu_custom_call.1} parent=71 // pred_fallthru
          _
        %s664 = sand.u32 %s41, 1
        %s665 = scalar_lea.sflag [#allocation7], %s664
        %s666 = sand.u32 %s113, 1
        %s667 = scalar_lea.vmem [#allocation8], %s666
        // Predicated region
        $region81: #{tpu_custom_call.1} parent=71 // pred_check
          %p668 = pneg %p126
        $region82: #{tpu_custom_call.1} parent=71 // pred_check_branch
          %670 = sbr.rel (%p668) target = $region84
        $region83: #{tpu_custom_call.1} parent=71 // pred_region
          %672 = dma.done %s665, 16
        $region84: #{tpu_custom_call.1} parent=71 // pred_fallthru
          _
        %s673 = sand.u32 %s41, 1
        %s674 = scalar_lea.sflag [#allocation10], %s673
        %s675 = sand.u32 %s139, 1
        %s676 = smul.addr %s675, 192
        %s677 = scalar_lea.vmem [#allocation9], %s676
        // Predicated region
        $region85: #{tpu_custom_call.1} parent=71 // pred_check
          %p678 = pneg %p152
        $region86: #{tpu_custom_call.1} parent=71 // pred_check_branch
          %680 = sbr.rel (%p678) target = $region88
        $region87: #{tpu_custom_call.1} parent=71 // pred_region
          %682 = dma.done %s674, 3072
        $region88: #{tpu_custom_call.1} parent=71 // pred_fallthru
          _
        %s683 = sand.u32 %s41, 1
        %s684 = scalar_lea.sflag [#allocation10], %s683
        %s685 = sand.u32 %s165, 1
        %s686 = smul.addr %s685, 3
        %s687 = scalar_lea.vmem [#allocation11], %s686
        // Predicated region
        $region89: #{tpu_custom_call.1} parent=71 // pred_check
          %p688 = pneg %p178
        $region90: #{tpu_custom_call.1} parent=71 // pred_check_branch
          %690 = sbr.rel (%p688) target = $region92
        $region91: #{tpu_custom_call.1} parent=71 // pred_region
          %692 = dma.done %s684, 48
        $region92: #{tpu_custom_call.1} parent=71 // pred_fallthru
          _
        %s693 = sand.u32 %s41, 1
        %s694 = scalar_lea.sflag [#allocation13], %s693
        %s695 = sand.u32 %s191, 1
        %s696 = smul.addr %s695, 64
        %s697 = scalar_lea.vmem [#allocation12], %s696
        // Predicated region
        $region93: #{tpu_custom_call.1} parent=71 // pred_check
          %p698 = pneg %p204
        $region94: #{tpu_custom_call.1} parent=71 // pred_check_branch
          %700 = sbr.rel (%p698) target = $region96
        $region95: #{tpu_custom_call.1} parent=71 // pred_region
          %702 = dma.done %s694, 1024
        $region96: #{tpu_custom_call.1} parent=71 // pred_fallthru
          _
        %s703 = sand.u32 %s41, 1
        %s704 = scalar_lea.sflag [#allocation13], %s703
        %s705 = sand.u32 %s243, 1
        %s706 = scalar_lea.vmem [#allocation14], %s705
        // Predicated region
        $region97: #{tpu_custom_call.1} parent=71 // pred_check
          %p707 = pneg %p256
        $region98: #{tpu_custom_call.1} parent=71 // pred_check_branch
          %709 = sbr.rel (%p707) target = $region100
        $region99: #{tpu_custom_call.1} parent=71 // pred_region
          %711 = dma.done %s704, 16
        $region100: #{tpu_custom_call.1} parent=71 // pred_fallthru
          _
        %s712 = sand.u32 %s41, 1
        %s713 = scalar_lea.sflag [#allocation16], %s712
        %s714 = sand.u32 %s269, 1
        %s715 = scalar_lea.vmem [#allocation15], %s714
        // Predicated region
        $region101: #{tpu_custom_call.1} parent=71 // pred_check
          %p716 = pneg %p282
        $region102: #{tpu_custom_call.1} parent=71 // pred_check_branch
          %718 = sbr.rel (%p716) target = $region104
        $region103: #{tpu_custom_call.1} parent=71 // pred_region
          %720 = dma.done %s713, 16
        $region104: #{tpu_custom_call.1} parent=71 // pred_fallthru
          _
        %s721 = sand.u32 %s41, 1
        %s722 = scalar_lea.sflag [#allocation16], %s721
        %s723 = sand.u32 %s295, 1
        %s724 = smul.addr %s723, 128
        %s725 = scalar_lea.vmem [#allocation17], %s724
        // Predicated region
        $region105: #{tpu_custom_call.1} parent=71 // pred_check
          %p726 = pneg %p308
        $region106: #{tpu_custom_call.1} parent=71 // pred_check_branch
          %728 = sbr.rel (%p726) target = $region108
        $region107: #{tpu_custom_call.1} parent=71 // pred_region
          %730 = dma.done %s722, 2048
        $region108: #{tpu_custom_call.1} parent=71 // pred_fallthru
          _
        %s731 = sand.u32 %s347, 1
        %s732 = scalar_lea.sflag [#allocation19], %s731
        %s733 = sand.u32 %s347, 1
        %s734 = smul.addr %s733, 128
        %s735 = scalar_lea.vmem [#allocation18], %s734
        // Predicated region
        $region109: #{tpu_custom_call.1} parent=71 // pred_check
          %p736 = pneg %p360
        $region110: #{tpu_custom_call.1} parent=71 // pred_check_branch
          %738 = sbr.rel (%p736) target = $region112
        $region111: #{tpu_custom_call.1} parent=71 // pred_region
          %740 = dma.done %s732, 2048
        $region112: #{tpu_custom_call.1} parent=71 // pred_fallthru
          _
        %p741 = pneg %p74
        %p742 = pneg %p71
        %s743 = sand.u32 %s41, 1
        %s744 = scalar_lea.sflag [#allocation7], %s743
        %s745 = sand.u32 %s87, 1
        %s746 = scalar_lea.vmem [#allocation6], %s745
        %p747 = pneg %p100
        %p748 = pneg %p97
        %s749 = sand.u32 %s41, 1
        %s750 = scalar_lea.sflag [#allocation7], %s749
        %s751 = sand.u32 %s113, 1
        %s752 = scalar_lea.vmem [#allocation8], %s751
        %p753 = pneg %p126
        %p754 = pneg %p123
        %s755 = sand.u32 %s41, 1
        %s756 = scalar_lea.sflag [#allocation10], %s755
        %s757 = sand.u32 %s139, 1
        %s758 = smul.addr %s757, 192
        %s759 = scalar_lea.vmem [#allocation9], %s758
        %p760 = pneg %p152
        %p761 = pneg %p149
        %s762 = sand.u32 %s41, 1
        %s763 = scalar_lea.sflag [#allocation10], %s762
        %s764 = sand.u32 %s165, 1
        %s765 = smul.addr %s764, 3
        %s766 = scalar_lea.vmem [#allocation11], %s765
        %p767 = pneg %p178
        %p768 = pneg %p175
        %s769 = sand.u32 %s41, 1
        %s770 = scalar_lea.sflag [#allocation13], %s769
        %s771 = sand.u32 %s191, 1
        %s772 = smul.addr %s771, 64
        %s773 = scalar_lea.vmem [#allocation12], %s772
        %p774 = pneg %p204
        %p775 = pneg %p201
        %p776 = scmp.lt.s32.totalorder %s46, 1
        %s777 = scalar_select %p776, %s46, 1
        %s778 = scalar_lea.vmem %s6, %s777
        %p779 = pneg %p230
        %p780 = pneg %p227
        %s781 = sand.u32 %s41, 1
        %s782 = scalar_lea.sflag [#allocation13], %s781
        %s783 = sand.u32 %s243, 1
        %s784 = scalar_lea.vmem [#allocation14], %s783
        %p785 = pneg %p256
        %p786 = pneg %p253
        %s787 = sand.u32 %s41, 1
        %s788 = scalar_lea.sflag [#allocation16], %s787
        %s789 = sand.u32 %s269, 1
        %s790 = scalar_lea.vmem [#allocation15], %s789
        %p791 = pneg %p282
        %p792 = pneg %p279
        %s793 = sand.u32 %s41, 1
        %s794 = scalar_lea.sflag [#allocation16], %s793
        %s795 = sand.u32 %s295, 1
        %s796 = smul.addr %s795, 128
        %s797 = scalar_lea.vmem [#allocation17], %s796
        %p798 = pneg %p308
        %p799 = pneg %p305
        %p800 = scmp.lt.s32.totalorder %s46, 1
        %s801 = scalar_select %p800, %s46, 1
        %s802 = smul.addr %s801, 2
        %s803 = scalar_lea.vmem %s10, %s802
        %p804 = pneg %p334
        %p805 = pneg %p331
        %s806 = sand.u32 %s347, 1
        %s807 = scalar_lea.sflag [#allocation19], %s806
        %s808 = sand.u32 %s347, 1
        %s809 = smul.addr %s808, 128
        %s810 = scalar_lea.vmem [#allocation18], %s809
        %p811 = pneg %p360
        %p812 = pneg %p357
        %p813 = scmp.lt.s32.totalorder %s46, 1
        %s814 = scalar_select %p813, %s46, 1
        %s815 = scalar_lea.vmem %s12, %s814
        %p816 = pneg %p386
        %p817 = pneg %p383
        %p818 = pneg %p412
        %p819 = pneg %p409
        %s820 = smul.u32 2, %s45
        %p821 = scmp.lt.s32.totalorder %s46, 1
        %s822 = scalar_select %p821, %s46, 1
        %s823 = scalar_lea.vmem %s6, %s822
        %p824 = scmp.lt.s32.totalorder %s46, 1
        %s825 = scalar_select %p824, %s46, 1
        %s826 = smul.addr %s825, 2
        %s827 = scalar_lea.vmem %s10, %s826
        %p828 = scmp.lt.s32.totalorder %s46, 1
        %s829 = scalar_select %p828, %s46, 1
        %s830 = scalar_lea.vmem %s12, %s829
        %s831 = smul.u32 2, %s45
        %p833 = scmp.eq.s32.totalorder %s46, 0
        // Predicated region
        $region113: #{tpu_custom_call.1} parent=71 // pred_check
          %p834 = pneg %p833
        $region114: #{tpu_custom_call.1} parent=71 // pred_check_branch
          %836 = sbr.rel (%p834) target = $region116
        $region115: #{tpu_custom_call.1} parent=71 // pred_region
          %v837 = vld [vmem:[#allocation3] sm:$0xff]
          %v838 = vld [vmem:[#allocation3 + $0x8] sm:$0xff]
          %v839 = vld [vmem:[#allocation3 + $0x10] sm:$0xff]
          %v840 = vld [vmem:[#allocation3 + $0x18] sm:$0xff]
          %v841 = vld [vmem:[#allocation3 + $0x20] sm:$0xff]
          %v842 = vld [vmem:[#allocation3 + $0x28] sm:$0xff]
          %v843 = vld [vmem:[#allocation3 + $0x30] sm:$0xff]
          %v844 = vld [vmem:[#allocation3 + $0x38] sm:$0xff]
          %845 = vst [vmem:[#allocation20] sm:$0xff] %v837
          %846 = vst [vmem:[#allocation20 + $0x8] sm:$0xff] %v838
          %847 = vst [vmem:[#allocation20 + $0x10] sm:$0xff] %v839
          %848 = vst [vmem:[#allocation20 + $0x18] sm:$0xff] %v840
          %849 = vst [vmem:[#allocation20 + $0x20] sm:$0xff] %v841
          %850 = vst [vmem:[#allocation20 + $0x28] sm:$0xff] %v842
          %851 = vst [vmem:[#allocation20 + $0x30] sm:$0xff] %v843
          %852 = vst [vmem:[#allocation20 + $0x38] sm:$0xff] %v844
        $region116: #{tpu_custom_call.1} parent=71 // pred_fallthru
          _
        %v853 = vld [vmem:[#allocation20] sm:$0xff]
        %v854 = vld [vmem:[#allocation20 + $0x8] sm:$0xff]
        %v855 = vld [vmem:[#allocation20 + $0x10] sm:$0xff]
        %v856 = vld [vmem:[#allocation20 + $0x18] sm:$0xff]
        %v857 = vld [vmem:[#allocation20 + $0x20] sm:$0xff]
        %v858 = vld [vmem:[#allocation20 + $0x28] sm:$0xff]
        %v859 = vld [vmem:[#allocation20 + $0x30] sm:$0xff]
        %v860 = vld [vmem:[#allocation20 + $0x38] sm:$0xff]
        %v861 = vld [vmem:[%s658] sm:$0x1]
        %v862 = vld [vmem:[%s667] sm:$0x1]
        %863 = vadd.xlane.f32.xlu0 %v853
        %v864 = vpop.xlane.xlu0 %863
        %865 = vadd.xlane.f32.xlu0 %v854
        %v866 = vpop.xlane.xlu0 %865
        %867 = vadd.xlane.f32.xlu0 %v855
        %v868 = vpop.xlane.xlu0 %867
        %869 = vadd.xlane.f32.xlu0 %v856
        %v870 = vpop.xlane.xlu0 %869
        %871 = vadd.xlane.f32.xlu0 %v857
        %v872 = vpop.xlane.xlu0 %871
        %873 = vadd.xlane.f32.xlu0 %v858
        %v874 = vpop.xlane.xlu0 %873
        %875 = vadd.xlane.f32.xlu0 %v859
        %v876 = vpop.xlane.xlu0 %875
        %877 = vadd.xlane.f32.xlu0 %v860
        %v878 = vpop.xlane.xlu0 %877
        %v879 = vrcp.pop 128.0
        %v880 = vmul.f32 128.0, %v879
        %v881 = vsub.f32 1.0, %v880
        %v882 = vmul.f32 %v879, %v881
        %v883 = vadd.f32 %v879, %v882
        %vm884 = vweird.f32 %v879
        %v885 = vsel %vm884, %v879, %v883
        %v886 = vmul.f32 %v864, %v885
        %v887 = vmul.f32 %v866, %v885
        %v888 = vmul.f32 %v868, %v885
        %v889 = vmul.f32 %v870, %v885
        %v890 = vmul.f32 %v872, %v885
        %v891 = vmul.f32 %v874, %v885
        %v892 = vmul.f32 %v876, %v885
        %v893 = vmul.f32 %v878, %v885
        %v894 = vsub.f32 %v853, %v886
        %v895 = vsub.f32 %v854, %v887
        %v896 = vsub.f32 %v855, %v888
        %v897 = vsub.f32 %v856, %v889
        %v898 = vsub.f32 %v857, %v890
        %v899 = vsub.f32 %v858, %v891
        %v900 = vsub.f32 %v859, %v892
        %v901 = vsub.f32 %v860, %v893
        %v902 = vmul.f32 %v894, %v894
        %v903 = vmul.f32 %v895, %v895
        %v904 = vmul.f32 %v896, %v896
        %v905 = vmul.f32 %v897, %v897
        %v906 = vmul.f32 %v898, %v898
        %v907 = vmul.f32 %v899, %v899
        %v908 = vmul.f32 %v900, %v900
        %v909 = vmul.f32 %v901, %v901
        %910 = vadd.xlane.f32.xlu0 %v902
        %v911 = vpop.xlane.xlu0 %910
        %912 = vadd.xlane.f32.xlu0 %v903
        %v913 = vpop.xlane.xlu0 %912
        %914 = vadd.xlane.f32.xlu0 %v904
        %v915 = vpop.xlane.xlu0 %914
        %916 = vadd.xlane.f32.xlu0 %v905
        %v917 = vpop.xlane.xlu0 %916
        %918 = vadd.xlane.f32.xlu0 %v906
        %v919 = vpop.xlane.xlu0 %918
        %920 = vadd.xlane.f32.xlu0 %v907
        %v921 = vpop.xlane.xlu0 %920
        %922 = vadd.xlane.f32.xlu0 %v908
        %v923 = vpop.xlane.xlu0 %922
        %924 = vadd.xlane.f32.xlu0 %v909
        %v925 = vpop.xlane.xlu0 %924
        %v926 = vmul.f32 %v911, %v885
        %v927 = vmul.f32 %v913, %v885
        %v928 = vmul.f32 %v915, %v885
        %v929 = vmul.f32 %v917, %v885
        %v930 = vmul.f32 %v919, %v885
        %v931 = vmul.f32 %v921, %v885
        %v932 = vmul.f32 %v923, %v885
        %v933 = vmul.f32 %v925, %v885
        %v934 = vadd.f32 %v926, 1e-05
        %v935 = vadd.f32 %v927, 1e-05
        %v936 = vadd.f32 %v928, 1e-05
        %v937 = vadd.f32 %v929, 1e-05
        %v938 = vadd.f32 %v930, 1e-05
        %v939 = vadd.f32 %v931, 1e-05
        %v940 = vadd.f32 %v932, 1e-05
        %v941 = vadd.f32 %v933, 1e-05
        %v942 = vrsqrt.pop %v934
        %v943 = vmul.f32 %v942, %v934
        %v944 = vmul.f32 %v943, %v942
        %v945 = vmul.f32 0.5, %v944
        %v946 = vsub.f32 1.5, %v945
        %v947 = vmul.f32 %v942, %v946
        %vm948 = vweird.f32 %v934
        %vm949 = vweird.f32 %v942
        %vm950 = vmor %vm948, %vm949
        %v951 = vsel %vm950, %v942, %v947
        %v952 = vrsqrt.pop %v935
        %v953 = vmul.f32 %v952, %v935
        %v954 = vmul.f32 %v953, %v952
        %v955 = vmul.f32 0.5, %v954
        %v956 = vsub.f32 1.5, %v955
        %v957 = vmul.f32 %v952, %v956
        %vm958 = vweird.f32 %v935
        %vm959 = vweird.f32 %v952
        %vm960 = vmor %vm958, %vm959
        %v961 = vsel %vm960, %v952, %v957
        %v962 = vrsqrt.pop %v936
        %v963 = vmul.f32 %v962, %v936
        %v964 = vmul.f32 %v963, %v962
        %v965 = vmul.f32 0.5, %v964
        %v966 = vsub.f32 1.5, %v965
        %v967 = vmul.f32 %v962, %v966
        %vm968 = vweird.f32 %v936
        %vm969 = vweird.f32 %v962
        %vm970 = vmor %vm968, %vm969
        %v971 = vsel %vm970, %v962, %v967
        %v972 = vrsqrt.pop %v937
        %v973 = vmul.f32 %v972, %v937
        %v974 = vmul.f32 %v973, %v972
        %v975 = vmul.f32 0.5, %v974
        %v976 = vsub.f32 1.5, %v975
        %v977 = vmul.f32 %v972, %v976
        %vm978 = vweird.f32 %v937
        %vm979 = vweird.f32 %v972
        %vm980 = vmor %vm978, %vm979
        %v981 = vsel %vm980, %v972, %v977
        %v982 = vrsqrt.pop %v938
        %v983 = vmul.f32 %v982, %v938
        %v984 = vmul.f32 %v983, %v982
        %v985 = vmul.f32 0.5, %v984
        %v986 = vsub.f32 1.5, %v985
        %v987 = vmul.f32 %v982, %v986
        %vm988 = vweird.f32 %v938
        %vm989 = vweird.f32 %v982
        %vm990 = vmor %vm988, %vm989
        %v991 = vsel %vm990, %v982, %v987
        %v992 = vrsqrt.pop %v939
        %v993 = vmul.f32 %v992, %v939
        %v994 = vmul.f32 %v993, %v992
        %v995 = vmul.f32 0.5, %v994
        %v996 = vsub.f32 1.5, %v995
        %v997 = vmul.f32 %v992, %v996
        %vm998 = vweird.f32 %v939
        %vm999 = vweird.f32 %v992
        %vm1000 = vmor %vm998, %vm999
        %v1001 = vsel %vm1000, %v992, %v997
        %v1002 = vrsqrt.pop %v940
        %v1003 = vmul.f32 %v1002, %v940
        %v1004 = vmul.f32 %v1003, %v1002
        %v1005 = vmul.f32 0.5, %v1004
        %v1006 = vsub.f32 1.5, %v1005
        %v1007 = vmul.f32 %v1002, %v1006
        %vm1008 = vweird.f32 %v940
        %vm1009 = vweird.f32 %v1002
        %vm1010 = vmor %vm1008, %vm1009
        %v1011 = vsel %vm1010, %v1002, %v1007
        %v1012 = vrsqrt.pop %v941
        %v1013 = vmul.f32 %v1012, %v941
        %v1014 = vmul.f32 %v1013, %v1012
        %v1015 = vmul.f32 0.5, %v1014
        %v1016 = vsub.f32 1.5, %v1015
        %v1017 = vmul.f32 %v1012, %v1016
        %vm1018 = vweird.f32 %v941
        %vm1019 = vweird.f32 %v1012
        %vm1020 = vmor %vm1018, %vm1019
        %v1021 = vsel %vm1020, %v1012, %v1017
        %v1022 = vmul.f32 %v894, %v951
        %v1023 = vmul.f32 %v895, %v961
        %v1024 = vmul.f32 %v896, %v971
        %v1025 = vmul.f32 %v897, %v981
        %v1026 = vmul.f32 %v898, %v991
        %v1027 = vmul.f32 %v899, %v1001
        %v1028 = vmul.f32 %v900, %v1011
        %v1029 = vmul.f32 %v901, %v1021
        %v1031 = vperm.slane %v861, 0
        %v1033 = vmul.f32 %v1022, %v1031
        %v1034 = vmul.f32 %v1023, %v1031
        %v1035 = vmul.f32 %v1024, %v1031
        %v1036 = vmul.f32 %v1025, %v1031
        %v1037 = vmul.f32 %v1026, %v1031
        %v1038 = vmul.f32 %v1027, %v1031
        %v1039 = vmul.f32 %v1028, %v1031
        %v1040 = vmul.f32 %v1029, %v1031
        %v1042 = vperm.slane %v862, 0
        %v1044 = vadd.f32 %v1033, %v1042
        %v1045 = vadd.f32 %v1034, %v1042
        %v1046 = vadd.f32 %v1035, %v1042
        %v1047 = vadd.f32 %v1036, %v1042
        %v1048 = vadd.f32 %v1037, %v1042
        %v1049 = vadd.f32 %v1038, %v1042
        %v1050 = vadd.f32 %v1039, %v1042
        %v1051 = vadd.f32 %v1040, %v1042
        %v1052 = vpack.c.bf16 %v1045, %v1044
        %v1053 = vpack.c.bf16 %v1047, %v1046
        %v1054 = vpack.c.bf16 %v1049, %v1048
        %v1055 = vpack.c.bf16 %v1051, %v1050
        %v1056 = vld [vmem:[%s677] sm:$0xff]
        %v1057 = vld [vmem:[%s677 + $0x8] sm:$0xf]
        %v1058 = vld [vmem:[%s677 + $0xc] sm:$0xff]
        %v1059 = vld [vmem:[%s677 + $0x14] sm:$0xf]
        %v1060 = vld [vmem:[%s677 + $0x18] sm:$0xff]
        %v1061 = vld [vmem:[%s677 + $0x20] sm:$0xf]
        %v1062 = vld [vmem:[%s677 + $0x24] sm:$0xff]
        %v1063 = vld [vmem:[%s677 + $0x2c] sm:$0xf]
        %v1064 = vld [vmem:[%s677 + $0x30] sm:$0xff]
        %v1065 = vld [vmem:[%s677 + $0x38] sm:$0xf]
        %v1066 = vld [vmem:[%s677 + $0x3c] sm:$0xff]
        %v1067 = vld [vmem:[%s677 + $0x44] sm:$0xf]
        %v1068 = vld [vmem:[%s677 + $0x48] sm:$0xff]
        %v1069 = vld [vmem:[%s677 + $0x50] sm:$0xf]
        %v1070 = vld [vmem:[%s677 + $0x54] sm:$0xff]
        %v1071 = vld [vmem:[%s677 + $0x5c] sm:$0xf]
        %v1072 = vld [vmem:[%s677 + $0x60] sm:$0xff]
        %v1073 = vld [vmem:[%s677 + $0x68] sm:$0xf]
        %v1074 = vld [vmem:[%s677 + $0x6c] sm:$0xff]
        %v1075 = vld [vmem:[%s677 + $0x74] sm:$0xf]
        %v1076 = vld [vmem:[%s677 + $0x78] sm:$0xff]
        %v1077 = vld [vmem:[%s677 + $0x80] sm:$0xf]
        %v1078 = vld [vmem:[%s677 + $0x84] sm:$0xff]
        %v1079 = vld [vmem:[%s677 + $0x8c] sm:$0xf]
        %v1080 = vld [vmem:[%s677 + $0x90] sm:$0xff]
        %v1081 = vld [vmem:[%s677 + $0x98] sm:$0xf]
        %v1082 = vld [vmem:[%s677 + $0x9c] sm:$0xff]
        %v1083 = vld [vmem:[%s677 + $0xa4] sm:$0xf]
        %v1084 = vld [vmem:[%s677 + $0xa8] sm:$0xff]
        %v1085 = vld [vmem:[%s677 + $0xb0] sm:$0xf]
        %v1086 = vld [vmem:[%s677 + $0xb4] sm:$0xff]
        %v1087 = vld [vmem:[%s677 + $0xbc] sm:$0xf]
        %v1088 = vld [vmem:[%s687] sm:$0x7]
        %v1090 = vperm.slane %v1088, 0
        %v1091 = vperm.slane %v1088, 1
        %v1092 = vperm.slane %v1088, 2
        %v1128 = vunpack.c.l.b16 %v1056
        %v1129 = vunpack.c.h.b16 %v1056
        %v1130 = vunpack.c.l.b16 %v1057
        %v1131 = vunpack.c.l.b16 %v1058
        %v1132 = vunpack.c.h.b16 %v1058
        %v1133 = vunpack.c.l.b16 %v1059
        %v1134 = vunpack.c.l.b16 %v1060
        %v1135 = vunpack.c.h.b16 %v1060
        %v1136 = vunpack.c.l.b16 %v1061
        %v1137 = vunpack.c.l.b16 %v1062
        %v1138 = vunpack.c.h.b16 %v1062
        %v1139 = vunpack.c.l.b16 %v1063
        %v1140 = vunpack.c.l.b16 %v1064
        %v1141 = vunpack.c.h.b16 %v1064
        %v1142 = vunpack.c.l.b16 %v1065
        %v1143 = vunpack.c.l.b16 %v1066
        %v1144 = vunpack.c.h.b16 %v1066
        %v1145 = vunpack.c.l.b16 %v1067
        %v1146 = vunpack.c.l.b16 %v1068
        %v1147 = vunpack.c.h.b16 %v1068
        %v1148 = vunpack.c.l.b16 %v1069
        %v1149 = vunpack.c.l.b16 %v1070
        %v1150 = vunpack.c.h.b16 %v1070
        %v1151 = vunpack.c.l.b16 %v1071
        %v1152 = vunpack.c.l.b16 %v1072
        %v1153 = vunpack.c.h.b16 %v1072
        %v1154 = vunpack.c.l.b16 %v1073
        %v1155 = vunpack.c.l.b16 %v1074
        %v1156 = vunpack.c.h.b16 %v1074
        %v1157 = vunpack.c.l.b16 %v1075
        %v1158 = vunpack.c.l.b16 %v1076
        %v1159 = vunpack.c.h.b16 %v1076
        %v1160 = vunpack.c.l.b16 %v1077
        %v1161 = vunpack.c.l.b16 %v1078
        %v1162 = vunpack.c.h.b16 %v1078
        %v1163 = vunpack.c.l.b16 %v1079
        %v1164 = vunpack.c.l.b16 %v1080
        %v1165 = vunpack.c.h.b16 %v1080
        %v1166 = vunpack.c.l.b16 %v1081
        %v1167 = vunpack.c.l.b16 %v1082
        %v1168 = vunpack.c.h.b16 %v1082
        %v1169 = vunpack.c.l.b16 %v1083
        %v1170 = vunpack.c.l.b16 %v1084
        %v1171 = vunpack.c.h.b16 %v1084
        %v1172 = vunpack.c.l.b16 %v1085
        %v1173 = vunpack.c.l.b16 %v1086
        %v1174 = vunpack.c.h.b16 %v1086
        %v1175 = vunpack.c.l.b16 %v1087
        %v1176 = vpack.c.b16 %v1131, %v1128
        %v1177 = vpack.c.b16 %v1132, %v1129
        %v1178 = vpack.c.b16 %v1133, %v1130
        %v1179 = vpack.c.b16 %v1137, %v1134
        %v1180 = vpack.c.b16 %v1138, %v1135
        %v1181 = vpack.c.b16 %v1139, %v1136
        %v1182 = vpack.c.b16 %v1143, %v1140
        %v1183 = vpack.c.b16 %v1144, %v1141
        %v1184 = vpack.c.b16 %v1145, %v1142
        %v1185 = vpack.c.b16 %v1149, %v1146
        %v1186 = vpack.c.b16 %v1150, %v1147
        %v1187 = vpack.c.b16 %v1151, %v1148
        %v1188 = vpack.c.b16 %v1155, %v1152
        %v1189 = vpack.c.b16 %v1156, %v1153
        %v1190 = vpack.c.b16 %v1157, %v1154
        %v1191 = vpack.c.b16 %v1161, %v1158
        %v1192 = vpack.c.b16 %v1162, %v1159
        %v1193 = vpack.c.b16 %v1163, %v1160
        %v1194 = vpack.c.b16 %v1167, %v1164
        %v1195 = vpack.c.b16 %v1168, %v1165
        %v1196 = vpack.c.b16 %v1169, %v1166
        %v1197 = vpack.c.b16 %v1173, %v1170
        %v1198 = vpack.c.b16 %v1174, %v1171
        %v1199 = vpack.c.b16 %v1175, %v1172
        %1224 = vmatpush.bf16.msra.mxu0 %v1197
        %1225 = vmatpush.bf16.msra.mxu0 %v1194
        %1226 = vmatpush.bf16.msra.mxu0 %v1191
        %1227 = vmatpush.bf16.msra.mxu0 %v1188
        %1228 = vmatpush.bf16.msra.mxu0 %v1185
        %1229 = vmatpush.bf16.msra.mxu0 %v1182
        %1230 = vmatpush.bf16.msra.mxu0 %v1179
        %1231 = vmatpush.bf16.msra.mxu0 %v1176
        %1232 = vmatmul.bf16.gmra.mxu0 %v1052
        %v1233 = vpop.f32.mrf.mxu0
        %v1234 = vadd.f32 %v1090, %v1233
        %v1235 = vpop.f32.mrf.mxu0
        %v1236 = vadd.f32 %v1090, %v1235
        %1237 = vmatmul.bf16.gmra.mxu0 %v1053
        %v1238 = vpop.f32.mrf.mxu0
        %v1239 = vadd.f32 %v1090, %v1238
        %v1240 = vpop.f32.mrf.mxu0
        %v1241 = vadd.f32 %v1090, %v1240
        %1242 = vmatmul.bf16.gmra.mxu0 %v1054
        %v1243 = vpop.f32.mrf.mxu0
        %v1244 = vadd.f32 %v1090, %v1243
        %v1245 = vpop.f32.mrf.mxu0
        %v1246 = vadd.f32 %v1090, %v1245
        %1247 = vmatmul.bf16.gmra.mxu0 %v1055
        %v1248 = vpop.f32.mrf.mxu0
        %v1249 = vadd.f32 %v1090, %v1248
        %v1250 = vpop.f32.mrf.mxu0
        %v1251 = vadd.f32 %v1090, %v1250
        %1252 = vdwg.mxu0
        %1253 = vmatpush.bf16.msra.mxu0 %v1198
        %1254 = vmatpush.bf16.msra.mxu0 %v1195
        %1255 = vmatpush.bf16.msra.mxu0 %v1192
        %1256 = vmatpush.bf16.msra.mxu0 %v1189
        %1257 = vmatpush.bf16.msra.mxu0 %v1186
        %1258 = vmatpush.bf16.msra.mxu0 %v1183
        %1259 = vmatpush.bf16.msra.mxu0 %v1180
        %1260 = vmatpush.bf16.msra.mxu0 %v1177
        %1261 = vmatmul.bf16.gmra.mxu0 %v1052
        %v1262 = vpop.f32.mrf.mxu0
        %v1263 = vadd.f32 %v1091, %v1262
        %v1264 = vpop.f32.mrf.mxu0
        %v1265 = vadd.f32 %v1091, %v1264
        %1266 = vmatmul.bf16.gmra.mxu0 %v1053
        %v1267 = vpop.f32.mrf.mxu0
        %v1268 = vadd.f32 %v1091, %v1267
        %v1269 = vpop.f32.mrf.mxu0
        %v1270 = vadd.f32 %v1091, %v1269
        %1271 = vmatmul.bf16.gmra.mxu0 %v1054
        %v1272 = vpop.f32.mrf.mxu0
        %v1273 = vadd.f32 %v1091, %v1272
        %v1274 = vpop.f32.mrf.mxu0
        %v1275 = vadd.f32 %v1091, %v1274
        %1276 = vmatmul.bf16.gmra.mxu0 %v1055
        %v1277 = vpop.f32.mrf.mxu0
        %v1278 = vadd.f32 %v1091, %v1277
        %v1279 = vpop.f32.mrf.mxu0
        %v1280 = vadd.f32 %v1091, %v1279
        %1281 = vdwg.mxu0
        %1282 = vmatpush.bf16.msra.mxu0 %v1199
        %1283 = vmatpush.bf16.msra.mxu0 %v1196
        %1284 = vmatpush.bf16.msra.mxu0 %v1193
        %1285 = vmatpush.bf16.msra.mxu0 %v1190
        %1286 = vmatpush.bf16.msra.mxu0 %v1187
        %1287 = vmatpush.bf16.msra.mxu0 %v1184
        %1288 = vmatpush.bf16.msra.mxu0 %v1181
        %1289 = vmatpush.bf16.msra.mxu0 %v1178
        %1290 = vmatmul.bf16.gmra.mxu0 %v1052
        %v1291 = vpop.f32.mrf.mxu0
        %v1292 = vadd.f32 %v1092, %v1291
        %v1293 = vpop.f32.mrf.mxu0
        %v1294 = vadd.f32 %v1092, %v1293
        %1295 = vmatmul.bf16.gmra.mxu0 %v1053
        %v1296 = vpop.f32.mrf.mxu0
        %v1297 = vadd.f32 %v1092, %v1296
        %v1298 = vpop.f32.mrf.mxu0
        %v1299 = vadd.f32 %v1092, %v1298
        %1300 = vmatmul.bf16.gmra.mxu0 %v1054
        %v1301 = vpop.f32.mrf.mxu0
        %v1302 = vadd.f32 %v1092, %v1301
        %v1303 = vpop.f32.mrf.mxu0
        %v1304 = vadd.f32 %v1092, %v1303
        %1305 = vmatmul.bf16.gmra.mxu0 %v1055
        %v1306 = vpop.f32.mrf.mxu0
        %v1307 = vadd.f32 %v1092, %v1306
        %v1308 = vpop.f32.mrf.mxu0
        %v1309 = vadd.f32 %v1092, %v1308
        %1310 = vdwg.mxu0
        %v1311 = vlaneseq
        %v1312 = vand.u32 %v1311, 127
        %vm1313 = vcmp.lt.s32.totalorder %v1312, 17
        %v1314 = vsel %vm1313, 0.0, -1e+30
        %v1315 = vpack.c.bf16 %v1236, %v1234
        %v1316 = vpack.c.bf16 %v1241, %v1239
        %v1317 = vpack.c.bf16 %v1265, %v1263
        %v1318 = vpack.c.bf16 %v1270, %v1268
        %vm1319 = vcmask 261120
        %v1321 = vsel %vm1319, %v1315, 0
        %v1324 = vsel %vm1319, %v1316, 0
        %v1327 = vsel %vm1319, %v1317, 0
        %v1330 = vsel %vm1319, %v1318, 0
        %1332 = vmatpush.bf16.xpose.msra.mxu0 0
        %1333 = vmatpush.bf16.xpose.msra.mxu0 0
        %1334 = vmatpush.bf16.xpose.msra.mxu0 0
        %1335 = vmatpush.bf16.xpose.msra.mxu0 0
        %1336 = vmatpush.bf16.xpose.msra.mxu0 0
        %1337 = vmatpush.bf16.xpose.msra.mxu0 0
        %1338 = vmatpush.bf16.xpose.msra.mxu0 %v1330
        %1339 = vmatpush.bf16.xpose.msra.mxu0 %v1327
        %1340 = vmatmul.bf16.gmra.mxu0 %v1321
        %v1341 = vpop.f32.mrf.mxu0
        %v1342 = vadd.f32 %v1314, %v1341
        %v1343 = vpop.f32.mrf.mxu0
        %v1344 = vadd.f32 %v1314, %v1343
        %1345 = vmatmul.bf16.gmra.mxu0 %v1324
        %v1346 = vpop.f32.mrf.mxu0
        %v1347 = vadd.f32 %v1314, %v1346
        %v1348 = vpop.f32.mrf.mxu0
        %v1349 = vadd.f32 %v1314, %v1348
        %1350 = vdwg.mxu0
        %v1351 = vsel %vm1319, %v1342, -inf
        %1352 = vmax.xlane.f32.xlu0 %v1351
        %v1353 = vpop.xlane.xlu0 %1352
        %v1354 = vsel %vm1319, %v1344, -inf
        %1355 = vmax.xlane.f32.xlu0 %v1354
        %v1356 = vpop.xlane.xlu0 %1355
        %v1357 = vsel %vm1319, %v1347, -inf
        %1358 = vmax.xlane.f32.xlu0 %v1357
        %v1359 = vpop.xlane.xlu0 %1358
        %v1360 = vsel %vm1319, %v1349, -inf
        %1361 = vmax.xlane.f32.xlu0 %v1360
        %v1362 = vpop.xlane.xlu0 %1361
        %v1363 = vsub.f32 %v1342, %v1353
        %v1364 = vsub.f32 %v1344, %v1356
        %v1365 = vsub.f32 %v1347, %v1359
        %v1366 = vsub.f32 %v1349, %v1362
        %v1367 = vmul.f32 %v1363, 1.442695
        %v1368 = vpow.pop %v1367
        %v1369 = vmul.f32 %v1364, 1.442695
        %v1370 = vpow.pop %v1369
        %v1371 = vmul.f32 %v1365, 1.442695
        %v1372 = vpow.pop %v1371
        %v1373 = vmul.f32 %v1366, 1.442695
        %v1374 = vpow.pop %v1373
        %v1375 = vsel %vm1319, %v1368, 0.0
        %1376 = vadd.xlane.f32.xlu0 %v1375
        %v1377 = vpop.xlane.xlu0 %1376
        %v1378 = vsel %vm1319, %v1370, 0.0
        %1379 = vadd.xlane.f32.xlu0 %v1378
        %v1380 = vpop.xlane.xlu0 %1379
        %v1381 = vsel %vm1319, %v1372, 0.0
        %1382 = vadd.xlane.f32.xlu0 %v1381
        %v1383 = vpop.xlane.xlu0 %1382
        %v1384 = vsel %vm1319, %v1374, 0.0
        %1385 = vadd.xlane.f32.xlu0 %v1384
        %v1386 = vpop.xlane.xlu0 %1385
        %v1387 = vrcp.pop %v1377
        %v1388 = vrcp.pop %v1380
        %v1389 = vrcp.pop %v1383
        %v1390 = vrcp.pop %v1386
        %v1391 = vmul.f32 %v1368, %v1387
        %v1392 = vmul.f32 %v1370, %v1388
        %v1393 = vmul.f32 %v1372, %v1389
        %v1394 = vmul.f32 %v1374, %v1390
        %v1395 = vpack.c.bf16 %v1392, %v1391
        %v1396 = vpack.c.bf16 %v1394, %v1393
        %v1397 = vpack.c.bf16 %v1294, %v1292
        %v1398 = vpack.c.bf16 %v1299, %v1297
        %v1400 = vsel %vm1319, %v1395, 0
        %v1403 = vsel %vm1319, %v1396, 0
        %1405 = vmatpush.bf16.msra.mxu0 0
        %1406 = vmatpush.bf16.msra.mxu0 0
        %1407 = vmatpush.bf16.msra.mxu0 0
        %1408 = vmatpush.bf16.msra.mxu0 0
        %1409 = vmatpush.bf16.msra.mxu0 0
        %1410 = vmatpush.bf16.msra.mxu0 0
        %1411 = vmatpush.bf16.msra.mxu0 %v1398
        %1412 = vmatpush.bf16.msra.mxu0 %v1397
        %1413 = vmatmul.bf16.gmra.mxu0 %v1400
        %v1414 = vpop.f32.mrf.mxu0
        %v1415 = vadd.f32 0.0, %v1414
        %v1416 = vpop.f32.mrf.mxu0
        %v1417 = vadd.f32 0.0, %v1416
        %1418 = vmatmul.bf16.gmra.mxu0 %v1403
        %v1419 = vpop.f32.mrf.mxu0
        %v1420 = vadd.f32 0.0, %v1419
        %v1421 = vpop.f32.mrf.mxu0
        %v1422 = vadd.f32 0.0, %v1421
        %1423 = vdwg.mxu0
        %v1424 = vpack.c.bf16 %v1415, %v1415
        %v1425 = vpack.c.bf16 %v1417, %v1417
        %v1426 = vpack.c.bf16 %v1420, %v1420
        %v1427 = vpack.c.bf16 %v1422, %v1422
        %vm1428 = vcmask 257024
        %1429 = vst.msk [vmem:[#allocation2] sm:$0xf] %vm1428, %v1424
        %1430 = vst.msk [vmem:[#allocation2 + $0x4] sm:$0xf] %vm1428, %v1425
        %1431 = vst.msk [vmem:[#allocation2 + $0x8] sm:$0xf] %vm1428, %v1426
        %1432 = vst.msk [vmem:[#allocation2 + $0xc] sm:$0xf] %vm1428, %v1427
        %1435 = vrot.lane.b32.xlu0 %v1315, 96
        %v1436 = vpop.permute.xlu0 %1435
        %1437 = vrot.lane.b32.xlu0 %v1316, 96
        %v1438 = vpop.permute.xlu0 %1437
        %1441 = vrot.lane.b32.xlu0 %v1317, 96
        %v1442 = vpop.permute.xlu0 %1441
        %1443 = vrot.lane.b32.xlu0 %v1318, 96
        %v1444 = vpop.permute.xlu0 %1443
        %v1446 = vsel %vm1319, %v1436, 0
        %v1449 = vsel %vm1319, %v1438, 0
        %v1452 = vsel %vm1319, %v1442, 0
        %v1455 = vsel %vm1319, %v1444, 0
        %1457 = vmatpush.bf16.xpose.msra.mxu0 0
        %1458 = vmatpush.bf16.xpose.msra.mxu0 0
        %1459 = vmatpush.bf16.xpose.msra.mxu0 0
        %1460 = vmatpush.bf16.xpose.msra.mxu0 0
        %1461 = vmatpush.bf16.xpose.msra.mxu0 0
        %1462 = vmatpush.bf16.xpose.msra.mxu0 0
        %1463 = vmatpush.bf16.xpose.msra.mxu0 %v1455
        %1464 = vmatpush.bf16.xpose.msra.mxu0 %v1452
        %1465 = vmatmul.bf16.gmra.mxu0 %v1446
        %v1466 = vpop.f32.mrf.mxu0
        %v1467 = vadd.f32 %v1314, %v1466
        %v1468 = vpop.f32.mrf.mxu0
        %v1469 = vadd.f32 %v1314, %v1468
        %1470 = vmatmul.bf16.gmra.mxu0 %v1449
        %v1471 = vpop.f32.mrf.mxu0
        %v1472 = vadd.f32 %v1314, %v1471
        %v1473 = vpop.f32.mrf.mxu0
        %v1474 = vadd.f32 %v1314, %v1473
        %1475 = vdwg.mxu0
        %v1476 = vsel %vm1319, %v1467, -inf
        %1477 = vmax.xlane.f32.xlu0 %v1476
        %v1478 = vpop.xlane.xlu0 %1477
        %v1479 = vsel %vm1319, %v1469, -inf
        %1480 = vmax.xlane.f32.xlu0 %v1479
        %v1481 = vpop.xlane.xlu0 %1480
        %v1482 = vsel %vm1319, %v1472, -inf
        %1483 = vmax.xlane.f32.xlu0 %v1482
        %v1484 = vpop.xlane.xlu0 %1483
        %v1485 = vsel %vm1319, %v1474, -inf
        %1486 = vmax.xlane.f32.xlu0 %v1485
        %v1487 = vpop.xlane.xlu0 %1486
        %v1488 = vsub.f32 %v1467, %v1478
        %v1489 = vsub.f32 %v1469, %v1481
        %v1490 = vsub.f32 %v1472, %v1484
        %v1491 = vsub.f32 %v1474, %v1487
        %v1492 = vmul.f32 %v1488, 1.442695
        %v1493 = vpow.pop %v1492
        %v1494 = vmul.f32 %v1489, 1.442695
        %v1495 = vpow.pop %v1494
        %v1496 = vmul.f32 %v1490, 1.442695
        %v1497 = vpow.pop %v1496
        %v1498 = vmul.f32 %v1491, 1.442695
        %v1499 = vpow.pop %v1498
        %v1500 = vsel %vm1319, %v1493, 0.0
        %1501 = vadd.xlane.f32.xlu0 %v1500
        %v1502 = vpop.xlane.xlu0 %1501
        %v1503 = vsel %vm1319, %v1495, 0.0
        %1504 = vadd.xlane.f32.xlu0 %v1503
        %v1505 = vpop.xlane.xlu0 %1504
        %v1506 = vsel %vm1319, %v1497, 0.0
        %1507 = vadd.xlane.f32.xlu0 %v1506
        %v1508 = vpop.xlane.xlu0 %1507
        %v1509 = vsel %vm1319, %v1499, 0.0
        %1510 = vadd.xlane.f32.xlu0 %v1509
        %v1511 = vpop.xlane.xlu0 %1510
        %v1512 = vrcp.pop %v1502
        %v1513 = vrcp.pop %v1505
        %v1514 = vrcp.pop %v1508
        %v1515 = vrcp.pop %v1511
        %v1516 = vmul.f32 %v1493, %v1512
        %v1517 = vmul.f32 %v1495, %v1513
        %v1518 = vmul.f32 %v1497, %v1514
        %v1519 = vmul.f32 %v1499, %v1515
        %v1520 = vpack.c.bf16 %v1517, %v1516
        %v1521 = vpack.c.bf16 %v1519, %v1518
        %1524 = vrot.lane.b32.xlu0 %v1397, 96
        %v1525 = vpop.permute.xlu0 %1524
        %1526 = vrot.lane.b32.xlu0 %v1398, 96
        %v1527 = vpop.permute.xlu0 %1526
        %v1531 = vsel %vm1319, %v1520, 0
        %v1534 = vsel %vm1319, %v1521, 0
        %1536 = vmatpush.bf16.msra.mxu0 0
        %1537 = vmatpush.bf16.msra.mxu0 0
        %1538 = vmatpush.bf16.msra.mxu0 0
        %1539 = vmatpush.bf16.msra.mxu0 0
        %1540 = vmatpush.bf16.msra.mxu0 0
        %1541 = vmatpush.bf16.msra.mxu0 0
        %1542 = vmatpush.bf16.msra.mxu0 %v1527
        %1543 = vmatpush.bf16.msra.mxu0 %v1525
        %1544 = vmatmul.bf16.gmra.mxu0 %v1531
        %v1545 = vpop.f32.mrf.mxu0
        %v1546 = vadd.f32 0.0, %v1545
        %v1547 = vpop.f32.mrf.mxu0
        %v1548 = vadd.f32 0.0, %v1547
        %1549 = vmatmul.bf16.gmra.mxu0 %v1534
        %v1550 = vpop.f32.mrf.mxu0
        %v1551 = vadd.f32 0.0, %v1550
        %v1552 = vpop.f32.mrf.mxu0
        %v1553 = vadd.f32 0.0, %v1552
        %1554 = vdwg.mxu0
        %v1555 = vpack.c.bf16 %v1546, %v1546
        %v1556 = vpack.c.bf16 %v1548, %v1548
        %v1557 = vpack.c.bf16 %v1551, %v1551
        %v1558 = vpack.c.bf16 %v1553, %v1553
        %1563 = vrot.lane.b32.xlu0 %v1555, 32
        %v1564 = vpop.permute.xlu0 %1563
        %1565 = vrot.lane.b32.xlu0 %v1556, 32
        %v1566 = vpop.permute.xlu0 %1565
        %1567 = vrot.lane.b32.xlu0 %v1557, 32
        %v1568 = vpop.permute.xlu0 %1567
        %1569 = vrot.lane.b32.xlu0 %v1558, 32
        %v1570 = vpop.permute.xlu0 %1569
        %vm1575 = vcmask 519424
        %1576 = vst.msk [vmem:[#allocation2] sm:$0xf] %vm1575, %v1564
        %1577 = vst.msk [vmem:[#allocation2 + $0x4] sm:$0xf] %vm1575, %v1566
        %1578 = vst.msk [vmem:[#allocation2 + $0x8] sm:$0xf] %vm1575, %v1568
        %1579 = vst.msk [vmem:[#allocation2 + $0xc] sm:$0xf] %vm1575, %v1570
        %1580 = vrot.lane.b32.xlu0 %v1315, 64
        %v1581 = vpop.permute.xlu0 %1580
        %1582 = vrot.lane.b32.xlu0 %v1316, 64
        %v1583 = vpop.permute.xlu0 %1582
        %1584 = vrot.lane.b32.xlu0 %v1317, 64
        %v1585 = vpop.permute.xlu0 %1584
        %1586 = vrot.lane.b32.xlu0 %v1318, 64
        %v1587 = vpop.permute.xlu0 %1586
        %v1589 = vsel %vm1319, %v1581, 0
        %v1592 = vsel %vm1319, %v1583, 0
        %v1595 = vsel %vm1319, %v1585, 0
        %v1598 = vsel %vm1319, %v1587, 0
        %1600 = vmatpush.bf16.xpose.msra.mxu0 0
        %1601 = vmatpush.bf16.xpose.msra.mxu0 0
        %1602 = vmatpush.bf16.xpose.msra.mxu0 0
        %1603 = vmatpush.bf16.xpose.msra.mxu0 0
        %1604 = vmatpush.bf16.xpose.msra.mxu0 0
        %1605 = vmatpush.bf16.xpose.msra.mxu0 0
        %1606 = vmatpush.bf16.xpose.msra.mxu0 %v1598
        %1607 = vmatpush.bf16.xpose.msra.mxu0 %v1595
        %1608 = vmatmul.bf16.gmra.mxu0 %v1589
        %v1609 = vpop.f32.mrf.mxu0
        %v1610 = vadd.f32 %v1314, %v1609
        %v1611 = vpop.f32.mrf.mxu0
        %v1612 = vadd.f32 %v1314, %v1611
        %1613 = vmatmul.bf16.gmra.mxu0 %v1592
        %v1614 = vpop.f32.mrf.mxu0
        %v1615 = vadd.f32 %v1314, %v1614
        %v1616 = vpop.f32.mrf.mxu0
        %v1617 = vadd.f32 %v1314, %v1616
        %1618 = vdwg.mxu0
        %v1619 = vsel %vm1319, %v1610, -inf
        %1620 = vmax.xlane.f32.xlu0 %v1619
        %v1621 = vpop.xlane.xlu0 %1620
        %v1622 = vsel %vm1319, %v1612, -inf
        %1623 = vmax.xlane.f32.xlu0 %v1622
        %v1624 = vpop.xlane.xlu0 %1623
        %v1625 = vsel %vm1319, %v1615, -inf
        %1626 = vmax.xlane.f32.xlu0 %v1625
        %v1627 = vpop.xlane.xlu0 %1626
        %v1628 = vsel %vm1319, %v1617, -inf
        %1629 = vmax.xlane.f32.xlu0 %v1628
        %v1630 = vpop.xlane.xlu0 %1629
        %v1631 = vsub.f32 %v1610, %v1621
        %v1632 = vsub.f32 %v1612, %v1624
        %v1633 = vsub.f32 %v1615, %v1627
        %v1634 = vsub.f32 %v1617, %v1630
        %v1635 = vmul.f32 %v1631, 1.442695
        %v1636 = vpow.pop %v1635
        %v1637 = vmul.f32 %v1632, 1.442695
        %v1638 = vpow.pop %v1637
        %v1639 = vmul.f32 %v1633, 1.442695
        %v1640 = vpow.pop %v1639
        %v1641 = vmul.f32 %v1634, 1.442695
        %v1642 = vpow.pop %v1641
        %v1643 = vsel %vm1319, %v1636, 0.0
        %1644 = vadd.xlane.f32.xlu0 %v1643
        %v1645 = vpop.xlane.xlu0 %1644
        %v1646 = vsel %vm1319, %v1638, 0.0
        %1647 = vadd.xlane.f32.xlu0 %v1646
        %v1648 = vpop.xlane.xlu0 %1647
        %v1649 = vsel %vm1319, %v1640, 0.0
        %1650 = vadd.xlane.f32.xlu0 %v1649
        %v1651 = vpop.xlane.xlu0 %1650
        %v1652 = vsel %vm1319, %v1642, 0.0
        %1653 = vadd.xlane.f32.xlu0 %v1652
        %v1654 = vpop.xlane.xlu0 %1653
        %v1655 = vrcp.pop %v1645
        %v1656 = vrcp.pop %v1648
        %v1657 = vrcp.pop %v1651
        %v1658 = vrcp.pop %v1654
        %v1659 = vmul.f32 %v1636, %v1655
        %v1660 = vmul.f32 %v1638, %v1656
        %v1661 = vmul.f32 %v1640, %v1657
        %v1662 = vmul.f32 %v1642, %v1658
        %v1663 = vpack.c.bf16 %v1660, %v1659
        %v1664 = vpack.c.bf16 %v1662, %v1661
        %1665 = vrot.lane.b32.xlu0 %v1397, 64
        %v1666 = vpop.permute.xlu0 %1665
        %1667 = vrot.lane.b32.xlu0 %v1398, 64
        %v1668 = vpop.permute.xlu0 %1667
        %v1672 = vsel %vm1319, %v1663, 0
        %v1675 = vsel %vm1319, %v1664, 0
        %1677 = vmatpush.bf16.msra.mxu0 0
        %1678 = vmatpush.bf16.msra.mxu0 0
        %1679 = vmatpush.bf16.msra.mxu0 0
        %1680 = vmatpush.bf16.msra.mxu0 0
        %1681 = vmatpush.bf16.msra.mxu0 0
        %1682 = vmatpush.bf16.msra.mxu0 0
        %1683 = vmatpush.bf16.msra.mxu0 %v1668
        %1684 = vmatpush.bf16.msra.mxu0 %v1666
        %1685 = vmatmul.bf16.gmra.mxu0 %v1672
        %v1686 = vpop.f32.mrf.mxu0
        %v1687 = vadd.f32 0.0, %v1686
        %v1688 = vpop.f32.mrf.mxu0
        %v1689 = vadd.f32 0.0, %v1688
        %1690 = vmatmul.bf16.gmra.mxu0 %v1675
        %v1691 = vpop.f32.mrf.mxu0
        %v1692 = vadd.f32 0.0, %v1691
        %v1693 = vpop.f32.mrf.mxu0
        %v1694 = vadd.f32 0.0, %v1693
        %1695 = vdwg.mxu0
        %v1696 = vpack.c.bf16 %v1687, %v1687
        %v1697 = vpack.c.bf16 %v1689, %v1689
        %v1698 = vpack.c.bf16 %v1692, %v1692
        %v1699 = vpack.c.bf16 %v1694, %v1694
        %1704 = vrot.lane.b32.xlu0 %v1696, 64
        %v1705 = vpop.permute.xlu0 %1704
        %1706 = vrot.lane.b32.xlu0 %v1697, 64
        %v1707 = vpop.permute.xlu0 %1706
        %1708 = vrot.lane.b32.xlu0 %v1698, 64
        %v1709 = vpop.permute.xlu0 %1708
        %1710 = vrot.lane.b32.xlu0 %v1699, 64
        %v1711 = vpop.permute.xlu0 %1710
        %vm1716 = vcmask 781824
        %1717 = vst.msk [vmem:[#allocation2] sm:$0xf] %vm1716, %v1705
        %1718 = vst.msk [vmem:[#allocation2 + $0x4] sm:$0xf] %vm1716, %v1707
        %1719 = vst.msk [vmem:[#allocation2 + $0x8] sm:$0xf] %vm1716, %v1709
        %1720 = vst.msk [vmem:[#allocation2 + $0xc] sm:$0xf] %vm1716, %v1711
        %1721 = vrot.lane.b32.xlu0 %v1315, 32
        %v1722 = vpop.permute.xlu0 %1721
        %1723 = vrot.lane.b32.xlu0 %v1316, 32
        %v1724 = vpop.permute.xlu0 %1723
        %1725 = vrot.lane.b32.xlu0 %v1317, 32
        %v1726 = vpop.permute.xlu0 %1725
        %1727 = vrot.lane.b32.xlu0 %v1318, 32
        %v1728 = vpop.permute.xlu0 %1727
        %v1730 = vsel %vm1319, %v1722, 0
        %v1733 = vsel %vm1319, %v1724, 0
        %v1736 = vsel %vm1319, %v1726, 0
        %v1739 = vsel %vm1319, %v1728, 0
        %1741 = vmatpush.bf16.xpose.msra.mxu0 0
        %1742 = vmatpush.bf16.xpose.msra.mxu0 0
        %1743 = vmatpush.bf16.xpose.msra.mxu0 0
        %1744 = vmatpush.bf16.xpose.msra.mxu0 0
        %1745 = vmatpush.bf16.xpose.msra.mxu0 0
        %1746 = vmatpush.bf16.xpose.msra.mxu0 0
        %1747 = vmatpush.bf16.xpose.msra.mxu0 %v1739
        %1748 = vmatpush.bf16.xpose.msra.mxu0 %v1736
        %1749 = vmatmul.bf16.gmra.mxu0 %v1730
        %v1750 = vpop.f32.mrf.mxu0
        %v1751 = vadd.f32 %v1314, %v1750
        %v1752 = vpop.f32.mrf.mxu0
        %v1753 = vadd.f32 %v1314, %v1752
        %1754 = vmatmul.bf16.gmra.mxu0 %v1733
        %v1755 = vpop.f32.mrf.mxu0
        %v1756 = vadd.f32 %v1314, %v1755
        %v1757 = vpop.f32.mrf.mxu0
        %v1758 = vadd.f32 %v1314, %v1757
        %1759 = vdwg.mxu0
        %v1760 = vsel %vm1319, %v1751, -inf
        %1761 = vmax.xlane.f32.xlu0 %v1760
        %v1762 = vpop.xlane.xlu0 %1761
        %v1763 = vsel %vm1319, %v1753, -inf
        %1764 = vmax.xlane.f32.xlu0 %v1763
        %v1765 = vpop.xlane.xlu0 %1764
        %v1766 = vsel %vm1319, %v1756, -inf
        %1767 = vmax.xlane.f32.xlu0 %v1766
        %v1768 = vpop.xlane.xlu0 %1767
        %v1769 = vsel %vm1319, %v1758, -inf
        %1770 = vmax.xlane.f32.xlu0 %v1769
        %v1771 = vpop.xlane.xlu0 %1770
        %v1772 = vsub.f32 %v1751, %v1762
        %v1773 = vsub.f32 %v1753, %v1765
        %v1774 = vsub.f32 %v1756, %v1768
        %v1775 = vsub.f32 %v1758, %v1771
        %v1776 = vmul.f32 %v1772, 1.442695
        %v1777 = vpow.pop %v1776
        %v1778 = vmul.f32 %v1773, 1.442695
        %v1779 = vpow.pop %v1778
        %v1780 = vmul.f32 %v1774, 1.442695
        %v1781 = vpow.pop %v1780
        %v1782 = vmul.f32 %v1775, 1.442695
        %v1783 = vpow.pop %v1782
        %v1784 = vsel %vm1319, %v1777, 0.0
        %1785 = vadd.xlane.f32.xlu0 %v1784
        %v1786 = vpop.xlane.xlu0 %1785
        %v1787 = vsel %vm1319, %v1779, 0.0
        %1788 = vadd.xlane.f32.xlu0 %v1787
        %v1789 = vpop.xlane.xlu0 %1788
        %v1790 = vsel %vm1319, %v1781, 0.0
        %1791 = vadd.xlane.f32.xlu0 %v1790
        %v1792 = vpop.xlane.xlu0 %1791
        %v1793 = vsel %vm1319, %v1783, 0.0
        %1794 = vadd.xlane.f32.xlu0 %v1793
        %v1795 = vpop.xlane.xlu0 %1794
        %v1796 = vrcp.pop %v1786
        %v1797 = vrcp.pop %v1789
        %v1798 = vrcp.pop %v1792
        %v1799 = vrcp.pop %v1795
        %v1800 = vmul.f32 %v1777, %v1796
        %v1801 = vmul.f32 %v1779, %v1797
        %v1802 = vmul.f32 %v1781, %v1798
        %v1803 = vmul.f32 %v1783, %v1799
        %v1804 = vpack.c.bf16 %v1801, %v1800
        %v1805 = vpack.c.bf16 %v1803, %v1802
        %1806 = vrot.lane.b32.xlu0 %v1397, 32
        %v1807 = vpop.permute.xlu0 %1806
        %1808 = vrot.lane.b32.xlu0 %v1398, 32
        %v1809 = vpop.permute.xlu0 %1808
        %v1813 = vsel %vm1319, %v1804, 0
        %v1816 = vsel %vm1319, %v1805, 0
        %1818 = vmatpush.bf16.msra.mxu0 0
        %1819 = vmatpush.bf16.msra.mxu0 0
        %1820 = vmatpush.bf16.msra.mxu0 0
        %1821 = vmatpush.bf16.msra.mxu0 0
        %1822 = vmatpush.bf16.msra.mxu0 0
        %1823 = vmatpush.bf16.msra.mxu0 0
        %1824 = vmatpush.bf16.msra.mxu0 %v1809
        %1825 = vmatpush.bf16.msra.mxu0 %v1807
        %1826 = vmatmul.bf16.gmra.mxu0 %v1813
        %v1827 = vpop.f32.mrf.mxu0
        %v1828 = vadd.f32 0.0, %v1827
        %v1829 = vpop.f32.mrf.mxu0
        %v1830 = vadd.f32 0.0, %v1829
        %1831 = vmatmul.bf16.gmra.mxu0 %v1816
        %v1832 = vpop.f32.mrf.mxu0
        %v1833 = vadd.f32 0.0, %v1832
        %v1834 = vpop.f32.mrf.mxu0
        %v1835 = vadd.f32 0.0, %v1834
        %1836 = vdwg.mxu0
        %v1837 = vpack.c.bf16 %v1828, %v1828
        %v1838 = vpack.c.bf16 %v1830, %v1830
        %v1839 = vpack.c.bf16 %v1833, %v1833
        %v1840 = vpack.c.bf16 %v1835, %v1835
        %1845 = vrot.lane.b32.xlu0 %v1837, 96
        %v1846 = vpop.permute.xlu0 %1845
        %1847 = vrot.lane.b32.xlu0 %v1838, 96
        %v1848 = vpop.permute.xlu0 %1847
        %1849 = vrot.lane.b32.xlu0 %v1839, 96
        %v1850 = vpop.permute.xlu0 %1849
        %1851 = vrot.lane.b32.xlu0 %v1840, 96
        %v1852 = vpop.permute.xlu0 %1851
        %vm1857 = vcmask 1044224
        %1858 = vst.msk [vmem:[#allocation2] sm:$0xf] %vm1857, %v1846
        %1859 = vst.msk [vmem:[#allocation2 + $0x4] sm:$0xf] %vm1857, %v1848
        %1860 = vst.msk [vmem:[#allocation2 + $0x8] sm:$0xf] %vm1857, %v1850
        %1861 = vst.msk [vmem:[#allocation2 + $0xc] sm:$0xf] %vm1857, %v1852
        %v1862 = vpack.c.bf16 %v1246, %v1244
        %v1863 = vpack.c.bf16 %v1251, %v1249
        %v1864 = vpack.c.bf16 %v1275, %v1273
        %v1865 = vpack.c.bf16 %v1280, %v1278
        %v1867 = vsel %vm1319, %v1862, 0
        %v1870 = vsel %vm1319, %v1863, 0
        %v1873 = vsel %vm1319, %v1864, 0
        %v1876 = vsel %vm1319, %v1865, 0
        %1878 = vmatpush.bf16.xpose.msra.mxu0 0
        %1879 = vmatpush.bf16.xpose.msra.mxu0 0
        %1880 = vmatpush.bf16.xpose.msra.mxu0 0
        %1881 = vmatpush.bf16.xpose.msra.mxu0 0
        %1882 = vmatpush.bf16.xpose.msra.mxu0 0
        %1883 = vmatpush.bf16.xpose.msra.mxu0 0
        %1884 = vmatpush.bf16.xpose.msra.mxu0 %v1876
        %1885 = vmatpush.bf16.xpose.msra.mxu0 %v1873
        %1886 = vmatmul.bf16.gmra.mxu0 %v1867
        %v1887 = vpop.f32.mrf.mxu0
        %v1888 = vadd.f32 %v1314, %v1887
        %v1889 = vpop.f32.mrf.mxu0
        %v1890 = vadd.f32 %v1314, %v1889
        %1891 = vmatmul.bf16.gmra.mxu0 %v1870
        %v1892 = vpop.f32.mrf.mxu0
        %v1893 = vadd.f32 %v1314, %v1892
        %v1894 = vpop.f32.mrf.mxu0
        %v1895 = vadd.f32 %v1314, %v1894
        %1896 = vdwg.mxu0
        %v1897 = vsel %vm1319, %v1888, -inf
        %1898 = vmax.xlane.f32.xlu0 %v1897
        %v1899 = vpop.xlane.xlu0 %1898
        %v1900 = vsel %vm1319, %v1890, -inf
        %1901 = vmax.xlane.f32.xlu0 %v1900
        %v1902 = vpop.xlane.xlu0 %1901
        %v1903 = vsel %vm1319, %v1893, -inf
        %1904 = vmax.xlane.f32.xlu0 %v1903
        %v1905 = vpop.xlane.xlu0 %1904
        %v1906 = vsel %vm1319, %v1895, -inf
        %1907 = vmax.xlane.f32.xlu0 %v1906
        %v1908 = vpop.xlane.xlu0 %1907
        %v1909 = vsub.f32 %v1888, %v1899
        %v1910 = vsub.f32 %v1890, %v1902
        %v1911 = vsub.f32 %v1893, %v1905
        %v1912 = vsub.f32 %v1895, %v1908
        %v1913 = vmul.f32 %v1909, 1.442695
        %v1914 = vpow.pop %v1913
        %v1915 = vmul.f32 %v1910, 1.442695
        %v1916 = vpow.pop %v1915
        %v1917 = vmul.f32 %v1911, 1.442695
        %v1918 = vpow.pop %v1917
        %v1919 = vmul.f32 %v1912, 1.442695
        %v1920 = vpow.pop %v1919
        %v1921 = vsel %vm1319, %v1914, 0.0
        %1922 = vadd.xlane.f32.xlu0 %v1921
        %v1923 = vpop.xlane.xlu0 %1922
        %v1924 = vsel %vm1319, %v1916, 0.0
        %1925 = vadd.xlane.f32.xlu0 %v1924
        %v1926 = vpop.xlane.xlu0 %1925
        %v1927 = vsel %vm1319, %v1918, 0.0
        %1928 = vadd.xlane.f32.xlu0 %v1927
        %v1929 = vpop.xlane.xlu0 %1928
        %v1930 = vsel %vm1319, %v1920, 0.0
        %1931 = vadd.xlane.f32.xlu0 %v1930
        %v1932 = vpop.xlane.xlu0 %1931
        %v1933 = vrcp.pop %v1923
        %v1934 = vrcp.pop %v1926
        %v1935 = vrcp.pop %v1929
        %v1936 = vrcp.pop %v1932
        %v1937 = vmul.f32 %v1914, %v1933
        %v1938 = vmul.f32 %v1916, %v1934
        %v1939 = vmul.f32 %v1918, %v1935
        %v1940 = vmul.f32 %v1920, %v1936
        %v1941 = vpack.c.bf16 %v1938, %v1937
        %v1942 = vpack.c.bf16 %v1940, %v1939
        %v1943 = vpack.c.bf16 %v1304, %v1302
        %v1944 = vpack.c.bf16 %v1309, %v1307
        %v1946 = vsel %vm1319, %v1941, 0
        %v1949 = vsel %vm1319, %v1942, 0
        %1951 = vmatpush.bf16.msra.mxu0 0
        %1952 = vmatpush.bf16.msra.mxu0 0
        %1953 = vmatpush.bf16.msra.mxu0 0
        %1954 = vmatpush.bf16.msra.mxu0 0
        %1955 = vmatpush.bf16.msra.mxu0 0
        %1956 = vmatpush.bf16.msra.mxu0 0
        %1957 = vmatpush.bf16.msra.mxu0 %v1944
        %1958 = vmatpush.bf16.msra.mxu0 %v1943
        %1959 = vmatmul.bf16.gmra.mxu0 %v1946
        %v1960 = vpop.f32.mrf.mxu0
        %v1961 = vadd.f32 0.0, %v1960
        %v1962 = vpop.f32.mrf.mxu0
        %v1963 = vadd.f32 0.0, %v1962
        %1964 = vmatmul.bf16.gmra.mxu0 %v1949
        %v1965 = vpop.f32.mrf.mxu0
        %v1966 = vadd.f32 0.0, %v1965
        %v1967 = vpop.f32.mrf.mxu0
        %v1968 = vadd.f32 0.0, %v1967
        %1969 = vdwg.mxu0
        %v1970 = vpack.c.bf16 %v1961, %v1961
        %v1971 = vpack.c.bf16 %v1963, %v1963
        %v1972 = vpack.c.bf16 %v1966, %v1966
        %v1973 = vpack.c.bf16 %v1968, %v1968
        %1974 = vst.msk [vmem:[#allocation2 + $0x10] sm:$0xf] %vm1428, %v1970
        %1975 = vst.msk [vmem:[#allocation2 + $0x14] sm:$0xf] %vm1428, %v1971
        %1976 = vst.msk [vmem:[#allocation2 + $0x18] sm:$0xf] %vm1428, %v1972
        %1977 = vst.msk [vmem:[#allocation2 + $0x1c] sm:$0xf] %vm1428, %v1973
        %1980 = vrot.lane.b32.xlu0 %v1862, 96
        %v1981 = vpop.permute.xlu0 %1980
        %1982 = vrot.lane.b32.xlu0 %v1863, 96
        %v1983 = vpop.permute.xlu0 %1982
        %1986 = vrot.lane.b32.xlu0 %v1864, 96
        %v1987 = vpop.permute.xlu0 %1986
        %1988 = vrot.lane.b32.xlu0 %v1865, 96
        %v1989 = vpop.permute.xlu0 %1988
        %v1991 = vsel %vm1319, %v1981, 0
        %v1994 = vsel %vm1319, %v1983, 0
        %v1997 = vsel %vm1319, %v1987, 0
        %v2000 = vsel %vm1319, %v1989, 0
        %2002 = vmatpush.bf16.xpose.msra.mxu0 0
        %2003 = vmatpush.bf16.xpose.msra.mxu0 0
        %2004 = vmatpush.bf16.xpose.msra.mxu0 0
        %2005 = vmatpush.bf16.xpose.msra.mxu0 0
        %2006 = vmatpush.bf16.xpose.msra.mxu0 0
        %2007 = vmatpush.bf16.xpose.msra.mxu0 0
        %2008 = vmatpush.bf16.xpose.msra.mxu0 %v2000
        %2009 = vmatpush.bf16.xpose.msra.mxu0 %v1997
        %2010 = vmatmul.bf16.gmra.mxu0 %v1991
        %v2011 = vpop.f32.mrf.mxu0
        %v2012 = vadd.f32 %v1314, %v2011
        %v2013 = vpop.f32.mrf.mxu0
        %v2014 = vadd.f32 %v1314, %v2013
        %2015 = vmatmul.bf16.gmra.mxu0 %v1994
        %v2016 = vpop.f32.mrf.mxu0
        %v2017 = vadd.f32 %v1314, %v2016
        %v2018 = vpop.f32.mrf.mxu0
        %v2019 = vadd.f32 %v1314, %v2018
        %2020 = vdwg.mxu0
        %v2021 = vsel %vm1319, %v2012, -inf
        %2022 = vmax.xlane.f32.xlu0 %v2021
        %v2023 = vpop.xlane.xlu0 %2022
        %v2024 = vsel %vm1319, %v2014, -inf
        %2025 = vmax.xlane.f32.xlu0 %v2024
        %v2026 = vpop.xlane.xlu0 %2025
        %v2027 = vsel %vm1319, %v2017, -inf
        %2028 = vmax.xlane.f32.xlu0 %v2027
        %v2029 = vpop.xlane.xlu0 %2028
        %v2030 = vsel %vm1319, %v2019, -inf
        %2031 = vmax.xlane.f32.xlu0 %v2030
        %v2032 = vpop.xlane.xlu0 %2031
        %v2033 = vsub.f32 %v2012, %v2023
        %v2034 = vsub.f32 %v2014, %v2026
        %v2035 = vsub.f32 %v2017, %v2029
        %v2036 = vsub.f32 %v2019, %v2032
        %v2037 = vmul.f32 %v2033, 1.442695
        %v2038 = vpow.pop %v2037
        %v2039 = vmul.f32 %v2034, 1.442695
        %v2040 = vpow.pop %v2039
        %v2041 = vmul.f32 %v2035, 1.442695
        %v2042 = vpow.pop %v2041
        %v2043 = vmul.f32 %v2036, 1.442695
        %v2044 = vpow.pop %v2043
        %v2045 = vsel %vm1319, %v2038, 0.0
        %2046 = vadd.xlane.f32.xlu0 %v2045
        %v2047 = vpop.xlane.xlu0 %2046
        %v2048 = vsel %vm1319, %v2040, 0.0
        %2049 = vadd.xlane.f32.xlu0 %v2048
        %v2050 = vpop.xlane.xlu0 %2049
        %v2051 = vsel %vm1319, %v2042, 0.0
        %2052 = vadd.xlane.f32.xlu0 %v2051
        %v2053 = vpop.xlane.xlu0 %2052
        %v2054 = vsel %vm1319, %v2044, 0.0
        %2055 = vadd.xlane.f32.xlu0 %v2054
        %v2056 = vpop.xlane.xlu0 %2055
        %v2057 = vrcp.pop %v2047
        %v2058 = vrcp.pop %v2050
        %v2059 = vrcp.pop %v2053
        %v2060 = vrcp.pop %v2056
        %v2061 = vmul.f32 %v2038, %v2057
        %v2062 = vmul.f32 %v2040, %v2058
        %v2063 = vmul.f32 %v2042, %v2059
        %v2064 = vmul.f32 %v2044, %v2060
        %v2065 = vpack.c.bf16 %v2062, %v2061
        %v2066 = vpack.c.bf16 %v2064, %v2063
        %2069 = vrot.lane.b32.xlu0 %v1943, 96
        %v2070 = vpop.permute.xlu0 %2069
        %2071 = vrot.lane.b32.xlu0 %v1944, 96
        %v2072 = vpop.permute.xlu0 %2071
        %v2076 = vsel %vm1319, %v2065, 0
        %v2079 = vsel %vm1319, %v2066, 0
        %2081 = vmatpush.bf16.msra.mxu0 0
        %2082 = vmatpush.bf16.msra.mxu0 0
        %2083 = vmatpush.bf16.msra.mxu0 0
        %2084 = vmatpush.bf16.msra.mxu0 0
        %2085 = vmatpush.bf16.msra.mxu0 0
        %2086 = vmatpush.bf16.msra.mxu0 0
        %2087 = vmatpush.bf16.msra.mxu0 %v2072
        %2088 = vmatpush.bf16.msra.mxu0 %v2070
        %2089 = vmatmul.bf16.gmra.mxu0 %v2076
        %v2090 = vpop.f32.mrf.mxu0
        %v2091 = vadd.f32 0.0, %v2090
        %v2092 = vpop.f32.mrf.mxu0
        %v2093 = vadd.f32 0.0, %v2092
        %2094 = vmatmul.bf16.gmra.mxu0 %v2079
        %v2095 = vpop.f32.mrf.mxu0
        %v2096 = vadd.f32 0.0, %v2095
        %v2097 = vpop.f32.mrf.mxu0
        %v2098 = vadd.f32 0.0, %v2097
        %2099 = vdwg.mxu0
        %v2100 = vpack.c.bf16 %v2091, %v2091
        %v2101 = vpack.c.bf16 %v2093, %v2093
        %v2102 = vpack.c.bf16 %v2096, %v2096
        %v2103 = vpack.c.bf16 %v2098, %v2098
        %2108 = vrot.lane.b32.xlu0 %v2100, 32
        %v2109 = vpop.permute.xlu0 %2108
        %2110 = vrot.lane.b32.xlu0 %v2101, 32
        %v2111 = vpop.permute.xlu0 %2110
        %2112 = vrot.lane.b32.xlu0 %v2102, 32
        %v2113 = vpop.permute.xlu0 %2112
        %2114 = vrot.lane.b32.xlu0 %v2103, 32
        %v2115 = vpop.permute.xlu0 %2114
        %2120 = vst.msk [vmem:[#allocation2 + $0x10] sm:$0xf] %vm1575, %v2109
        %2121 = vst.msk [vmem:[#allocation2 + $0x14] sm:$0xf] %vm1575, %v2111
        %2122 = vst.msk [vmem:[#allocation2 + $0x18] sm:$0xf] %vm1575, %v2113
        %2123 = vst.msk [vmem:[#allocation2 + $0x1c] sm:$0xf] %vm1575, %v2115
        %2124 = vrot.lane.b32.xlu0 %v1862, 64
        %v2125 = vpop.permute.xlu0 %2124
        %2126 = vrot.lane.b32.xlu0 %v1863, 64
        %v2127 = vpop.permute.xlu0 %2126
        %2128 = vrot.lane.b32.xlu0 %v1864, 64
        %v2129 = vpop.permute.xlu0 %2128
        %2130 = vrot.lane.b32.xlu0 %v1865, 64
        %v2131 = vpop.permute.xlu0 %2130
        %v2133 = vsel %vm1319, %v2125, 0
        %v2136 = vsel %vm1319, %v2127, 0
        %v2139 = vsel %vm1319, %v2129, 0
        %v2142 = vsel %vm1319, %v2131, 0
        %2144 = vmatpush.bf16.xpose.msra.mxu0 0
        %2145 = vmatpush.bf16.xpose.msra.mxu0 0
        %2146 = vmatpush.bf16.xpose.msra.mxu0 0
        %2147 = vmatpush.bf16.xpose.msra.mxu0 0
        %2148 = vmatpush.bf16.xpose.msra.mxu0 0
        %2149 = vmatpush.bf16.xpose.msra.mxu0 0
        %2150 = vmatpush.bf16.xpose.msra.mxu0 %v2142
        %2151 = vmatpush.bf16.xpose.msra.mxu0 %v2139
        %2152 = vmatmul.bf16.gmra.mxu0 %v2133
        %v2153 = vpop.f32.mrf.mxu0
        %v2154 = vadd.f32 %v1314, %v2153
        %v2155 = vpop.f32.mrf.mxu0
        %v2156 = vadd.f32 %v1314, %v2155
        %2157 = vmatmul.bf16.gmra.mxu0 %v2136
        %v2158 = vpop.f32.mrf.mxu0
        %v2159 = vadd.f32 %v1314, %v2158
        %v2160 = vpop.f32.mrf.mxu0
        %v2161 = vadd.f32 %v1314, %v2160
        %2162 = vdwg.mxu0
        %v2163 = vsel %vm1319, %v2154, -inf
        %2164 = vmax.xlane.f32.xlu0 %v2163
        %v2165 = vpop.xlane.xlu0 %2164
        %v2166 = vsel %vm1319, %v2156, -inf
        %2167 = vmax.xlane.f32.xlu0 %v2166
        %v2168 = vpop.xlane.xlu0 %2167
        %v2169 = vsel %vm1319, %v2159, -inf
        %2170 = vmax.xlane.f32.xlu0 %v2169
        %v2171 = vpop.xlane.xlu0 %2170
        %v2172 = vsel %vm1319, %v2161, -inf
        %2173 = vmax.xlane.f32.xlu0 %v2172
        %v2174 = vpop.xlane.xlu0 %2173
        %v2175 = vsub.f32 %v2154, %v2165
        %v2176 = vsub.f32 %v2156, %v2168
        %v2177 = vsub.f32 %v2159, %v2171
        %v2178 = vsub.f32 %v2161, %v2174
        %v2179 = vmul.f32 %v2175, 1.442695
        %v2180 = vpow.pop %v2179
        %v2181 = vmul.f32 %v2176, 1.442695
        %v2182 = vpow.pop %v2181
        %v2183 = vmul.f32 %v2177, 1.442695
        %v2184 = vpow.pop %v2183
        %v2185 = vmul.f32 %v2178, 1.442695
        %v2186 = vpow.pop %v2185
        %v2187 = vsel %vm1319, %v2180, 0.0
        %2188 = vadd.xlane.f32.xlu0 %v2187
        %v2189 = vpop.xlane.xlu0 %2188
        %v2190 = vsel %vm1319, %v2182, 0.0
        %2191 = vadd.xlane.f32.xlu0 %v2190
        %v2192 = vpop.xlane.xlu0 %2191
        %v2193 = vsel %vm1319, %v2184, 0.0
        %2194 = vadd.xlane.f32.xlu0 %v2193
        %v2195 = vpop.xlane.xlu0 %2194
        %v2196 = vsel %vm1319, %v2186, 0.0
        %2197 = vadd.xlane.f32.xlu0 %v2196
        %v2198 = vpop.xlane.xlu0 %2197
        %v2199 = vrcp.pop %v2189
        %v2200 = vrcp.pop %v2192
        %v2201 = vrcp.pop %v2195
        %v2202 = vrcp.pop %v2198
        %v2203 = vmul.f32 %v2180, %v2199
        %v2204 = vmul.f32 %v2182, %v2200
        %v2205 = vmul.f32 %v2184, %v2201
        %v2206 = vmul.f32 %v2186, %v2202
        %v2207 = vpack.c.bf16 %v2204, %v2203
        %v2208 = vpack.c.bf16 %v2206, %v2205
        %2209 = vrot.lane.b32.xlu0 %v1943, 64
        %v2210 = vpop.permute.xlu0 %2209
        %2211 = vrot.lane.b32.xlu0 %v1944, 64
        %v2212 = vpop.permute.xlu0 %2211
        %v2216 = vsel %vm1319, %v2207, 0
        %v2219 = vsel %vm1319, %v2208, 0
        %2221 = vmatpush.bf16.msra.mxu0 0
        %2222 = vmatpush.bf16.msra.mxu0 0
        %2223 = vmatpush.bf16.msra.mxu0 0
        %2224 = vmatpush.bf16.msra.mxu0 0
        %2225 = vmatpush.bf16.msra.mxu0 0
        %2226 = vmatpush.bf16.msra.mxu0 0
        %2227 = vmatpush.bf16.msra.mxu0 %v2212
        %2228 = vmatpush.bf16.msra.mxu0 %v2210
        %2229 = vmatmul.bf16.gmra.mxu0 %v2216
        %v2230 = vpop.f32.mrf.mxu0
        %v2231 = vadd.f32 0.0, %v2230
        %v2232 = vpop.f32.mrf.mxu0
        %v2233 = vadd.f32 0.0, %v2232
        %2234 = vmatmul.bf16.gmra.mxu0 %v2219
        %v2235 = vpop.f32.mrf.mxu0
        %v2236 = vadd.f32 0.0, %v2235
        %v2237 = vpop.f32.mrf.mxu0
        %v2238 = vadd.f32 0.0, %v2237
        %2239 = vdwg.mxu0
        %v2240 = vpack.c.bf16 %v2231, %v2231
        %v2241 = vpack.c.bf16 %v2233, %v2233
        %v2242 = vpack.c.bf16 %v2236, %v2236
        %v2243 = vpack.c.bf16 %v2238, %v2238
        %2248 = vrot.lane.b32.xlu0 %v2240, 64
        %v2249 = vpop.permute.xlu0 %2248
        %2250 = vrot.lane.b32.xlu0 %v2241, 64
        %v2251 = vpop.permute.xlu0 %2250
        %2252 = vrot.lane.b32.xlu0 %v2242, 64
        %v2253 = vpop.permute.xlu0 %2252
        %2254 = vrot.lane.b32.xlu0 %v2243, 64
        %v2255 = vpop.permute.xlu0 %2254
        %2260 = vst.msk [vmem:[#allocation2 + $0x10] sm:$0xf] %vm1716, %v2249
        %2261 = vst.msk [vmem:[#allocation2 + $0x14] sm:$0xf] %vm1716, %v2251
        %2262 = vst.msk [vmem:[#allocation2 + $0x18] sm:$0xf] %vm1716, %v2253
        %2263 = vst.msk [vmem:[#allocation2 + $0x1c] sm:$0xf] %vm1716, %v2255
        %2264 = vrot.lane.b32.xlu0 %v1862, 32
        %v2265 = vpop.permute.xlu0 %2264
        %2266 = vrot.lane.b32.xlu0 %v1863, 32
        %v2267 = vpop.permute.xlu0 %2266
        %2268 = vrot.lane.b32.xlu0 %v1864, 32
        %v2269 = vpop.permute.xlu0 %2268
        %2270 = vrot.lane.b32.xlu0 %v1865, 32
        %v2271 = vpop.permute.xlu0 %2270
        %v2273 = vsel %vm1319, %v2265, 0
        %v2276 = vsel %vm1319, %v2267, 0
        %v2279 = vsel %vm1319, %v2269, 0
        %v2282 = vsel %vm1319, %v2271, 0
        %2284 = vmatpush.bf16.xpose.msra.mxu0 0
        %2285 = vmatpush.bf16.xpose.msra.mxu0 0
        %2286 = vmatpush.bf16.xpose.msra.mxu0 0
        %2287 = vmatpush.bf16.xpose.msra.mxu0 0
        %2288 = vmatpush.bf16.xpose.msra.mxu0 0
        %2289 = vmatpush.bf16.xpose.msra.mxu0 0
        %2290 = vmatpush.bf16.xpose.msra.mxu0 %v2282
        %2291 = vmatpush.bf16.xpose.msra.mxu0 %v2279
        %2292 = vmatmul.bf16.gmra.mxu0 %v2273
        %v2293 = vpop.f32.mrf.mxu0
        %v2294 = vadd.f32 %v1314, %v2293
        %v2295 = vpop.f32.mrf.mxu0
        %v2296 = vadd.f32 %v1314, %v2295
        %2297 = vmatmul.bf16.gmra.mxu0 %v2276
        %v2298 = vpop.f32.mrf.mxu0
        %v2299 = vadd.f32 %v1314, %v2298
        %v2300 = vpop.f32.mrf.mxu0
        %v2301 = vadd.f32 %v1314, %v2300
        %2302 = vdwg.mxu0
        %v2303 = vsel %vm1319, %v2294, -inf
        %2304 = vmax.xlane.f32.xlu0 %v2303
        %v2305 = vpop.xlane.xlu0 %2304
        %v2306 = vsel %vm1319, %v2296, -inf
        %2307 = vmax.xlane.f32.xlu0 %v2306
        %v2308 = vpop.xlane.xlu0 %2307
        %v2309 = vsel %vm1319, %v2299, -inf
        %2310 = vmax.xlane.f32.xlu0 %v2309
        %v2311 = vpop.xlane.xlu0 %2310
        %v2312 = vsel %vm1319, %v2301, -inf
        %2313 = vmax.xlane.f32.xlu0 %v2312
        %v2314 = vpop.xlane.xlu0 %2313
        %v2315 = vsub.f32 %v2294, %v2305
        %v2316 = vsub.f32 %v2296, %v2308
        %v2317 = vsub.f32 %v2299, %v2311
        %v2318 = vsub.f32 %v2301, %v2314
        %v2319 = vmul.f32 %v2315, 1.442695
        %v2320 = vpow.pop %v2319
        %v2321 = vmul.f32 %v2316, 1.442695
        %v2322 = vpow.pop %v2321
        %v2323 = vmul.f32 %v2317, 1.442695
        %v2324 = vpow.pop %v2323
        %v2325 = vmul.f32 %v2318, 1.442695
        %v2326 = vpow.pop %v2325
        %v2327 = vsel %vm1319, %v2320, 0.0
        %2328 = vadd.xlane.f32.xlu0 %v2327
        %v2329 = vpop.xlane.xlu0 %2328
        %v2330 = vsel %vm1319, %v2322, 0.0
        %2331 = vadd.xlane.f32.xlu0 %v2330
        %v2332 = vpop.xlane.xlu0 %2331
        %v2333 = vsel %vm1319, %v2324, 0.0
        %2334 = vadd.xlane.f32.xlu0 %v2333
        %v2335 = vpop.xlane.xlu0 %2334
        %v2336 = vsel %vm1319, %v2326, 0.0
        %2337 = vadd.xlane.f32.xlu0 %v2336
        %v2338 = vpop.xlane.xlu0 %2337
        %v2339 = vrcp.pop %v2329
        %v2340 = vrcp.pop %v2332
        %v2341 = vrcp.pop %v2335
        %v2342 = vrcp.pop %v2338
        %v2343 = vmul.f32 %v2320, %v2339
        %v2344 = vmul.f32 %v2322, %v2340
        %v2345 = vmul.f32 %v2324, %v2341
        %v2346 = vmul.f32 %v2326, %v2342
        %v2347 = vpack.c.bf16 %v2344, %v2343
        %v2348 = vpack.c.bf16 %v2346, %v2345
        %2349 = vrot.lane.b32.xlu0 %v1943, 32
        %v2350 = vpop.permute.xlu0 %2349
        %2351 = vrot.lane.b32.xlu0 %v1944, 32
        %v2352 = vpop.permute.xlu0 %2351
        %v2356 = vsel %vm1319, %v2347, 0
        %v2359 = vsel %vm1319, %v2348, 0
        %2361 = vmatpush.bf16.msra.mxu0 0
        %2362 = vmatpush.bf16.msra.mxu0 0
        %2363 = vmatpush.bf16.msra.mxu0 0
        %2364 = vmatpush.bf16.msra.mxu0 0
        %2365 = vmatpush.bf16.msra.mxu0 0
        %2366 = vmatpush.bf16.msra.mxu0 0
        %2367 = vmatpush.bf16.msra.mxu0 %v2352
        %2368 = vmatpush.bf16.msra.mxu0 %v2350
        %2369 = vmatmul.bf16.gmra.mxu0 %v2356
        %v2370 = vpop.f32.mrf.mxu0
        %v2371 = vadd.f32 0.0, %v2370
        %v2372 = vpop.f32.mrf.mxu0
        %v2373 = vadd.f32 0.0, %v2372
        %2374 = vmatmul.bf16.gmra.mxu0 %v2359
        %v2375 = vpop.f32.mrf.mxu0
        %v2376 = vadd.f32 0.0, %v2375
        %v2377 = vpop.f32.mrf.mxu0
        %v2378 = vadd.f32 0.0, %v2377
        %2379 = vdwg.mxu0
        %v2380 = vpack.c.bf16 %v2371, %v2371
        %v2381 = vpack.c.bf16 %v2373, %v2373
        %v2382 = vpack.c.bf16 %v2376, %v2376
        %v2383 = vpack.c.bf16 %v2378, %v2378
        %2388 = vrot.lane.b32.xlu0 %v2380, 96
        %v2389 = vpop.permute.xlu0 %2388
        %2390 = vrot.lane.b32.xlu0 %v2381, 96
        %v2391 = vpop.permute.xlu0 %2390
        %2392 = vrot.lane.b32.xlu0 %v2382, 96
        %v2393 = vpop.permute.xlu0 %2392
        %2394 = vrot.lane.b32.xlu0 %v2383, 96
        %v2395 = vpop.permute.xlu0 %2394
        %2400 = vst.msk [vmem:[#allocation2 + $0x10] sm:$0xf] %vm1857, %v2389
        %2401 = vst.msk [vmem:[#allocation2 + $0x14] sm:$0xf] %vm1857, %v2391
        %2402 = vst.msk [vmem:[#allocation2 + $0x18] sm:$0xf] %vm1857, %v2393
        %2403 = vst.msk [vmem:[#allocation2 + $0x1c] sm:$0xf] %vm1857, %v2395
        %v2404 = vld [vmem:[#allocation2] sm:$0xf]
        %v2405 = vld [vmem:[#allocation2 + $0x4] sm:$0xf]
        %v2406 = vld [vmem:[#allocation2 + $0x8] sm:$0xf]
        %v2407 = vld [vmem:[#allocation2 + $0xc] sm:$0xf]
        %v2408 = vld [vmem:[#allocation2 + $0x10] sm:$0xf]
        %v2409 = vld [vmem:[#allocation2 + $0x14] sm:$0xf]
        %v2410 = vld [vmem:[#allocation2 + $0x18] sm:$0xf]
        %v2411 = vld [vmem:[#allocation2 + $0x1c] sm:$0xf]
        %v2412 = vld [vmem:[%s697] sm:$0xf]
        %v2413 = vld [vmem:[%s697 + $0x4] sm:$0xf]
        %v2414 = vld [vmem:[%s697 + $0x8] sm:$0xf]
        %v2415 = vld [vmem:[%s697 + $0xc] sm:$0xf]
        %v2416 = vld [vmem:[%s697 + $0x10] sm:$0xf]
        %v2417 = vld [vmem:[%s697 + $0x14] sm:$0xf]
        %v2418 = vld [vmem:[%s697 + $0x18] sm:$0xf]
        %v2419 = vld [vmem:[%s697 + $0x1c] sm:$0xf]
        %v2420 = vld [vmem:[%s697 + $0x20] sm:$0xf]
        %v2421 = vld [vmem:[%s697 + $0x24] sm:$0xf]
        %v2422 = vld [vmem:[%s697 + $0x28] sm:$0xf]
        %v2423 = vld [vmem:[%s697 + $0x2c] sm:$0xf]
        %v2424 = vld [vmem:[%s697 + $0x30] sm:$0xf]
        %v2425 = vld [vmem:[%s697 + $0x34] sm:$0xf]
        %v2426 = vld [vmem:[%s697 + $0x38] sm:$0xf]
        %v2427 = vld [vmem:[%s697 + $0x3c] sm:$0xf]
        %v2436 = vunpack.c.l.b16 %v2404
        %v2437 = vunpack.c.l.b16 %v2405
        %v2438 = vunpack.c.l.b16 %v2406
        %v2439 = vunpack.c.l.b16 %v2407
        %v2440 = vunpack.c.l.b16 %v2408
        %v2441 = vunpack.c.l.b16 %v2409
        %v2442 = vunpack.c.l.b16 %v2410
        %v2443 = vunpack.c.l.b16 %v2411
        %v2444 = vpack.c.b16 %v2437, %v2436
        %v2445 = vpack.c.b16 %v2439, %v2438
        %v2446 = vpack.c.b16 %v2441, %v2440
        %v2447 = vpack.c.b16 %v2443, %v2442
        %v2468 = vunpack.c.l.b16 %v2412
        %v2469 = vunpack.c.l.b16 %v2413
        %v2470 = vunpack.c.l.b16 %v2414
        %v2471 = vunpack.c.l.b16 %v2415
        %v2472 = vunpack.c.l.b16 %v2416
        %v2473 = vunpack.c.l.b16 %v2417
        %v2474 = vunpack.c.l.b16 %v2418
        %v2475 = vunpack.c.l.b16 %v2419
        %v2476 = vunpack.c.l.b16 %v2420
        %v2477 = vunpack.c.l.b16 %v2421
        %v2478 = vunpack.c.l.b16 %v2422
        %v2479 = vunpack.c.l.b16 %v2423
        %v2480 = vunpack.c.l.b16 %v2424
        %v2481 = vunpack.c.l.b16 %v2425
        %v2482 = vunpack.c.l.b16 %v2426
        %v2483 = vunpack.c.l.b16 %v2427
        %v2484 = vpack.c.b16 %v2469, %v2468
        %v2485 = vpack.c.b16 %v2471, %v2470
        %v2486 = vpack.c.b16 %v2473, %v2472
        %v2487 = vpack.c.b16 %v2475, %v2474
        %v2488 = vpack.c.b16 %v2477, %v2476
        %v2489 = vpack.c.b16 %v2479, %v2478
        %v2490 = vpack.c.b16 %v2481, %v2480
        %v2491 = vpack.c.b16 %v2483, %v2482
        %2500 = vmatpush.bf16.msra.mxu0 %v2491
        %2501 = vmatpush.bf16.msra.mxu0 %v2490
        %2502 = vmatpush.bf16.msra.mxu0 %v2489
        %2503 = vmatpush.bf16.msra.mxu0 %v2488
        %2504 = vmatpush.bf16.msra.mxu0 %v2487
        %2505 = vmatpush.bf16.msra.mxu0 %v2486
        %2506 = vmatpush.bf16.msra.mxu0 %v2485
        %2507 = vmatpush.bf16.msra.mxu0 %v2484
        %2508 = vmatmul.bf16.gmra.mxu0 %v2444
        %v2509 = vpop.f32.mrf.mxu0
        %v2510 = vadd.f32 0.0, %v2509
        %v2511 = vpop.f32.mrf.mxu0
        %v2512 = vadd.f32 0.0, %v2511
        %2513 = vmatmul.bf16.gmra.mxu0 %v2445
        %v2514 = vpop.f32.mrf.mxu0
        %v2515 = vadd.f32 0.0, %v2514
        %v2516 = vpop.f32.mrf.mxu0
        %v2517 = vadd.f32 0.0, %v2516
        %2518 = vmatmul.bf16.gmra.mxu0 %v2446
        %v2519 = vpop.f32.mrf.mxu0
        %v2520 = vadd.f32 0.0, %v2519
        %v2521 = vpop.f32.mrf.mxu0
        %v2522 = vadd.f32 0.0, %v2521
        %2523 = vmatmul.bf16.gmra.mxu0 %v2447
        %v2524 = vpop.f32.mrf.mxu0
        %v2525 = vadd.f32 0.0, %v2524
        %v2526 = vpop.f32.mrf.mxu0
        %v2527 = vadd.f32 0.0, %v2526
        %2528 = vdwg.mxu0
        %v2529 = vadd.f32 %v853, %v2510
        %v2530 = vadd.f32 %v854, %v2512
        %v2531 = vadd.f32 %v855, %v2515
        %v2532 = vadd.f32 %v856, %v2517
        %v2533 = vadd.f32 %v857, %v2520
        %v2534 = vadd.f32 %v858, %v2522
        %v2535 = vadd.f32 %v859, %v2525
        %v2536 = vadd.f32 %v860, %v2527
        %v2537 = vld [vmem:[%s823] sm:$0x1]
        %v2539 = vperm.slane %v2537, 0
        %v2541 = vadd.f32 %v2529, %v2539
        %v2542 = vadd.f32 %v2530, %v2539
        %v2543 = vadd.f32 %v2531, %v2539
        %v2544 = vadd.f32 %v2532, %v2539
        %v2545 = vadd.f32 %v2533, %v2539
        %v2546 = vadd.f32 %v2534, %v2539
        %v2547 = vadd.f32 %v2535, %v2539
        %v2548 = vadd.f32 %v2536, %v2539
        %v2549 = vld [vmem:[%s706] sm:$0x1]
        %v2550 = vld [vmem:[%s715] sm:$0x1]
        %2551 = vadd.xlane.f32.xlu0 %v2541
        %v2552 = vpop.xlane.xlu0 %2551
        %2553 = vadd.xlane.f32.xlu0 %v2542
        %v2554 = vpop.xlane.xlu0 %2553
        %2555 = vadd.xlane.f32.xlu0 %v2543
        %v2556 = vpop.xlane.xlu0 %2555
        %2557 = vadd.xlane.f32.xlu0 %v2544
        %v2558 = vpop.xlane.xlu0 %2557
        %2559 = vadd.xlane.f32.xlu0 %v2545
        %v2560 = vpop.xlane.xlu0 %2559
        %2561 = vadd.xlane.f32.xlu0 %v2546
        %v2562 = vpop.xlane.xlu0 %2561
        %2563 = vadd.xlane.f32.xlu0 %v2547
        %v2564 = vpop.xlane.xlu0 %2563
        %2565 = vadd.xlane.f32.xlu0 %v2548
        %v2566 = vpop.xlane.xlu0 %2565
        %v2567 = vmul.f32 %v2552, %v885
        %v2568 = vmul.f32 %v2554, %v885
        %v2569 = vmul.f32 %v2556, %v885
        %v2570 = vmul.f32 %v2558, %v885
        %v2571 = vmul.f32 %v2560, %v885
        %v2572 = vmul.f32 %v2562, %v885
        %v2573 = vmul.f32 %v2564, %v885
        %v2574 = vmul.f32 %v2566, %v885
        %v2575 = vsub.f32 %v2541, %v2567
        %v2576 = vsub.f32 %v2542, %v2568
        %v2577 = vsub.f32 %v2543, %v2569
        %v2578 = vsub.f32 %v2544, %v2570
        %v2579 = vsub.f32 %v2545, %v2571
        %v2580 = vsub.f32 %v2546, %v2572
        %v2581 = vsub.f32 %v2547, %v2573
        %v2582 = vsub.f32 %v2548, %v2574
        %v2583 = vmul.f32 %v2575, %v2575
        %v2584 = vmul.f32 %v2576, %v2576
        %v2585 = vmul.f32 %v2577, %v2577
        %v2586 = vmul.f32 %v2578, %v2578
        %v2587 = vmul.f32 %v2579, %v2579
        %v2588 = vmul.f32 %v2580, %v2580
        %v2589 = vmul.f32 %v2581, %v2581
        %v2590 = vmul.f32 %v2582, %v2582
        %2591 = vadd.xlane.f32.xlu0 %v2583
        %v2592 = vpop.xlane.xlu0 %2591
        %2593 = vadd.xlane.f32.xlu0 %v2584
        %v2594 = vpop.xlane.xlu0 %2593
        %2595 = vadd.xlane.f32.xlu0 %v2585
        %v2596 = vpop.xlane.xlu0 %2595
        %2597 = vadd.xlane.f32.xlu0 %v2586
        %v2598 = vpop.xlane.xlu0 %2597
        %2599 = vadd.xlane.f32.xlu0 %v2587
        %v2600 = vpop.xlane.xlu0 %2599
        %2601 = vadd.xlane.f32.xlu0 %v2588
        %v2602 = vpop.xlane.xlu0 %2601
        %2603 = vadd.xlane.f32.xlu0 %v2589
        %v2604 = vpop.xlane.xlu0 %2603
        %2605 = vadd.xlane.f32.xlu0 %v2590
        %v2606 = vpop.xlane.xlu0 %2605
        %v2607 = vmul.f32 %v2592, %v885
        %v2608 = vmul.f32 %v2594, %v885
        %v2609 = vmul.f32 %v2596, %v885
        %v2610 = vmul.f32 %v2598, %v885
        %v2611 = vmul.f32 %v2600, %v885
        %v2612 = vmul.f32 %v2602, %v885
        %v2613 = vmul.f32 %v2604, %v885
        %v2614 = vmul.f32 %v2606, %v885
        %v2615 = vadd.f32 %v2607, 1e-05
        %v2616 = vadd.f32 %v2608, 1e-05
        %v2617 = vadd.f32 %v2609, 1e-05
        %v2618 = vadd.f32 %v2610, 1e-05
        %v2619 = vadd.f32 %v2611, 1e-05
        %v2620 = vadd.f32 %v2612, 1e-05
        %v2621 = vadd.f32 %v2613, 1e-05
        %v2622 = vadd.f32 %v2614, 1e-05
        %v2623 = vrsqrt.pop %v2615
        %v2624 = vmul.f32 %v2623, %v2615
        %v2625 = vmul.f32 %v2624, %v2623
        %v2626 = vmul.f32 0.5, %v2625
        %v2627 = vsub.f32 1.5, %v2626
        %v2628 = vmul.f32 %v2623, %v2627
        %vm2629 = vweird.f32 %v2615
        %vm2630 = vweird.f32 %v2623
        %vm2631 = vmor %vm2629, %vm2630
        %v2632 = vsel %vm2631, %v2623, %v2628
        %v2633 = vrsqrt.pop %v2616
        %v2634 = vmul.f32 %v2633, %v2616
        %v2635 = vmul.f32 %v2634, %v2633
        %v2636 = vmul.f32 0.5, %v2635
        %v2637 = vsub.f32 1.5, %v2636
        %v2638 = vmul.f32 %v2633, %v2637
        %vm2639 = vweird.f32 %v2616
        %vm2640 = vweird.f32 %v2633
        %vm2641 = vmor %vm2639, %vm2640
        %v2642 = vsel %vm2641, %v2633, %v2638
        %v2643 = vrsqrt.pop %v2617
        %v2644 = vmul.f32 %v2643, %v2617
        %v2645 = vmul.f32 %v2644, %v2643
        %v2646 = vmul.f32 0.5, %v2645
        %v2647 = vsub.f32 1.5, %v2646
        %v2648 = vmul.f32 %v2643, %v2647
        %vm2649 = vweird.f32 %v2617
        %vm2650 = vweird.f32 %v2643
        %vm2651 = vmor %vm2649, %vm2650
        %v2652 = vsel %vm2651, %v2643, %v2648
        %v2653 = vrsqrt.pop %v2618
        %v2654 = vmul.f32 %v2653, %v2618
        %v2655 = vmul.f32 %v2654, %v2653
        %v2656 = vmul.f32 0.5, %v2655
        %v2657 = vsub.f32 1.5, %v2656
        %v2658 = vmul.f32 %v2653, %v2657
        %vm2659 = vweird.f32 %v2618
        %vm2660 = vweird.f32 %v2653
        %vm2661 = vmor %vm2659, %vm2660
        %v2662 = vsel %vm2661, %v2653, %v2658
        %v2663 = vrsqrt.pop %v2619
        %v2664 = vmul.f32 %v2663, %v2619
        %v2665 = vmul.f32 %v2664, %v2663
        %v2666 = vmul.f32 0.5, %v2665
        %v2667 = vsub.f32 1.5, %v2666
        %v2668 = vmul.f32 %v2663, %v2667
        %vm2669 = vweird.f32 %v2619
        %vm2670 = vweird.f32 %v2663
        %vm2671 = vmor %vm2669, %vm2670
        %v2672 = vsel %vm2671, %v2663, %v2668
        %v2673 = vrsqrt.pop %v2620
        %v2674 = vmul.f32 %v2673, %v2620
        %v2675 = vmul.f32 %v2674, %v2673
        %v2676 = vmul.f32 0.5, %v2675
        %v2677 = vsub.f32 1.5, %v2676
        %v2678 = vmul.f32 %v2673, %v2677
        %vm2679 = vweird.f32 %v2620
        %vm2680 = vweird.f32 %v2673
        %vm2681 = vmor %vm2679, %vm2680
        %v2682 = vsel %vm2681, %v2673, %v2678
        %v2683 = vrsqrt.pop %v2621
        %v2684 = vmul.f32 %v2683, %v2621
        %v2685 = vmul.f32 %v2684, %v2683
        %v2686 = vmul.f32 0.5, %v2685
        %v2687 = vsub.f32 1.5, %v2686
        %v2688 = vmul.f32 %v2683, %v2687
        %vm2689 = vweird.f32 %v2621
        %vm2690 = vweird.f32 %v2683
        %vm2691 = vmor %vm2689, %vm2690
        %v2692 = vsel %vm2691, %v2683, %v2688
        %v2693 = vrsqrt.pop %v2622
        %v2694 = vmul.f32 %v2693, %v2622
        %v2695 = vmul.f32 %v2694, %v2693
        %v2696 = vmul.f32 0.5, %v2695
        %v2697 = vsub.f32 1.5, %v2696
        %v2698 = vmul.f32 %v2693, %v2697
        %vm2699 = vweird.f32 %v2622
        %vm2700 = vweird.f32 %v2693
        %vm2701 = vmor %vm2699, %vm2700
        %v2702 = vsel %vm2701, %v2693, %v2698
        %v2703 = vmul.f32 %v2575, %v2632
        %v2704 = vmul.f32 %v2576, %v2642
        %v2705 = vmul.f32 %v2577, %v2652
        %v2706 = vmul.f32 %v2578, %v2662
        %v2707 = vmul.f32 %v2579, %v2672
        %v2708 = vmul.f32 %v2580, %v2682
        %v2709 = vmul.f32 %v2581, %v2692
        %v2710 = vmul.f32 %v2582, %v2702
        %v2712 = vperm.slane %v2549, 0
        %v2714 = vmul.f32 %v2703, %v2712
        %v2715 = vmul.f32 %v2704, %v2712
        %v2716 = vmul.f32 %v2705, %v2712
        %v2717 = vmul.f32 %v2706, %v2712
        %v2718 = vmul.f32 %v2707, %v2712
        %v2719 = vmul.f32 %v2708, %v2712
        %v2720 = vmul.f32 %v2709, %v2712
        %v2721 = vmul.f32 %v2710, %v2712
        %v2723 = vperm.slane %v2550, 0
        %v2725 = vadd.f32 %v2714, %v2723
        %v2726 = vadd.f32 %v2715, %v2723
        %v2727 = vadd.f32 %v2716, %v2723
        %v2728 = vadd.f32 %v2717, %v2723
        %v2729 = vadd.f32 %v2718, %v2723
        %v2730 = vadd.f32 %v2719, %v2723
        %v2731 = vadd.f32 %v2720, %v2723
        %v2732 = vadd.f32 %v2721, %v2723
        %v2733 = vpack.c.bf16 %v2726, %v2725
        %v2734 = vpack.c.bf16 %v2728, %v2727
        %v2735 = vpack.c.bf16 %v2730, %v2729
        %v2736 = vpack.c.bf16 %v2732, %v2731
        %v2737 = vld [vmem:[%s725] sm:$0xff]
        %v2738 = vld [vmem:[%s725 + $0x8] sm:$0xff]
        %v2739 = vld [vmem:[%s725 + $0x10] sm:$0xff]
        %v2740 = vld [vmem:[%s725 + $0x18] sm:$0xff]
        %v2741 = vld [vmem:[%s725 + $0x20] sm:$0xff]
        %v2742 = vld [vmem:[%s725 + $0x28] sm:$0xff]
        %v2743 = vld [vmem:[%s725 + $0x30] sm:$0xff]
        %v2744 = vld [vmem:[%s725 + $0x38] sm:$0xff]
        %v2745 = vld [vmem:[%s725 + $0x40] sm:$0xff]
        %v2746 = vld [vmem:[%s725 + $0x48] sm:$0xff]
        %v2747 = vld [vmem:[%s725 + $0x50] sm:$0xff]
        %v2748 = vld [vmem:[%s725 + $0x58] sm:$0xff]
        %v2749 = vld [vmem:[%s725 + $0x60] sm:$0xff]
        %v2750 = vld [vmem:[%s725 + $0x68] sm:$0xff]
        %v2751 = vld [vmem:[%s725 + $0x70] sm:$0xff]
        %v2752 = vld [vmem:[%s725 + $0x78] sm:$0xff]
        %v2753 = vld [vmem:[%s827] sm:$0x3]
        %v2755 = vperm.slane %v2753, 0
        %v2756 = vperm.slane %v2753, 1
        %v2775 = vunpack.c.l.b16 %v2737
        %v2776 = vunpack.c.h.b16 %v2737
        %v2777 = vunpack.c.l.b16 %v2738
        %v2778 = vunpack.c.h.b16 %v2738
        %v2779 = vunpack.c.l.b16 %v2739
        %v2780 = vunpack.c.h.b16 %v2739
        %v2781 = vunpack.c.l.b16 %v2740
        %v2782 = vunpack.c.h.b16 %v2740
        %v2783 = vunpack.c.l.b16 %v2741
        %v2784 = vunpack.c.h.b16 %v2741
        %v2785 = vunpack.c.l.b16 %v2742
        %v2786 = vunpack.c.h.b16 %v2742
        %v2787 = vunpack.c.l.b16 %v2743
        %v2788 = vunpack.c.h.b16 %v2743
        %v2789 = vunpack.c.l.b16 %v2744
        %v2790 = vunpack.c.h.b16 %v2744
        %v2791 = vunpack.c.l.b16 %v2745
        %v2792 = vunpack.c.h.b16 %v2745
        %v2793 = vunpack.c.l.b16 %v2746
        %v2794 = vunpack.c.h.b16 %v2746
        %v2795 = vunpack.c.l.b16 %v2747
        %v2796 = vunpack.c.h.b16 %v2747
        %v2797 = vunpack.c.l.b16 %v2748
        %v2798 = vunpack.c.h.b16 %v2748
        %v2799 = vunpack.c.l.b16 %v2749
        %v2800 = vunpack.c.h.b16 %v2749
        %v2801 = vunpack.c.l.b16 %v2750
        %v2802 = vunpack.c.h.b16 %v2750
        %v2803 = vunpack.c.l.b16 %v2751
        %v2804 = vunpack.c.h.b16 %v2751
        %v2805 = vunpack.c.l.b16 %v2752
        %v2806 = vunpack.c.h.b16 %v2752
        %v2807 = vpack.c.b16 %v2777, %v2775
        %v2808 = vpack.c.b16 %v2778, %v2776
        %v2809 = vpack.c.b16 %v2781, %v2779
        %v2810 = vpack.c.b16 %v2782, %v2780
        %v2811 = vpack.c.b16 %v2785, %v2783
        %v2812 = vpack.c.b16 %v2786, %v2784
        %v2813 = vpack.c.b16 %v2789, %v2787
        %v2814 = vpack.c.b16 %v2790, %v2788
        %v2815 = vpack.c.b16 %v2793, %v2791
        %v2816 = vpack.c.b16 %v2794, %v2792
        %v2817 = vpack.c.b16 %v2797, %v2795
        %v2818 = vpack.c.b16 %v2798, %v2796
        %v2819 = vpack.c.b16 %v2801, %v2799
        %v2820 = vpack.c.b16 %v2802, %v2800
        %v2821 = vpack.c.b16 %v2805, %v2803
        %v2822 = vpack.c.b16 %v2806, %v2804
        %2839 = vmatpush.bf16.msra.mxu0 %v2821
        %2840 = vmatpush.bf16.msra.mxu0 %v2819
        %2841 = vmatpush.bf16.msra.mxu0 %v2817
        %2842 = vmatpush.bf16.msra.mxu0 %v2815
        %2843 = vmatpush.bf16.msra.mxu0 %v2813
        %2844 = vmatpush.bf16.msra.mxu0 %v2811
        %2845 = vmatpush.bf16.msra.mxu0 %v2809
        %2846 = vmatpush.bf16.msra.mxu0 %v2807
        %2847 = vmatmul.bf16.gmra.mxu0 %v2733
        %v2848 = vpop.f32.mrf.mxu0
        %v2849 = vadd.f32 %v2755, %v2848
        %v2850 = vpop.f32.mrf.mxu0
        %v2851 = vadd.f32 %v2755, %v2850
        %2852 = vmatmul.bf16.gmra.mxu0 %v2734
        %v2853 = vpop.f32.mrf.mxu0
        %v2854 = vadd.f32 %v2755, %v2853
        %v2855 = vpop.f32.mrf.mxu0
        %v2856 = vadd.f32 %v2755, %v2855
        %2857 = vmatmul.bf16.gmra.mxu0 %v2735
        %v2858 = vpop.f32.mrf.mxu0
        %v2859 = vadd.f32 %v2755, %v2858
        %v2860 = vpop.f32.mrf.mxu0
        %v2861 = vadd.f32 %v2755, %v2860
        %2862 = vmatmul.bf16.gmra.mxu0 %v2736
        %v2863 = vpop.f32.mrf.mxu0
        %v2864 = vadd.f32 %v2755, %v2863
        %v2865 = vpop.f32.mrf.mxu0
        %v2866 = vadd.f32 %v2755, %v2865
        %2867 = vdwg.mxu0
        %2868 = vmatpush.bf16.msra.mxu0 %v2822
        %2869 = vmatpush.bf16.msra.mxu0 %v2820
        %2870 = vmatpush.bf16.msra.mxu0 %v2818
        %2871 = vmatpush.bf16.msra.mxu0 %v2816
        %2872 = vmatpush.bf16.msra.mxu0 %v2814
        %2873 = vmatpush.bf16.msra.mxu0 %v2812
        %2874 = vmatpush.bf16.msra.mxu0 %v2810
        %2875 = vmatpush.bf16.msra.mxu0 %v2808
        %2876 = vmatmul.bf16.gmra.mxu0 %v2733
        %v2877 = vpop.f32.mrf.mxu0
        %v2878 = vadd.f32 %v2756, %v2877
        %v2879 = vpop.f32.mrf.mxu0
        %v2880 = vadd.f32 %v2756, %v2879
        %2881 = vmatmul.bf16.gmra.mxu0 %v2734
        %v2882 = vpop.f32.mrf.mxu0
        %v2883 = vadd.f32 %v2756, %v2882
        %v2884 = vpop.f32.mrf.mxu0
        %v2885 = vadd.f32 %v2756, %v2884
        %2886 = vmatmul.bf16.gmra.mxu0 %v2735
        %v2887 = vpop.f32.mrf.mxu0
        %v2888 = vadd.f32 %v2756, %v2887
        %v2889 = vpop.f32.mrf.mxu0
        %v2890 = vadd.f32 %v2756, %v2889
        %2891 = vmatmul.bf16.gmra.mxu0 %v2736
        %v2892 = vpop.f32.mrf.mxu0
        %v2893 = vadd.f32 %v2756, %v2892
        %v2894 = vpop.f32.mrf.mxu0
        %v2895 = vadd.f32 %v2756, %v2894
        %2896 = vdwg.mxu0
        %v2897 = vmul.f32 %v2849, 0.5
        %v2898 = vmul.f32 %v2878, 0.5
        %v2899 = vmul.f32 %v2851, 0.5
        %v2900 = vmul.f32 %v2880, 0.5
        %v2901 = vmul.f32 %v2854, 0.5
        %v2902 = vmul.f32 %v2883, 0.5
        %v2903 = vmul.f32 %v2856, 0.5
        %v2904 = vmul.f32 %v2885, 0.5
        %v2905 = vmul.f32 %v2859, 0.5
        %v2906 = vmul.f32 %v2888, 0.5
        %v2907 = vmul.f32 %v2861, 0.5
        %v2908 = vmul.f32 %v2890, 0.5
        %v2909 = vmul.f32 %v2864, 0.5
        %v2910 = vmul.f32 %v2893, 0.5
        %v2911 = vmul.f32 %v2866, 0.5
        %v2912 = vmul.f32 %v2895, 0.5
        %v2913 = vmul.f32 %v2849, 0.044715
        %v2914 = vmul.f32 %v2878, 0.044715
        %v2915 = vmul.f32 %v2851, 0.044715
        %v2916 = vmul.f32 %v2880, 0.044715
        %v2917 = vmul.f32 %v2854, 0.044715
        %v2918 = vmul.f32 %v2883, 0.044715
        %v2919 = vmul.f32 %v2856, 0.044715
        %v2920 = vmul.f32 %v2885, 0.044715
        %v2921 = vmul.f32 %v2859, 0.044715
        %v2922 = vmul.f32 %v2888, 0.044715
        %v2923 = vmul.f32 %v2861, 0.044715
        %v2924 = vmul.f32 %v2890, 0.044715
        %v2925 = vmul.f32 %v2864, 0.044715
        %v2926 = vmul.f32 %v2893, 0.044715
        %v2927 = vmul.f32 %v2866, 0.044715
        %v2928 = vmul.f32 %v2895, 0.044715
        %v2929 = vmul.f32 %v2913, %v2849
        %v2930 = vmul.f32 %v2914, %v2878
        %v2931 = vmul.f32 %v2915, %v2851
        %v2932 = vmul.f32 %v2916, %v2880
        %v2933 = vmul.f32 %v2917, %v2854
        %v2934 = vmul.f32 %v2918, %v2883
        %v2935 = vmul.f32 %v2919, %v2856
        %v2936 = vmul.f32 %v2920, %v2885
        %v2937 = vmul.f32 %v2921, %v2859
        %v2938 = vmul.f32 %v2922, %v2888
        %v2939 = vmul.f32 %v2923, %v2861
        %v2940 = vmul.f32 %v2924, %v2890
        %v2941 = vmul.f32 %v2925, %v2864
        %v2942 = vmul.f32 %v2926, %v2893
        %v2943 = vmul.f32 %v2927, %v2866
        %v2944 = vmul.f32 %v2928, %v2895
        %v2945 = vmul.f32 %v2929, %v2849
        %v2946 = vmul.f32 %v2930, %v2878
        %v2947 = vmul.f32 %v2931, %v2851
        %v2948 = vmul.f32 %v2932, %v2880
        %v2949 = vmul.f32 %v2933, %v2854
        %v2950 = vmul.f32 %v2934, %v2883
        %v2951 = vmul.f32 %v2935, %v2856
        %v2952 = vmul.f32 %v2936, %v2885
        %v2953 = vmul.f32 %v2937, %v2859
        %v2954 = vmul.f32 %v2938, %v2888
        %v2955 = vmul.f32 %v2939, %v2861
        %v2956 = vmul.f32 %v2940, %v2890
        %v2957 = vmul.f32 %v2941, %v2864
        %v2958 = vmul.f32 %v2942, %v2893
        %v2959 = vmul.f32 %v2943, %v2866
        %v2960 = vmul.f32 %v2944, %v2895
        %v2961 = vadd.f32 %v2849, %v2945
        %v2962 = vadd.f32 %v2878, %v2946
        %v2963 = vadd.f32 %v2851, %v2947
        %v2964 = vadd.f32 %v2880, %v2948
        %v2965 = vadd.f32 %v2854, %v2949
        %v2966 = vadd.f32 %v2883, %v2950
        %v2967 = vadd.f32 %v2856, %v2951
        %v2968 = vadd.f32 %v2885, %v2952
        %v2969 = vadd.f32 %v2859, %v2953
        %v2970 = vadd.f32 %v2888, %v2954
        %v2971 = vadd.f32 %v2861, %v2955
        %v2972 = vadd.f32 %v2890, %v2956
        %v2973 = vadd.f32 %v2864, %v2957
        %v2974 = vadd.f32 %v2893, %v2958
        %v2975 = vadd.f32 %v2866, %v2959
        %v2976 = vadd.f32 %v2895, %v2960
        %v2977 = vmul.f32 %v2961, 0.7978846
        %v2978 = vmul.f32 %v2962, 0.7978846
        %v2979 = vmul.f32 %v2963, 0.7978846
        %v2980 = vmul.f32 %v2964, 0.7978846
        %v2981 = vmul.f32 %v2965, 0.7978846
        %v2982 = vmul.f32 %v2966, 0.7978846
        %v2983 = vmul.f32 %v2967, 0.7978846
        %v2984 = vmul.f32 %v2968, 0.7978846
        %v2985 = vmul.f32 %v2969, 0.7978846
        %v2986 = vmul.f32 %v2970, 0.7978846
        %v2987 = vmul.f32 %v2971, 0.7978846
        %v2988 = vmul.f32 %v2972, 0.7978846
        %v2989 = vmul.f32 %v2973, 0.7978846
        %v2990 = vmul.f32 %v2974, 0.7978846
        %v2991 = vmul.f32 %v2975, 0.7978846
        %v2992 = vmul.f32 %v2976, 0.7978846
        %v2993 = vtanh.pop %v2977
        %v2994 = vtanh.pop %v2978
        %v2995 = vtanh.pop %v2979
        %v2996 = vtanh.pop %v2980
        %v2997 = vtanh.pop %v2981
        %v2998 = vtanh.pop %v2982
        %v2999 = vtanh.pop %v2983
        %v3000 = vtanh.pop %v2984
        %v3001 = vtanh.pop %v2985
        %v3002 = vtanh.pop %v2986
        %v3003 = vtanh.pop %v2987
        %v3004 = vtanh.pop %v2988
        %v3005 = vtanh.pop %v2989
        %v3006 = vtanh.pop %v2990
        %v3007 = vtanh.pop %v2991
        %v3008 = vtanh.pop %v2992
        %v3009 = vadd.f32 %v2993, 1.0
        %v3010 = vadd.f32 %v2994, 1.0
        %v3011 = vadd.f32 %v2995, 1.0
        %v3012 = vadd.f32 %v2996, 1.0
        %v3013 = vadd.f32 %v2997, 1.0
        %v3014 = vadd.f32 %v2998, 1.0
        %v3015 = vadd.f32 %v2999, 1.0
        %v3016 = vadd.f32 %v3000, 1.0
        %v3017 = vadd.f32 %v3001, 1.0
        %v3018 = vadd.f32 %v3002, 1.0
        %v3019 = vadd.f32 %v3003, 1.0
        %v3020 = vadd.f32 %v3004, 1.0
        %v3021 = vadd.f32 %v3005, 1.0
        %v3022 = vadd.f32 %v3006, 1.0
        %v3023 = vadd.f32 %v3007, 1.0
        %v3024 = vadd.f32 %v3008, 1.0
        %v3025 = vmul.f32 %v2897, %v3009
        %v3026 = vmul.f32 %v2898, %v3010
        %v3027 = vmul.f32 %v2899, %v3011
        %v3028 = vmul.f32 %v2900, %v3012
        %v3029 = vmul.f32 %v2901, %v3013
        %v3030 = vmul.f32 %v2902, %v3014
        %v3031 = vmul.f32 %v2903, %v3015
        %v3032 = vmul.f32 %v2904, %v3016
        %v3033 = vmul.f32 %v2905, %v3017
        %v3034 = vmul.f32 %v2906, %v3018
        %v3035 = vmul.f32 %v2907, %v3019
        %v3036 = vmul.f32 %v2908, %v3020
        %v3037 = vmul.f32 %v2909, %v3021
        %v3038 = vmul.f32 %v2910, %v3022
        %v3039 = vmul.f32 %v2911, %v3023
        %v3040 = vmul.f32 %v2912, %v3024
        %v3041 = vpack.c.bf16 %v3027, %v3025
        %v3042 = vpack.c.bf16 %v3028, %v3026
        %v3043 = vpack.c.bf16 %v3031, %v3029
        %v3044 = vpack.c.bf16 %v3032, %v3030
        %v3045 = vpack.c.bf16 %v3035, %v3033
        %v3046 = vpack.c.bf16 %v3036, %v3034
        %v3047 = vpack.c.bf16 %v3039, %v3037
        %v3048 = vpack.c.bf16 %v3040, %v3038
        %v3049 = vld [vmem:[%s735] sm:$0xf]
        %v3050 = vld [vmem:[%s735 + $0x4] sm:$0xf]
        %v3051 = vld [vmem:[%s735 + $0x8] sm:$0xf]
        %v3052 = vld [vmem:[%s735 + $0xc] sm:$0xf]
        %v3053 = vld [vmem:[%s735 + $0x10] sm:$0xf]
        %v3054 = vld [vmem:[%s735 + $0x14] sm:$0xf]
        %v3055 = vld [vmem:[%s735 + $0x18] sm:$0xf]
        %v3056 = vld [vmem:[%s735 + $0x1c] sm:$0xf]
        %v3057 = vld [vmem:[%s735 + $0x20] sm:$0xf]
        %v3058 = vld [vmem:[%s735 + $0x24] sm:$0xf]
        %v3059 = vld [vmem:[%s735 + $0x28] sm:$0xf]
        %v3060 = vld [vmem:[%s735 + $0x2c] sm:$0xf]
        %v3061 = vld [vmem:[%s735 + $0x30] sm:$0xf]
        %v3062 = vld [vmem:[%s735 + $0x34] sm:$0xf]
        %v3063 = vld [vmem:[%s735 + $0x38] sm:$0xf]
        %v3064 = vld [vmem:[%s735 + $0x3c] sm:$0xf]
        %v3065 = vld [vmem:[%s735 + $0x40] sm:$0xf]
        %v3066 = vld [vmem:[%s735 + $0x44] sm:$0xf]
        %v3067 = vld [vmem:[%s735 + $0x48] sm:$0xf]
        %v3068 = vld [vmem:[%s735 + $0x4c] sm:$0xf]
        %v3069 = vld [vmem:[%s735 + $0x50] sm:$0xf]
        %v3070 = vld [vmem:[%s735 + $0x54] sm:$0xf]
        %v3071 = vld [vmem:[%s735 + $0x58] sm:$0xf]
        %v3072 = vld [vmem:[%s735 + $0x5c] sm:$0xf]
        %v3073 = vld [vmem:[%s735 + $0x60] sm:$0xf]
        %v3074 = vld [vmem:[%s735 + $0x64] sm:$0xf]
        %v3075 = vld [vmem:[%s735 + $0x68] sm:$0xf]
        %v3076 = vld [vmem:[%s735 + $0x6c] sm:$0xf]
        %v3077 = vld [vmem:[%s735 + $0x70] sm:$0xf]
        %v3078 = vld [vmem:[%s735 + $0x74] sm:$0xf]
        %v3079 = vld [vmem:[%s735 + $0x78] sm:$0xf]
        %v3080 = vld [vmem:[%s735 + $0x7c] sm:$0xf]
        %v3081 = vld [vmem:[%s830] sm:$0x1]
        %v3083 = vperm.slane %v3081, 0
        %v3117 = vunpack.c.l.b16 %v3049
        %v3118 = vunpack.c.l.b16 %v3050
        %v3119 = vunpack.c.l.b16 %v3051
        %v3120 = vunpack.c.l.b16 %v3052
        %v3121 = vunpack.c.l.b16 %v3053
        %v3122 = vunpack.c.l.b16 %v3054
        %v3123 = vunpack.c.l.b16 %v3055
        %v3124 = vunpack.c.l.b16 %v3056
        %v3125 = vunpack.c.l.b16 %v3057
        %v3126 = vunpack.c.l.b16 %v3058
        %v3127 = vunpack.c.l.b16 %v3059
        %v3128 = vunpack.c.l.b16 %v3060
        %v3129 = vunpack.c.l.b16 %v3061
        %v3130 = vunpack.c.l.b16 %v3062
        %v3131 = vunpack.c.l.b16 %v3063
        %v3132 = vunpack.c.l.b16 %v3064
        %v3133 = vunpack.c.l.b16 %v3065
        %v3134 = vunpack.c.l.b16 %v3066
        %v3135 = vunpack.c.l.b16 %v3067
        %v3136 = vunpack.c.l.b16 %v3068
        %v3137 = vunpack.c.l.b16 %v3069
        %v3138 = vunpack.c.l.b16 %v3070
        %v3139 = vunpack.c.l.b16 %v3071
        %v3140 = vunpack.c.l.b16 %v3072
        %v3141 = vunpack.c.l.b16 %v3073
        %v3142 = vunpack.c.l.b16 %v3074
        %v3143 = vunpack.c.l.b16 %v3075
        %v3144 = vunpack.c.l.b16 %v3076
        %v3145 = vunpack.c.l.b16 %v3077
        %v3146 = vunpack.c.l.b16 %v3078
        %v3147 = vunpack.c.l.b16 %v3079
        %v3148 = vunpack.c.l.b16 %v3080
        %v3149 = vpack.c.b16 %v3118, %v3117
        %v3150 = vpack.c.b16 %v3120, %v3119
        %v3151 = vpack.c.b16 %v3122, %v3121
        %v3152 = vpack.c.b16 %v3124, %v3123
        %v3153 = vpack.c.b16 %v3126, %v3125
        %v3154 = vpack.c.b16 %v3128, %v3127
        %v3155 = vpack.c.b16 %v3130, %v3129
        %v3156 = vpack.c.b16 %v3132, %v3131
        %v3157 = vpack.c.b16 %v3134, %v3133
        %v3158 = vpack.c.b16 %v3136, %v3135
        %v3159 = vpack.c.b16 %v3138, %v3137
        %v3160 = vpack.c.b16 %v3140, %v3139
        %v3161 = vpack.c.b16 %v3142, %v3141
        %v3162 = vpack.c.b16 %v3144, %v3143
        %v3163 = vpack.c.b16 %v3146, %v3145
        %v3164 = vpack.c.b16 %v3148, %v3147
        %3181 = vmatpush.bf16.msra.mxu0 %v3156
        %3182 = vmatpush.bf16.msra.mxu0 %v3155
        %3183 = vmatpush.bf16.msra.mxu0 %v3154
        %3184 = vmatpush.bf16.msra.mxu0 %v3153
        %3185 = vmatpush.bf16.msra.mxu0 %v3152
        %3186 = vmatpush.bf16.msra.mxu0 %v3151
        %3187 = vmatpush.bf16.msra.mxu0 %v3150
        %3188 = vmatpush.bf16.msra.mxu0 %v3149
        %3189 = vmatmul.bf16.gmra.mxu0 %v3041
        %v3190 = vpop.f32.mrf.mxu0
        %v3191 = vadd.f32 %v3083, %v3190
        %v3192 = vpop.f32.mrf.mxu0
        %v3193 = vadd.f32 %v3083, %v3192
        %3194 = vmatmul.bf16.gmra.mxu0 %v3043
        %v3195 = vpop.f32.mrf.mxu0
        %v3196 = vadd.f32 %v3083, %v3195
        %v3197 = vpop.f32.mrf.mxu0
        %v3198 = vadd.f32 %v3083, %v3197
        %3199 = vmatmul.bf16.gmra.mxu0 %v3045
        %v3200 = vpop.f32.mrf.mxu0
        %v3201 = vadd.f32 %v3083, %v3200
        %v3202 = vpop.f32.mrf.mxu0
        %v3203 = vadd.f32 %v3083, %v3202
        %3204 = vmatmul.bf16.gmra.mxu0 %v3047
        %v3205 = vpop.f32.mrf.mxu0
        %v3206 = vadd.f32 %v3083, %v3205
        %v3207 = vpop.f32.mrf.mxu0
        %v3208 = vadd.f32 %v3083, %v3207
        %3209 = vdwg.mxu0
        %3210 = vmatpush.bf16.msra.mxu0 %v3164
        %3211 = vmatpush.bf16.msra.mxu0 %v3163
        %3212 = vmatpush.bf16.msra.mxu0 %v3162
        %3213 = vmatpush.bf16.msra.mxu0 %v3161
        %3214 = vmatpush.bf16.msra.mxu0 %v3160
        %3215 = vmatpush.bf16.msra.mxu0 %v3159
        %3216 = vmatpush.bf16.msra.mxu0 %v3158
        %3217 = vmatpush.bf16.msra.mxu0 %v3157
        %3218 = vmatmul.bf16.gmra.mxu0 %v3042
        %v3219 = vpop.f32.mrf.mxu0
        %v3220 = vadd.f32 %v3191, %v3219
        %v3221 = vpop.f32.mrf.mxu0
        %v3222 = vadd.f32 %v3193, %v3221
        %3223 = vmatmul.bf16.gmra.mxu0 %v3044
        %v3224 = vpop.f32.mrf.mxu0
        %v3225 = vadd.f32 %v3196, %v3224
        %v3226 = vpop.f32.mrf.mxu0
        %v3227 = vadd.f32 %v3198, %v3226
        %3228 = vmatmul.bf16.gmra.mxu0 %v3046
        %v3229 = vpop.f32.mrf.mxu0
        %v3230 = vadd.f32 %v3201, %v3229
        %v3231 = vpop.f32.mrf.mxu0
        %v3232 = vadd.f32 %v3203, %v3231
        %3233 = vmatmul.bf16.gmra.mxu0 %v3048
        %v3234 = vpop.f32.mrf.mxu0
        %v3235 = vadd.f32 %v3206, %v3234
        %v3236 = vpop.f32.mrf.mxu0
        %v3237 = vadd.f32 %v3208, %v3236
        %3238 = vdwg.mxu0
        %v3239 = vadd.f32 %v2541, %v3220
        %v3240 = vadd.f32 %v2542, %v3222
        %v3241 = vadd.f32 %v2543, %v3225
        %v3242 = vadd.f32 %v2544, %v3227
        %v3243 = vadd.f32 %v2545, %v3230
        %v3244 = vadd.f32 %v2546, %v3232
        %v3245 = vadd.f32 %v2547, %v3235
        %v3246 = vadd.f32 %v2548, %v3237
        %3247 = vst [vmem:[#allocation20] sm:$0xff] %v3239
        %3248 = vst [vmem:[#allocation20 + $0x8] sm:$0xff] %v3240
        %3249 = vst [vmem:[#allocation20 + $0x10] sm:$0xff] %v3241
        %3250 = vst [vmem:[#allocation20 + $0x18] sm:$0xff] %v3242
        %3251 = vst [vmem:[#allocation20 + $0x20] sm:$0xff] %v3243
        %3252 = vst [vmem:[#allocation20 + $0x28] sm:$0xff] %v3244
        %3253 = vst [vmem:[#allocation20 + $0x30] sm:$0xff] %v3245
        %3254 = vst [vmem:[#allocation20 + $0x38] sm:$0xff] %v3246
        // Predicated region
        $region117: #{tpu_custom_call.1} parent=71 // pred_check
          %p3255 = pneg %p409
        $region118: #{tpu_custom_call.1} parent=71 // pred_check_branch
          %3257 = sbr.rel (%p3255) target = $region120
        $region119: #{tpu_custom_call.1} parent=71 // pred_region
          %s3258 = smul.u32 2, %s45
          %3260 = vsyncadd [#allocation5], 0
          %s3261 = smul.addr %s3258, 4
          %s3262 = smul.addr %s3261, 8
          %s3263 = scalar_lea.hbm %s13, %s3262
          %s3264 = sshll.u32 [#allocation20], 4
          %s3265 = int_to_ptr.vmem [resolvable:$true] %s3264
          %s3266 = sshll.u32 %s3263, 4
          %s3267 = int_to_ptr.hbm [resolvable:$true] %s3266
          %3272 = dma.vmem_to_hbm [thread:$0]  %s3265, 1024, %s3267, [#allocation5], 128, 128, 8
        $region120: #{tpu_custom_call.1} parent=71 // pred_fallthru
          _
        // Predicated region
        $region121: #{tpu_custom_call.1} parent=71 // pred_check
          %p3273 = pneg %p409
        $region122: #{tpu_custom_call.1} parent=71 // pred_check_branch
          %3275 = sbr.rel (%p3273) target = $region124
        $region123: #{tpu_custom_call.1} parent=71 // pred_region
          %3277 = dma.done [#allocation5], 1024
        $region124: #{tpu_custom_call.1} parent=71 // pred_fallthru
          _
      $region72: #{tpu_custom_call.1} parent=5 // pred_fallthru
        _
      %p3278 = scmp.le.s32.totalorder 2, %s36
      // Predicated region
      $region125: #{tpu_custom_call.1} parent=5 // pred_check
        %p3279 = pneg %p3278
      $region126: #{tpu_custom_call.1} parent=5 // pred_check_branch
        %3281 = sbr.rel (%p3279) target = $region128
      $region127: #{tpu_custom_call.1} parent=5 // pred_region
        %s3282 = ssub.s32 %s36, 2
      $region128: #{tpu_custom_call.1} parent=5 // pred_fallthru
        _
    $region6: #{tpu_custom_call.1} parent=1 // loop_footer
      %s40 = sadd.s32 1, %s36
    $region7: #{tpu_custom_call.1} parent=1 // loop_footer_branch
      %35 = sbr.rel target = $region3
    $region8: #{tpu_custom_call.1} parent=1 // loop_exit
      _
    %3283 = vsyncpa [#allocation4], 1
    %s3284 = scalar_lea.sflag [#allocation4], 1
    %3285 = vsyncpa %s3284, 1
    %3286 = vsyncpa [#allocation7], 1
    %s3287 = scalar_lea.sflag [#allocation7], 1
    %3288 = vsyncpa %s3287, 1
    %3289 = vsyncpa [#allocation10], 1
    %s3290 = scalar_lea.sflag [#allocation10], 1
    %3291 = vsyncpa %s3290, 1
    %3292 = vsyncpa [#allocation13], 1
    %s3293 = scalar_lea.sflag [#allocation13], 1
    %3294 = vsyncpa %s3293, 1
    %3295 = vsyncpa [#allocation16], 1
    %s3296 = scalar_lea.sflag [#allocation16], 1
    %3297 = vsyncpa %s3296, 1
    %3298 = vsyncpa [#allocation19], 1
    %s3299 = scalar_lea.sflag [#allocation19], 1
    %3300 = vsyncpa %s3299, 1
    %3301 = vsyncpa [#allocation5], 1
    %s3302 = scalar_lea.sflag [#allocation5], 1
    %3303 = vsyncpa %s3302, 1

</llo_original>
